<compile_context>
chip_gen: v7x
topology: tpu7x:2x2x1
jax: 0.10.0
libtpu: 0.0.40
codegen_flags: <defaults>
</compile_context>

<pallas_src>
import numpy as np
import jax
import jax.numpy as jnp
from jax.experimental import pallas as pl
from jax.experimental.pallas import tpu as pltpu


_VMEM_LIMIT = 32 * 1024 * 1024  # safe on v5e/v6e (128 MiB) and v7x (64 MiB)


# ---------------------------------------------------------------------------
# Geometry constants: one-hot gather matrices for 3x3 / stride-2 / valid conv
# ---------------------------------------------------------------------------
def _build_gather_mats(hin, win):
    """S[k, q, p] = 1 iff input pixel q = (2*oh+kh)*win + (2*ow+kw) feeds output
    pixel p = oh*OW + ow for kernel tap k = kh*3 + kw.  Exactly one nonzero per
    output column -> the gather matmul is exact (no accumulation error)."""
    oh = (hin - 3) // 2 + 1
    ow = (win - 3) // 2 + 1
    s = np.zeros((9, hin * win, oh * ow), np.float32)
    for kh in range(3):
        for kw in range(3):
            k = kh * 3 + kw
            for i in range(oh):
                for j in range(ow):
                    s[k, (2 * i + kh) * win + (2 * j + kw), i * ow + j] = 1.0
    return s


# ---------------------------------------------------------------------------
# Fused kernel: conv stack + flatten + fc + {mu, softplus(sigma)} head
# One grid step == one batch element (grid=(N,), "parallel").
# ---------------------------------------------------------------------------
def _make_fused_kernel(num_conv):
    def kernel(*refs):
        # refs = [x, (w, b, s) * num_conv, wfc, bfc, wmu, bmu, wsg, bsg, mu_out, sigma_out]
        x_ref = refs[0]
        conv_refs = refs[1:1 + 3 * num_conv]
        (wfc_ref, bfc_ref, wmu_ref, bmu_ref,
         wsg_ref, bsg_ref) = refs[1 + 3 * num_conv:1 + 3 * num_conv + 6]
        mu_ref, sigma_ref = refs[-2:]

        act = x_ref[0]                                   # (C, H*W) bf16, channel-major
        for l in range(num_conv):
            w_ref, b_ref, s_ref = conv_refs[3 * l:3 * l + 3]
            f_out = w_ref.shape[1]                       # w: (9, F, C)
            p_out = s_ref.shape[2]                       # s: (9, Q, P)
            acc = jnp.zeros((f_out, p_out), jnp.float32)
            for k in range(9):                           # 9 accumulating MXU dots
                # gather the stride-2-shifted pixel plane (exact one-hot matmul)
                g = jnp.dot(act, s_ref[k],
                            preferred_element_type=jnp.float32).astype(jnp.bfloat16)
                # contract the 3x3 tap's (F, C) weight slice
                acc = acc + jnp.dot(w_ref[k], g, preferred_element_type=jnp.float32)
            # bias (F, 1) broadcasts over P; ReLU; bf16 for the next layer's MXU ops
            act = jnp.maximum(acc + b_ref[...], 0.0).astype(jnp.bfloat16)  # (F, P)

        # Flatten (F_last, P_last) in torch NCHW .view(batch, -1) order via
        # per-channel-row dots against the pre-reshaped fc weight (F, P, hidden)
        # — avoids any in-kernel reshape/transpose.
        h = bfc_ref[...]                                 # (1, hidden) f32
        for f in range(act.shape[0]):
            h = h + jnp.dot(act[f:f + 1, :], wfc_ref[f],
                            preferred_element_type=jnp.float32)

        hb = h.astype(jnp.bfloat16)
        mu = jnp.dot(hb, wmu_ref[...], preferred_element_type=jnp.float32) + bmu_ref[...]
        zs = jnp.dot(hb, wsg_ref[...], preferred_element_type=jnp.float32) + bsg_ref[...]
        # numerically-stable softplus (exp/log1p ride the otherwise idle EUP slot)
        sigma = jnp.maximum(zs, 0.0) + jnp.log1p(jnp.exp(-jnp.abs(zs)))
        mu_ref[0] = mu                                   # (1, O) into (1, 1, O) block
        sigma_ref[0] = sigma
    return kernel


def _const_index(ndim):
    zeros = (0,) * ndim
    return lambda i: zeros


# ---------------------------------------------------------------------------
# Parameter init (matches the PyTorch __init__ semantics, deterministic),
# stored directly in kernel layout (bf16 MXU operands, f32 biases).
# ---------------------------------------------------------------------------
def init_params(key, num_filters, fc_hidden_dim, output_dim,
                input_image_size, input_channels):
    conv = []
    in_ch = input_channels
    s_dim = input_image_size
    for f in num_filters:
        key, k1 = jax.random.split(key)
        fan_in = in_ch * 9
        w = jax.random.normal(k1, (f, in_ch, 3, 3), jnp.float32) * (2.0 / fan_in) ** 0.5
        conv.append({
            # w[k, f, c] = w_torch[f, c, kh, kw], k = kh*3 + kw
            "w": jnp.transpose(w, (2, 3, 0, 1)).reshape(9, f, in_ch).astype(jnp.bfloat16),
            "b": jnp.zeros((f, 1), jnp.float32),
            "s": jnp.asarray(_build_gather_mats(s_dim, s_dim), jnp.bfloat16),
        })
        in_ch = f
        s_dim = (s_dim - 1) // 2
    p_last = s_dim * s_dim
    flat_dim = num_filters[-1] * p_last

    key, k2, k3, k4 = jax.random.split(key, 4)
    # Linear layers use normal(0, 0.01) weights and zero bias, as in the module.
    wfc = jax.random.normal(k2, (flat_dim, fc_hidden_dim), jnp.float32) * 0.01
    params = {
        "conv": conv,
        # fc weight pre-reshaped to (C_last, P_last, hidden): row f of the last
        # conv's channel-major activation contracts with wfc[f] in-kernel.
        "wfc": wfc.reshape(num_filters[-1], p_last, fc_hidden_dim).astype(jnp.bfloat16),
        "bfc": jnp.zeros((1, fc_hidden_dim), jnp.float32),
        "wmu": (jax.random.normal(k3, (fc_hidden_dim, output_dim), jnp.float32)
                * 0.01).astype(jnp.bfloat16),
        "bmu": jnp.zeros((1, output_dim), jnp.float32),
        "wsg": (jax.random.normal(k4, (fc_hidden_dim, output_dim), jnp.float32)
                * 0.01).astype(jnp.bfloat16),
        "bsg": jnp.zeros((1, output_dim), jnp.float32),
    }
    return params


# ---------------------------------------------------------------------------
# Forward pass (= FFGConvBlock.forward); returns (mu, sigma) of the Normal dist
# ---------------------------------------------------------------------------
def ffg_conv_block_forward(params, x):
    n, c, hh, ww = x.shape
    # NCHW -> (N, C, H*W): free reshape (no transpose), channel-major, bf16 once.
    xq = x.reshape(n, c, hh * ww).astype(jnp.bfloat16)

    conv = params["conv"]
    num_conv = len(conv)
    out_dim = params["wmu"].shape[1]

    operands = [xq]
    in_specs = [pl.BlockSpec((1, c, hh * ww), lambda i: (i, 0, 0))]
    for layer in conv:
        for name in ("w", "b", "s"):
            arr = layer[name]
            operands.append(arr)
            in_specs.append(pl.BlockSpec(arr.shape, _const_index(arr.ndim)))
    for name in ("wfc", "bfc", "wmu", "bmu", "wsg", "bsg"):
        arr = params[name]
        operands.append(arr)
        in_specs.append(pl.BlockSpec(arr.shape, _const_index(arr.ndim)))

    # Advisory cost estimate (static shapes -> python ints).
    flops = 0
    for layer in conv:
        _, f_o, c_i = layer["w"].shape
        _, q_i, p_o = layer["s"].shape
        flops += n * 9 * 2 * (c_i * q_i * p_o + f_o * c_i * p_o)
    f2, p2, hid = params["wfc"].shape
    flops += n * 2 * (f2 * p2 * hid + 2 * hid * out_dim)
    bytes_accessed = int(xq.size) * 2 + 2 * n * out_dim * 4
    bytes_accessed += sum(int(a.size) * a.dtype.itemsize
                          for a in jax.tree_util.tree_leaves(params))

    mu3, sigma3 = pl.pallas_call(
        _make_fused_kernel(num_conv),
        out_shape=(jax.ShapeDtypeStruct((n, 1, out_dim), jnp.float32),
                   jax.ShapeDtypeStruct((n, 1, out_dim), jnp.float32)),
        grid=(n,),
        in_specs=in_specs,
        out_specs=(pl.BlockSpec((1, 1, out_dim), lambda i: (i, 0, 0)),
                   pl.BlockSpec((1, 1, out_dim), lambda i: (i, 0, 0))),
        compiler_params=pltpu.CompilerParams(
            dimension_semantics=("parallel",),
            vmem_limit_bytes=_VMEM_LIMIT),
        cost_estimate=pl.CostEstimate(flops=int(flops),
                                      transcendentals=int(2 * n * out_dim),
                                      bytes_accessed=int(bytes_accessed)),
    )(*operands)

    # TODO(synk): torch.distributions.Normal/Independent object has no JAX-array
    # equivalent here; we return its parameters (loc, scale).
    return mu3[:, 0, :], sigma3[:, 0, :]


# ---------------------------------------------------------------------------
if __name__ == "__main__":
    # Small config consistent with the module:
    #   num_filters=[4, 8], fc_hidden_dim=32, output_dim=8,
    #   input_image_size=16, input_channels=3, batch=2
    num_filters = [4, 8]
    fc_hidden_dim = 32
    output_dim = 8
    input_image_size = 16
    input_channels = 3
    batch = 2

    key = jax.random.PRNGKey(0)
    key, kx = jax.random.split(key)
    x = jax.random.normal(
        kx, (batch, input_channels, input_image_size, input_image_size),
        jnp.float32)

    params = init_params(key, num_filters, fc_hidden_dim, output_dim,
                         input_image_size, input_channels)

    mu, sigma = jax.jit(ffg_conv_block_forward)(params, x)
    jax.block_until_ready((mu, sigma))

    assert mu.shape == (batch, output_dim)
    assert sigma.shape == (batch, output_dim)
    assert bool(jnp.all(sigma > 0.0))
    print("KERNEL_OK")
</pallas_src>

<mosaic_0001>
module attributes {stable_mosaic.version = 11 : i64} {
  func.func @kernel(%arg0: i32, %arg1: memref<1x3x256xbf16, #tpu.memory_space<vmem>>, %arg2: memref<9x4x3xbf16, #tpu.memory_space<vmem>>, %arg3: memref<4x1xf32, #tpu.memory_space<vmem>>, %arg4: memref<9x256x49xbf16, #tpu.memory_space<vmem>>, %arg5: memref<9x8x4xbf16, #tpu.memory_space<vmem>>, %arg6: memref<8x1xf32, #tpu.memory_space<vmem>>, %arg7: memref<9x49x9xbf16, #tpu.memory_space<vmem>>, %arg8: memref<8x9x32xbf16, #tpu.memory_space<vmem>>, %arg9: memref<1x32xf32, #tpu.memory_space<vmem>>, %arg10: memref<32x8xbf16, #tpu.memory_space<vmem>>, %arg11: memref<1x8xf32, #tpu.memory_space<vmem>>, %arg12: memref<32x8xbf16, #tpu.memory_space<vmem>>, %arg13: memref<1x8xf32, #tpu.memory_space<vmem>>, %arg14: memref<1x1x8xf32, #tpu.memory_space<vmem>>, %arg15: memref<1x1x8xf32, #tpu.memory_space<vmem>>) attributes {dimension_semantics = [#tpu.dimension_semantics<parallel>], iteration_bounds = array<i64: 2>, scalar_prefetch = 0 : i64, scratch_operands = 0 : i64, tpu.core_type = #tpu.core_type<tc>, window_params = [{transform_indices = @transform_0, window_bounds = array<i64: 1, 3, 256>}, {pipeline_mode = #tpu.pipeline_mode<synchronous>, transform_indices = @transform_1, window_bounds = array<i64: 9, 4, 3>}, {pipeline_mode = #tpu.pipeline_mode<synchronous>, transform_indices = @transform_2, window_bounds = array<i64: 4, 1>}, {pipeline_mode = #tpu.pipeline_mode<synchronous>, transform_indices = @transform_3, window_bounds = array<i64: 9, 256, 49>}, {pipeline_mode = #tpu.pipeline_mode<synchronous>, transform_indices = @transform_4, window_bounds = array<i64: 9, 8, 4>}, {pipeline_mode = #tpu.pipeline_mode<synchronous>, transform_indices = @transform_5, window_bounds = array<i64: 8, 1>}, {pipeline_mode = #tpu.pipeline_mode<synchronous>, transform_indices = @transform_6, window_bounds = array<i64: 9, 49, 9>}, {pipeline_mode = #tpu.pipeline_mode<synchronous>, transform_indices = @transform_7, window_bounds = array<i64: 8, 9, 32>}, {pipeline_mode = #tpu.pipeline_mode<synchronous>, transform_indices = @transform_8, window_bounds = array<i64: 1, 32>}, {pipeline_mode = #tpu.pipeline_mode<synchronous>, transform_indices = @transform_9, window_bounds = array<i64: 32, 8>}, {pipeline_mode = #tpu.pipeline_mode<synchronous>, transform_indices = @transform_10, window_bounds = array<i64: 1, 8>}, {pipeline_mode = #tpu.pipeline_mode<synchronous>, transform_indices = @transform_11, window_bounds = array<i64: 32, 8>}, {pipeline_mode = #tpu.pipeline_mode<synchronous>, transform_indices = @transform_12, window_bounds = array<i64: 1, 8>}, {transform_indices = @transform_13, window_bounds = array<i64: 1, 1, 8>}, {transform_indices = @transform_14, window_bounds = array<i64: 1, 1, 8>}]} {
    %c0 = arith.constant 0 : index
    %c0_0 = arith.constant 0 : index
    %c0_1 = arith.constant 0 : index
    %0 = vector.load %arg1[%c0, %c0_0, %c0_1] : memref<1x3x256xbf16, #tpu.memory_space<vmem>>, vector<1x3x256xbf16>
    %1 = vector.shape_cast %0 : vector<1x3x256xbf16> to vector<3x256xbf16>
    %cst = arith.constant 0.000000e+00 : f32
    %2 = vector.broadcast %cst : f32 to vector<4x49xf32>
    %c0_2 = arith.constant 0 : index
    %c0_3 = arith.constant 0 : index
    %c0_4 = arith.constant 0 : index
    %3 = vector.load %arg4[%c0_2, %c0_3, %c0_4] : memref<9x256x49xbf16, #tpu.memory_space<vmem>>, vector<1x256x49xbf16>
    %4 = vector.shape_cast %3 : vector<1x256x49xbf16> to vector<256x49xbf16>
    %cst_5 = arith.constant dense<0.000000e+00> : vector<3x49xf32>
    %5 = tpu.matmul %1, %4, %cst_5 {dimension_numbers = #tpu.dot_dimension_numbers<[1], [0], [0], [1], [0, 0, 1, 1], [], []>} : vector<3x256xbf16>, vector<256x49xbf16>, vector<3x49xf32> -> vector<3x49xf32>
    %6 = arith.truncf %5 : vector<3x49xf32> to vector<3x49xbf16>
    %c0_6 = arith.constant 0 : index
    %c0_7 = arith.constant 0 : index
    %c0_8 = arith.constant 0 : index
    %7 = vector.load %arg2[%c0_6, %c0_7, %c0_8] : memref<9x4x3xbf16, #tpu.memory_space<vmem>>, vector<1x4x3xbf16>
    %8 = vector.shape_cast %7 : vector<1x4x3xbf16> to vector<4x3xbf16>
    %cst_9 = arith.constant dense<0.000000e+00> : vector<4x49xf32>
    %9 = tpu.matmul %8, %6, %cst_9 {dimension_numbers = #tpu.dot_dimension_numbers<[1], [0], [0], [1], [0, 0, 1, 1], [], []>} : vector<4x3xbf16>, vector<3x49xbf16>, vector<4x49xf32> -> vector<4x49xf32>
    %10 = arith.addf %2, %9 : vector<4x49xf32>
    %c1 = arith.constant 1 : index
    %c0_10 = arith.constant 0 : index
    %c0_11 = arith.constant 0 : index
    %11 = vector.load %arg4[%c1, %c0_10, %c0_11] : memref<9x256x49xbf16, #tpu.memory_space<vmem>>, vector<1x256x49xbf16>
    %12 = vector.shape_cast %11 : vector<1x256x49xbf16> to vector<256x49xbf16>
    %cst_12 = arith.constant dense<0.000000e+00> : vector<3x49xf32>
    %13 = tpu.matmul %1, %12, %cst_12 {dimension_numbers = #tpu.dot_dimension_numbers<[1], [0], [0], [1], [0, 0, 1, 1], [], []>} : vector<3x256xbf16>, vector<256x49xbf16>, vector<3x49xf32> -> vector<3x49xf32>
    %14 = arith.truncf %13 : vector<3x49xf32> to vector<3x49xbf16>
    %c1_13 = arith.constant 1 : index
    %c0_14 = arith.constant 0 : index
    %c0_15 = arith.constant 0 : index
    %15 = vector.load %arg2[%c1_13, %c0_14, %c0_15] : memref<9x4x3xbf16, #tpu.memory_space<vmem>>, vector<1x4x3xbf16>
    %16 = vector.shape_cast %15 : vector<1x4x3xbf16> to vector<4x3xbf16>
    %cst_16 = arith.constant dense<0.000000e+00> : vector<4x49xf32>
    %17 = tpu.matmul %16, %14, %cst_16 {dimension_numbers = #tpu.dot_dimension_numbers<[1], [0], [0], [1], [0, 0, 1, 1], [], []>} : vector<4x3xbf16>, vector<3x49xbf16>, vector<4x49xf32> -> vector<4x49xf32>
    %18 = arith.addf %10, %17 : vector<4x49xf32>
    %c2 = arith.constant 2 : index
    %c0_17 = arith.constant 0 : index
    %c0_18 = arith.constant 0 : index
    %19 = vector.load %arg4[%c2, %c0_17, %c0_18] : memref<9x256x49xbf16, #tpu.memory_space<vmem>>, vector<1x256x49xbf16>
    %20 = vector.shape_cast %19 : vector<1x256x49xbf16> to vector<256x49xbf16>
    %cst_19 = arith.constant dense<0.000000e+00> : vector<3x49xf32>
    %21 = tpu.matmul %1, %20, %cst_19 {dimension_numbers = #tpu.dot_dimension_numbers<[1], [0], [0], [1], [0, 0, 1, 1], [], []>} : vector<3x256xbf16>, vector<256x49xbf16>, vector<3x49xf32> -> vector<3x49xf32>
    %22 = arith.truncf %21 : vector<3x49xf32> to vector<3x49xbf16>
    %c2_20 = arith.constant 2 : index
    %c0_21 = arith.constant 0 : index
    %c0_22 = arith.constant 0 : index
    %23 = vector.load %arg2[%c2_20, %c0_21, %c0_22] : memref<9x4x3xbf16, #tpu.memory_space<vmem>>, vector<1x4x3xbf16>
    %24 = vector.shape_cast %23 : vector<1x4x3xbf16> to vector<4x3xbf16>
    %cst_23 = arith.constant dense<0.000000e+00> : vector<4x49xf32>
    %25 = tpu.matmul %24, %22, %cst_23 {dimension_numbers = #tpu.dot_dimension_numbers<[1], [0], [0], [1], [0, 0, 1, 1], [], []>} : vector<4x3xbf16>, vector<3x49xbf16>, vector<4x49xf32> -> vector<4x49xf32>
    %26 = arith.addf %18, %25 : vector<4x49xf32>
    %c3 = arith.constant 3 : index
    %c0_24 = arith.constant 0 : index
    %c0_25 = arith.constant 0 : index
    %27 = vector.load %arg4[%c3, %c0_24, %c0_25] : memref<9x256x49xbf16, #tpu.memory_space<vmem>>, vector<1x256x49xbf16>
    %28 = vector.shape_cast %27 : vector<1x256x49xbf16> to vector<256x49xbf16>
    %cst_26 = arith.constant dense<0.000000e+00> : vector<3x49xf32>
    %29 = tpu.matmul %1, %28, %cst_26 {dimension_numbers = #tpu.dot_dimension_numbers<[1], [0], [0], [1], [0, 0, 1, 1], [], []>} : vector<3x256xbf16>, vector<256x49xbf16>, vector<3x49xf32> -> vector<3x49xf32>
    %30 = arith.truncf %29 : vector<3x49xf32> to vector<3x49xbf16>
    %c3_27 = arith.constant 3 : index
    %c0_28 = arith.constant 0 : index
    %c0_29 = arith.constant 0 : index
    %31 = vector.load %arg2[%c3_27, %c0_28, %c0_29] : memref<9x4x3xbf16, #tpu.memory_space<vmem>>, vector<1x4x3xbf16>
    %32 = vector.shape_cast %31 : vector<1x4x3xbf16> to vector<4x3xbf16>
    %cst_30 = arith.constant dense<0.000000e+00> : vector<4x49xf32>
    %33 = tpu.matmul %32, %30, %cst_30 {dimension_numbers = #tpu.dot_dimension_numbers<[1], [0], [0], [1], [0, 0, 1, 1], [], []>} : vector<4x3xbf16>, vector<3x49xbf16>, vector<4x49xf32> -> vector<4x49xf32>
    %34 = arith.addf %26, %33 : vector<4x49xf32>
    %c4 = arith.constant 4 : index
    %c0_31 = arith.constant 0 : index
    %c0_32 = arith.constant 0 : index
    %35 = vector.load %arg4[%c4, %c0_31, %c0_32] : memref<9x256x49xbf16, #tpu.memory_space<vmem>>, vector<1x256x49xbf16>
    %36 = vector.shape_cast %35 : vector<1x256x49xbf16> to vector<256x49xbf16>
    %cst_33 = arith.constant dense<0.000000e+00> : vector<3x49xf32>
    %37 = tpu.matmul %1, %36, %cst_33 {dimension_numbers = #tpu.dot_dimension_numbers<[1], [0], [0], [1], [0, 0, 1, 1], [], []>} : vector<3x256xbf16>, vector<256x49xbf16>, vector<3x49xf32> -> vector<3x49xf32>
    %38 = arith.truncf %37 : vector<3x49xf32> to vector<3x49xbf16>
    %c4_34 = arith.constant 4 : index
    %c0_35 = arith.constant 0 : index
    %c0_36 = arith.constant 0 : index
    %39 = vector.load %arg2[%c4_34, %c0_35, %c0_36] : memref<9x4x3xbf16, #tpu.memory_space<vmem>>, vector<1x4x3xbf16>
    %40 = vector.shape_cast %39 : vector<1x4x3xbf16> to vector<4x3xbf16>
    %cst_37 = arith.constant dense<0.000000e+00> : vector<4x49xf32>
    %41 = tpu.matmul %40, %38, %cst_37 {dimension_numbers = #tpu.dot_dimension_numbers<[1], [0], [0], [1], [0, 0, 1, 1], [], []>} : vector<4x3xbf16>, vector<3x49xbf16>, vector<4x49xf32> -> vector<4x49xf32>
    %42 = arith.addf %34, %41 : vector<4x49xf32>
    %c5 = arith.constant 5 : index
    %c0_38 = arith.constant 0 : index
    %c0_39 = arith.constant 0 : index
    %43 = vector.load %arg4[%c5, %c0_38, %c0_39] : memref<9x256x49xbf16, #tpu.memory_space<vmem>>, vector<1x256x49xbf16>
    %44 = vector.shape_cast %43 : vector<1x256x49xbf16> to vector<256x49xbf16>
    %cst_40 = arith.constant dense<0.000000e+00> : vector<3x49xf32>
    %45 = tpu.matmul %1, %44, %cst_40 {dimension_numbers = #tpu.dot_dimension_numbers<[1], [0], [0], [1], [0, 0, 1, 1], [], []>} : vector<3x256xbf16>, vector<256x49xbf16>, vector<3x49xf32> -> vector<3x49xf32>
    %46 = arith.truncf %45 : vector<3x49xf32> to vector<3x49xbf16>
    %c5_41 = arith.constant 5 : index
    %c0_42 = arith.constant 0 : index
    %c0_43 = arith.constant 0 : index
    %47 = vector.load %arg2[%c5_41, %c0_42, %c0_43] : memref<9x4x3xbf16, #tpu.memory_space<vmem>>, vector<1x4x3xbf16>
    %48 = vector.shape_cast %47 : vector<1x4x3xbf16> to vector<4x3xbf16>
    %cst_44 = arith.constant dense<0.000000e+00> : vector<4x49xf32>
    %49 = tpu.matmul %48, %46, %cst_44 {dimension_numbers = #tpu.dot_dimension_numbers<[1], [0], [0], [1], [0, 0, 1, 1], [], []>} : vector<4x3xbf16>, vector<3x49xbf16>, vector<4x49xf32> -> vector<4x49xf32>
    %50 = arith.addf %42, %49 : vector<4x49xf32>
    %c6 = arith.constant 6 : index
    %c0_45 = arith.constant 0 : index
    %c0_46 = arith.constant 0 : index
    %51 = vector.load %arg4[%c6, %c0_45, %c0_46] : memref<9x256x49xbf16, #tpu.memory_space<vmem>>, vector<1x256x49xbf16>
    %52 = vector.shape_cast %51 : vector<1x256x49xbf16> to vector<256x49xbf16>
    %cst_47 = arith.constant dense<0.000000e+00> : vector<3x49xf32>
    %53 = tpu.matmul %1, %52, %cst_47 {dimension_numbers = #tpu.dot_dimension_numbers<[1], [0], [0], [1], [0, 0, 1, 1], [], []>} : vector<3x256xbf16>, vector<256x49xbf16>, vector<3x49xf32> -> vector<3x49xf32>
    %54 = arith.truncf %53 : vector<3x49xf32> to vector<3x49xbf16>
    %c6_48 = arith.constant 6 : index
    %c0_49 = arith.constant 0 : index
    %c0_50 = arith.constant 0 : index
    %55 = vector.load %arg2[%c6_48, %c0_49, %c0_50] : memref<9x4x3xbf16, #tpu.memory_space<vmem>>, vector<1x4x3xbf16>
    %56 = vector.shape_cast %55 : vector<1x4x3xbf16> to vector<4x3xbf16>
    %cst_51 = arith.constant dense<0.000000e+00> : vector<4x49xf32>
    %57 = tpu.matmul %56, %54, %cst_51 {dimension_numbers = #tpu.dot_dimension_numbers<[1], [0], [0], [1], [0, 0, 1, 1], [], []>} : vector<4x3xbf16>, vector<3x49xbf16>, vector<4x49xf32> -> vector<4x49xf32>
    %58 = arith.addf %50, %57 : vector<4x49xf32>
    %c7 = arith.constant 7 : index
    %c0_52 = arith.constant 0 : index
    %c0_53 = arith.constant 0 : index
    %59 = vector.load %arg4[%c7, %c0_52, %c0_53] : memref<9x256x49xbf16, #tpu.memory_space<vmem>>, vector<1x256x49xbf16>
    %60 = vector.shape_cast %59 : vector<1x256x49xbf16> to vector<256x49xbf16>
    %cst_54 = arith.constant dense<0.000000e+00> : vector<3x49xf32>
    %61 = tpu.matmul %1, %60, %cst_54 {dimension_numbers = #tpu.dot_dimension_numbers<[1], [0], [0], [1], [0, 0, 1, 1], [], []>} : vector<3x256xbf16>, vector<256x49xbf16>, vector<3x49xf32> -> vector<3x49xf32>
    %62 = arith.truncf %61 : vector<3x49xf32> to vector<3x49xbf16>
    %c7_55 = arith.constant 7 : index
    %c0_56 = arith.constant 0 : index
    %c0_57 = arith.constant 0 : index
    %63 = vector.load %arg2[%c7_55, %c0_56, %c0_57] : memref<9x4x3xbf16, #tpu.memory_space<vmem>>, vector<1x4x3xbf16>
    %64 = vector.shape_cast %63 : vector<1x4x3xbf16> to vector<4x3xbf16>
    %cst_58 = arith.constant dense<0.000000e+00> : vector<4x49xf32>
    %65 = tpu.matmul %64, %62, %cst_58 {dimension_numbers = #tpu.dot_dimension_numbers<[1], [0], [0], [1], [0, 0, 1, 1], [], []>} : vector<4x3xbf16>, vector<3x49xbf16>, vector<4x49xf32> -> vector<4x49xf32>
    %66 = arith.addf %58, %65 : vector<4x49xf32>
    %c8 = arith.constant 8 : index
    %c0_59 = arith.constant 0 : index
    %c0_60 = arith.constant 0 : index
    %67 = vector.load %arg4[%c8, %c0_59, %c0_60] : memref<9x256x49xbf16, #tpu.memory_space<vmem>>, vector<1x256x49xbf16>
    %68 = vector.shape_cast %67 : vector<1x256x49xbf16> to vector<256x49xbf16>
    %cst_61 = arith.constant dense<0.000000e+00> : vector<3x49xf32>
    %69 = tpu.matmul %1, %68, %cst_61 {dimension_numbers = #tpu.dot_dimension_numbers<[1], [0], [0], [1], [0, 0, 1, 1], [], []>} : vector<3x256xbf16>, vector<256x49xbf16>, vector<3x49xf32> -> vector<3x49xf32>
    %70 = arith.truncf %69 : vector<3x49xf32> to vector<3x49xbf16>
    %c8_62 = arith.constant 8 : index
    %c0_63 = arith.constant 0 : index
    %c0_64 = arith.constant 0 : index
    %71 = vector.load %arg2[%c8_62, %c0_63, %c0_64] : memref<9x4x3xbf16, #tpu.memory_space<vmem>>, vector<1x4x3xbf16>
    %72 = vector.shape_cast %71 : vector<1x4x3xbf16> to vector<4x3xbf16>
    %cst_65 = arith.constant dense<0.000000e+00> : vector<4x49xf32>
    %73 = tpu.matmul %72, %70, %cst_65 {dimension_numbers = #tpu.dot_dimension_numbers<[1], [0], [0], [1], [0, 0, 1, 1], [], []>} : vector<4x3xbf16>, vector<3x49xbf16>, vector<4x49xf32> -> vector<4x49xf32>
    %74 = arith.addf %66, %73 : vector<4x49xf32>
    %c0_66 = arith.constant 0 : index
    %c0_67 = arith.constant 0 : index
    %75 = vector.load %arg3[%c0_66, %c0_67] : memref<4x1xf32, #tpu.memory_space<vmem>>, vector<4x1xf32>
    %76 = vector.broadcast %75 : vector<4x1xf32> to vector<4x49xf32>
    %77 = arith.addf %74, %76 : vector<4x49xf32>
    %cst_68 = arith.constant 0.000000e+00 : f32
    %78 = vector.broadcast %cst_68 : f32 to vector<4x49xf32>
    %79 = arith.maximumf %77, %78 : vector<4x49xf32>
    %80 = arith.truncf %79 : vector<4x49xf32> to vector<4x49xbf16>
    %cst_69 = arith.constant 0.000000e+00 : f32
    %81 = vector.broadcast %cst_69 : f32 to vector<8x9xf32>
    %c0_70 = arith.constant 0 : index
    %c0_71 = arith.constant 0 : index
    %c0_72 = arith.constant 0 : index
    %82 = vector.load %arg7[%c0_70, %c0_71, %c0_72] : memref<9x49x9xbf16, #tpu.memory_space<vmem>>, vector<1x49x9xbf16>
    %83 = vector.shape_cast %82 : vector<1x49x9xbf16> to vector<49x9xbf16>
    %cst_73 = arith.constant dense<0.000000e+00> : vector<4x9xf32>
    %84 = tpu.matmul %80, %83, %cst_73 {dimension_numbers = #tpu.dot_dimension_numbers<[1], [0], [0], [1], [0, 0, 1, 1], [], []>} : vector<4x49xbf16>, vector<49x9xbf16>, vector<4x9xf32> -> vector<4x9xf32>
    %85 = arith.truncf %84 : vector<4x9xf32> to vector<4x9xbf16>
    %c0_74 = arith.constant 0 : index
    %c0_75 = arith.constant 0 : index
    %c0_76 = arith.constant 0 : index
    %86 = vector.load %arg5[%c0_74, %c0_75, %c0_76] : memref<9x8x4xbf16, #tpu.memory_space<vmem>>, vector<1x8x4xbf16>
    %87 = vector.shape_cast %86 : vector<1x8x4xbf16> to vector<8x4xbf16>
    %cst_77 = arith.constant dense<0.000000e+00> : vector<8x9xf32>
    %88 = tpu.matmul %87, %85, %cst_77 {dimension_numbers = #tpu.dot_dimension_numbers<[1], [0], [0], [1], [0, 0, 1, 1], [], []>} : vector<8x4xbf16>, vector<4x9xbf16>, vector<8x9xf32> -> vector<8x9xf32>
    %89 = arith.addf %81, %88 : vector<8x9xf32>
    %c1_78 = arith.constant 1 : index
    %c0_79 = arith.constant 0 : index
    %c0_80 = arith.constant 0 : index
    %90 = vector.load %arg7[%c1_78, %c0_79, %c0_80] : memref<9x49x9xbf16, #tpu.memory_space<vmem>>, vector<1x49x9xbf16>
    %91 = vector.shape_cast %90 : vector<1x49x9xbf16> to vector<49x9xbf16>
    %cst_81 = arith.constant dense<0.000000e+00> : vector<4x9xf32>
    %92 = tpu.matmul %80, %91, %cst_81 {dimension_numbers = #tpu.dot_dimension_numbers<[1], [0], [0], [1], [0, 0, 1, 1], [], []>} : vector<4x49xbf16>, vector<49x9xbf16>, vector<4x9xf32> -> vector<4x9xf32>
    %93 = arith.truncf %92 : vector<4x9xf32> to vector<4x9xbf16>
    %c1_82 = arith.constant 1 : index
    %c0_83 = arith.constant 0 : index
    %c0_84 = arith.constant 0 : index
    %94 = vector.load %arg5[%c1_82, %c0_83, %c0_84] : memref<9x8x4xbf16, #tpu.memory_space<vmem>>, vector<1x8x4xbf16>
    %95 = vector.shape_cast %94 : vector<1x8x4xbf16> to vector<8x4xbf16>
    %cst_85 = arith.constant dense<0.000000e+00> : vector<8x9xf32>
    %96 = tpu.matmul %95, %93, %cst_85 {dimension_numbers = #tpu.dot_dimension_numbers<[1], [0], [0], [1], [0, 0, 1, 1], [], []>} : vector<8x4xbf16>, vector<4x9xbf16>, vector<8x9xf32> -> vector<8x9xf32>
    %97 = arith.addf %89, %96 : vector<8x9xf32>
    %c2_86 = arith.constant 2 : index
    %c0_87 = arith.constant 0 : index
    %c0_88 = arith.constant 0 : index
    %98 = vector.load %arg7[%c2_86, %c0_87, %c0_88] : memref<9x49x9xbf16, #tpu.memory_space<vmem>>, vector<1x49x9xbf16>
    %99 = vector.shape_cast %98 : vector<1x49x9xbf16> to vector<49x9xbf16>
    %cst_89 = arith.constant dense<0.000000e+00> : vector<4x9xf32>
    %100 = tpu.matmul %80, %99, %cst_89 {dimension_numbers = #tpu.dot_dimension_numbers<[1], [0], [0], [1], [0, 0, 1, 1], [], []>} : vector<4x49xbf16>, vector<49x9xbf16>, vector<4x9xf32> -> vector<4x9xf32>
    %101 = arith.truncf %100 : vector<4x9xf32> to vector<4x9xbf16>
    %c2_90 = arith.constant 2 : index
    %c0_91 = arith.constant 0 : index
    %c0_92 = arith.constant 0 : index
    %102 = vector.load %arg5[%c2_90, %c0_91, %c0_92] : memref<9x8x4xbf16, #tpu.memory_space<vmem>>, vector<1x8x4xbf16>
    %103 = vector.shape_cast %102 : vector<1x8x4xbf16> to vector<8x4xbf16>
    %cst_93 = arith.constant dense<0.000000e+00> : vector<8x9xf32>
    %104 = tpu.matmul %103, %101, %cst_93 {dimension_numbers = #tpu.dot_dimension_numbers<[1], [0], [0], [1], [0, 0, 1, 1], [], []>} : vector<8x4xbf16>, vector<4x9xbf16>, vector<8x9xf32> -> vector<8x9xf32>
    %105 = arith.addf %97, %104 : vector<8x9xf32>
    %c3_94 = arith.constant 3 : index
    %c0_95 = arith.constant 0 : index
    %c0_96 = arith.constant 0 : index
    %106 = vector.load %arg7[%c3_94, %c0_95, %c0_96] : memref<9x49x9xbf16, #tpu.memory_space<vmem>>, vector<1x49x9xbf16>
    %107 = vector.shape_cast %106 : vector<1x49x9xbf16> to vector<49x9xbf16>
    %cst_97 = arith.constant dense<0.000000e+00> : vector<4x9xf32>
    %108 = tpu.matmul %80, %107, %cst_97 {dimension_numbers = #tpu.dot_dimension_numbers<[1], [0], [0], [1], [0, 0, 1, 1], [], []>} : vector<4x49xbf16>, vector<49x9xbf16>, vector<4x9xf32> -> vector<4x9xf32>
    %109 = arith.truncf %108 : vector<4x9xf32> to vector<4x9xbf16>
    %c3_98 = arith.constant 3 : index
    %c0_99 = arith.constant 0 : index
    %c0_100 = arith.constant 0 : index
    %110 = vector.load %arg5[%c3_98, %c0_99, %c0_100] : memref<9x8x4xbf16, #tpu.memory_space<vmem>>, vector<1x8x4xbf16>
    %111 = vector.shape_cast %110 : vector<1x8x4xbf16> to vector<8x4xbf16>
    %cst_101 = arith.constant dense<0.000000e+00> : vector<8x9xf32>
    %112 = tpu.matmul %111, %109, %cst_101 {dimension_numbers = #tpu.dot_dimension_numbers<[1], [0], [0], [1], [0, 0, 1, 1], [], []>} : vector<8x4xbf16>, vector<4x9xbf16>, vector<8x9xf32> -> vector<8x9xf32>
    %113 = arith.addf %105, %112 : vector<8x9xf32>
    %c4_102 = arith.constant 4 : index
    %c0_103 = arith.constant 0 : index
    %c0_104 = arith.constant 0 : index
    %114 = vector.load %arg7[%c4_102, %c0_103, %c0_104] : memref<9x49x9xbf16, #tpu.memory_space<vmem>>, vector<1x49x9xbf16>
    %115 = vector.shape_cast %114 : vector<1x49x9xbf16> to vector<49x9xbf16>
    %cst_105 = arith.constant dense<0.000000e+00> : vector<4x9xf32>
    %116 = tpu.matmul %80, %115, %cst_105 {dimension_numbers = #tpu.dot_dimension_numbers<[1], [0], [0], [1], [0, 0, 1, 1], [], []>} : vector<4x49xbf16>, vector<49x9xbf16>, vector<4x9xf32> -> vector<4x9xf32>
    %117 = arith.truncf %116 : vector<4x9xf32> to vector<4x9xbf16>
    %c4_106 = arith.constant 4 : index
    %c0_107 = arith.constant 0 : index
    %c0_108 = arith.constant 0 : index
    %118 = vector.load %arg5[%c4_106, %c0_107, %c0_108] : memref<9x8x4xbf16, #tpu.memory_space<vmem>>, vector<1x8x4xbf16>
    %119 = vector.shape_cast %118 : vector<1x8x4xbf16> to vector<8x4xbf16>
    %cst_109 = arith.constant dense<0.000000e+00> : vector<8x9xf32>
    %120 = tpu.matmul %119, %117, %cst_109 {dimension_numbers = #tpu.dot_dimension_numbers<[1], [0], [0], [1], [0, 0, 1, 1], [], []>} : vector<8x4xbf16>, vector<4x9xbf16>, vector<8x9xf32> -> vector<8x9xf32>
    %121 = arith.addf %113, %120 : vector<8x9xf32>
    %c5_110 = arith.constant 5 : index
    %c0_111 = arith.constant 0 : index
    %c0_112 = arith.constant 0 : index
    %122 = vector.load %arg7[%c5_110, %c0_111, %c0_112] : memref<9x49x9xbf16, #tpu.memory_space<vmem>>, vector<1x49x9xbf16>
    %123 = vector.shape_cast %122 : vector<1x49x9xbf16> to vector<49x9xbf16>
    %cst_113 = arith.constant dense<0.000000e+00> : vector<4x9xf32>
    %124 = tpu.matmul %80, %123, %cst_113 {dimension_numbers = #tpu.dot_dimension_numbers<[1], [0], [0], [1], [0, 0, 1, 1], [], []>} : vector<4x49xbf16>, vector<49x9xbf16>, vector<4x9xf32> -> vector<4x9xf32>
    %125 = arith.truncf %124 : vector<4x9xf32> to vector<4x9xbf16>
    %c5_114 = arith.constant 5 : index
    %c0_115 = arith.constant 0 : index
    %c0_116 = arith.constant 0 : index
    %126 = vector.load %arg5[%c5_114, %c0_115, %c0_116] : memref<9x8x4xbf16, #tpu.memory_space<vmem>>, vector<1x8x4xbf16>
    %127 = vector.shape_cast %126 : vector<1x8x4xbf16> to vector<8x4xbf16>
    %cst_117 = arith.constant dense<0.000000e+00> : vector<8x9xf32>
    %128 = tpu.matmul %127, %125, %cst_117 {dimension_numbers = #tpu.dot_dimension_numbers<[1], [0], [0], [1], [0, 0, 1, 1], [], []>} : vector<8x4xbf16>, vector<4x9xbf16>, vector<8x9xf32> -> vector<8x9xf32>
    %129 = arith.addf %121, %128 : vector<8x9xf32>
    %c6_118 = arith.constant 6 : index
    %c0_119 = arith.constant 0 : index
    %c0_120 = arith.constant 0 : index
    %130 = vector.load %arg7[%c6_118, %c0_119, %c0_120] : memref<9x49x9xbf16, #tpu.memory_space<vmem>>, vector<1x49x9xbf16>
    %131 = vector.shape_cast %130 : vector<1x49x9xbf16> to vector<49x9xbf16>
    %cst_121 = arith.constant dense<0.000000e+00> : vector<4x9xf32>
    %132 = tpu.matmul %80, %131, %cst_121 {dimension_numbers = #tpu.dot_dimension_numbers<[1], [0], [0], [1], [0, 0, 1, 1], [], []>} : vector<4x49xbf16>, vector<49x9xbf16>, vector<4x9xf32> -> vector<4x9xf32>
    %133 = arith.truncf %132 : vector<4x9xf32> to vector<4x9xbf16>
    %c6_122 = arith.constant 6 : index
    %c0_123 = arith.constant 0 : index
    %c0_124 = arith.constant 0 : index
    %134 = vector.load %arg5[%c6_122, %c0_123, %c0_124] : memref<9x8x4xbf16, #tpu.memory_space<vmem>>, vector<1x8x4xbf16>
    %135 = vector.shape_cast %134 : vector<1x8x4xbf16> to vector<8x4xbf16>
    %cst_125 = arith.constant dense<0.000000e+00> : vector<8x9xf32>
    %136 = tpu.matmul %135, %133, %cst_125 {dimension_numbers = #tpu.dot_dimension_numbers<[1], [0], [0], [1], [0, 0, 1, 1], [], []>} : vector<8x4xbf16>, vector<4x9xbf16>, vector<8x9xf32> -> vector<8x9xf32>
    %137 = arith.addf %129, %136 : vector<8x9xf32>
    %c7_126 = arith.constant 7 : index
    %c0_127 = arith.constant 0 : index
    %c0_128 = arith.constant 0 : index
    %138 = vector.load %arg7[%c7_126, %c0_127, %c0_128] : memref<9x49x9xbf16, #tpu.memory_space<vmem>>, vector<1x49x9xbf16>
    %139 = vector.shape_cast %138 : vector<1x49x9xbf16> to vector<49x9xbf16>
    %cst_129 = arith.constant dense<0.000000e+00> : vector<4x9xf32>
    %140 = tpu.matmul %80, %139, %cst_129 {dimension_numbers = #tpu.dot_dimension_numbers<[1], [0], [0], [1], [0, 0, 1, 1], [], []>} : vector<4x49xbf16>, vector<49x9xbf16>, vector<4x9xf32> -> vector<4x9xf32>
    %141 = arith.truncf %140 : vector<4x9xf32> to vector<4x9xbf16>
    %c7_130 = arith.constant 7 : index
    %c0_131 = arith.constant 0 : index
    %c0_132 = arith.constant 0 : index
    %142 = vector.load %arg5[%c7_130, %c0_131, %c0_132] : memref<9x8x4xbf16, #tpu.memory_space<vmem>>, vector<1x8x4xbf16>
    %143 = vector.shape_cast %142 : vector<1x8x4xbf16> to vector<8x4xbf16>
    %cst_133 = arith.constant dense<0.000000e+00> : vector<8x9xf32>
    %144 = tpu.matmul %143, %141, %cst_133 {dimension_numbers = #tpu.dot_dimension_numbers<[1], [0], [0], [1], [0, 0, 1, 1], [], []>} : vector<8x4xbf16>, vector<4x9xbf16>, vector<8x9xf32> -> vector<8x9xf32>
    %145 = arith.addf %137, %144 : vector<8x9xf32>
    %c8_134 = arith.constant 8 : index
    %c0_135 = arith.constant 0 : index
    %c0_136 = arith.constant 0 : index
    %146 = vector.load %arg7[%c8_134, %c0_135, %c0_136] : memref<9x49x9xbf16, #tpu.memory_space<vmem>>, vector<1x49x9xbf16>
    %147 = vector.shape_cast %146 : vector<1x49x9xbf16> to vector<49x9xbf16>
    %cst_137 = arith.constant dense<0.000000e+00> : vector<4x9xf32>
    %148 = tpu.matmul %80, %147, %cst_137 {dimension_numbers = #tpu.dot_dimension_numbers<[1], [0], [0], [1], [0, 0, 1, 1], [], []>} : vector<4x49xbf16>, vector<49x9xbf16>, vector<4x9xf32> -> vector<4x9xf32>
    %149 = arith.truncf %148 : vector<4x9xf32> to vector<4x9xbf16>
    %c8_138 = arith.constant 8 : index
    %c0_139 = arith.constant 0 : index
    %c0_140 = arith.constant 0 : index
    %150 = vector.load %arg5[%c8_138, %c0_139, %c0_140] : memref<9x8x4xbf16, #tpu.memory_space<vmem>>, vector<1x8x4xbf16>
    %151 = vector.shape_cast %150 : vector<1x8x4xbf16> to vector<8x4xbf16>
    %cst_141 = arith.constant dense<0.000000e+00> : vector<8x9xf32>
    %152 = tpu.matmul %151, %149, %cst_141 {dimension_numbers = #tpu.dot_dimension_numbers<[1], [0], [0], [1], [0, 0, 1, 1], [], []>} : vector<8x4xbf16>, vector<4x9xbf16>, vector<8x9xf32> -> vector<8x9xf32>
    %153 = arith.addf %145, %152 : vector<8x9xf32>
    %c0_142 = arith.constant 0 : index
    %c0_143 = arith.constant 0 : index
    %154 = vector.load %arg6[%c0_142, %c0_143] : memref<8x1xf32, #tpu.memory_space<vmem>>, vector<8x1xf32>
    %155 = vector.broadcast %154 : vector<8x1xf32> to vector<8x9xf32>
    %156 = arith.addf %153, %155 : vector<8x9xf32>
    %cst_144 = arith.constant 0.000000e+00 : f32
    %157 = vector.broadcast %cst_144 : f32 to vector<8x9xf32>
    %158 = arith.maximumf %156, %157 : vector<8x9xf32>
    %159 = arith.truncf %158 : vector<8x9xf32> to vector<8x9xbf16>
    %c0_145 = arith.constant 0 : index
    %c0_146 = arith.constant 0 : index
    %160 = vector.load %arg9[%c0_145, %c0_146] : memref<1x32xf32, #tpu.memory_space<vmem>>, vector<1x32xf32>
    %161 = vector.extract_strided_slice %159 {offsets = [0, 0], sizes = [1, 9], strides = [1, 1]} : vector<8x9xbf16> to vector<1x9xbf16>
    %c0_147 = arith.constant 0 : index
    %c0_148 = arith.constant 0 : index
    %c0_149 = arith.constant 0 : index
    %162 = vector.load %arg8[%c0_147, %c0_148, %c0_149] : memref<8x9x32xbf16, #tpu.memory_space<vmem>>, vector<1x9x32xbf16>
    %163 = vector.shape_cast %162 : vector<1x9x32xbf16> to vector<9x32xbf16>
    %cst_150 = arith.constant dense<0.000000e+00> : vector<1x32xf32>
    %164 = tpu.matmul %161, %163, %cst_150 {dimension_numbers = #tpu.dot_dimension_numbers<[1], [0], [0], [1], [0, 0, 1, 1], [], []>} : vector<1x9xbf16>, vector<9x32xbf16>, vector<1x32xf32> -> vector<1x32xf32>
    %165 = arith.addf %160, %164 : vector<1x32xf32>
    %166 = vector.extract_strided_slice %159 {offsets = [1, 0], sizes = [1, 9], strides = [1, 1]} : vector<8x9xbf16> to vector<1x9xbf16>
    %c1_151 = arith.constant 1 : index
    %c0_152 = arith.constant 0 : index
    %c0_153 = arith.constant 0 : index
    %167 = vector.load %arg8[%c1_151, %c0_152, %c0_153] : memref<8x9x32xbf16, #tpu.memory_space<vmem>>, vector<1x9x32xbf16>
    %168 = vector.shape_cast %167 : vector<1x9x32xbf16> to vector<9x32xbf16>
    %cst_154 = arith.constant dense<0.000000e+00> : vector<1x32xf32>
    %169 = tpu.matmul %166, %168, %cst_154 {dimension_numbers = #tpu.dot_dimension_numbers<[1], [0], [0], [1], [0, 0, 1, 1], [], []>} : vector<1x9xbf16>, vector<9x32xbf16>, vector<1x32xf32> -> vector<1x32xf32>
    %170 = arith.addf %165, %169 : vector<1x32xf32>
    %171 = vector.extract_strided_slice %159 {offsets = [2, 0], sizes = [1, 9], strides = [1, 1]} : vector<8x9xbf16> to vector<1x9xbf16>
    %c2_155 = arith.constant 2 : index
    %c0_156 = arith.constant 0 : index
    %c0_157 = arith.constant 0 : index
    %172 = vector.load %arg8[%c2_155, %c0_156, %c0_157] : memref<8x9x32xbf16, #tpu.memory_space<vmem>>, vector<1x9x32xbf16>
    %173 = vector.shape_cast %172 : vector<1x9x32xbf16> to vector<9x32xbf16>
    %cst_158 = arith.constant dense<0.000000e+00> : vector<1x32xf32>
    %174 = tpu.matmul %171, %173, %cst_158 {dimension_numbers = #tpu.dot_dimension_numbers<[1], [0], [0], [1], [0, 0, 1, 1], [], []>} : vector<1x9xbf16>, vector<9x32xbf16>, vector<1x32xf32> -> vector<1x32xf32>
    %175 = arith.addf %170, %174 : vector<1x32xf32>
    %176 = vector.extract_strided_slice %159 {offsets = [3, 0], sizes = [1, 9], strides = [1, 1]} : vector<8x9xbf16> to vector<1x9xbf16>
    %c3_159 = arith.constant 3 : index
    %c0_160 = arith.constant 0 : index
    %c0_161 = arith.constant 0 : index
    %177 = vector.load %arg8[%c3_159, %c0_160, %c0_161] : memref<8x9x32xbf16, #tpu.memory_space<vmem>>, vector<1x9x32xbf16>
    %178 = vector.shape_cast %177 : vector<1x9x32xbf16> to vector<9x32xbf16>
    %cst_162 = arith.constant dense<0.000000e+00> : vector<1x32xf32>
    %179 = tpu.matmul %176, %178, %cst_162 {dimension_numbers = #tpu.dot_dimension_numbers<[1], [0], [0], [1], [0, 0, 1, 1], [], []>} : vector<1x9xbf16>, vector<9x32xbf16>, vector<1x32xf32> -> vector<1x32xf32>
    %180 = arith.addf %175, %179 : vector<1x32xf32>
    %181 = vector.extract_strided_slice %159 {offsets = [4, 0], sizes = [1, 9], strides = [1, 1]} : vector<8x9xbf16> to vector<1x9xbf16>
    %c4_163 = arith.constant 4 : index
    %c0_164 = arith.constant 0 : index
    %c0_165 = arith.constant 0 : index
    %182 = vector.load %arg8[%c4_163, %c0_164, %c0_165] : memref<8x9x32xbf16, #tpu.memory_space<vmem>>, vector<1x9x32xbf16>
    %183 = vector.shape_cast %182 : vector<1x9x32xbf16> to vector<9x32xbf16>
    %cst_166 = arith.constant dense<0.000000e+00> : vector<1x32xf32>
    %184 = tpu.matmul %181, %183, %cst_166 {dimension_numbers = #tpu.dot_dimension_numbers<[1], [0], [0], [1], [0, 0, 1, 1], [], []>} : vector<1x9xbf16>, vector<9x32xbf16>, vector<1x32xf32> -> vector<1x32xf32>
    %185 = arith.addf %180, %184 : vector<1x32xf32>
    %186 = vector.extract_strided_slice %159 {offsets = [5, 0], sizes = [1, 9], strides = [1, 1]} : vector<8x9xbf16> to vector<1x9xbf16>
    %c5_167 = arith.constant 5 : index
    %c0_168 = arith.constant 0 : index
    %c0_169 = arith.constant 0 : index
    %187 = vector.load %arg8[%c5_167, %c0_168, %c0_169] : memref<8x9x32xbf16, #tpu.memory_space<vmem>>, vector<1x9x32xbf16>
    %188 = vector.shape_cast %187 : vector<1x9x32xbf16> to vector<9x32xbf16>
    %cst_170 = arith.constant dense<0.000000e+00> : vector<1x32xf32>
    %189 = tpu.matmul %186, %188, %cst_170 {dimension_numbers = #tpu.dot_dimension_numbers<[1], [0], [0], [1], [0, 0, 1, 1], [], []>} : vector<1x9xbf16>, vector<9x32xbf16>, vector<1x32xf32> -> vector<1x32xf32>
    %190 = arith.addf %185, %189 : vector<1x32xf32>
    %191 = vector.extract_strided_slice %159 {offsets = [6, 0], sizes = [1, 9], strides = [1, 1]} : vector<8x9xbf16> to vector<1x9xbf16>
    %c6_171 = arith.constant 6 : index
    %c0_172 = arith.constant 0 : index
    %c0_173 = arith.constant 0 : index
    %192 = vector.load %arg8[%c6_171, %c0_172, %c0_173] : memref<8x9x32xbf16, #tpu.memory_space<vmem>>, vector<1x9x32xbf16>
    %193 = vector.shape_cast %192 : vector<1x9x32xbf16> to vector<9x32xbf16>
    %cst_174 = arith.constant dense<0.000000e+00> : vector<1x32xf32>
    %194 = tpu.matmul %191, %193, %cst_174 {dimension_numbers = #tpu.dot_dimension_numbers<[1], [0], [0], [1], [0, 0, 1, 1], [], []>} : vector<1x9xbf16>, vector<9x32xbf16>, vector<1x32xf32> -> vector<1x32xf32>
    %195 = arith.addf %190, %194 : vector<1x32xf32>
    %196 = vector.extract_strided_slice %159 {offsets = [7, 0], sizes = [1, 9], strides = [1, 1]} : vector<8x9xbf16> to vector<1x9xbf16>
    %c7_175 = arith.constant 7 : index
    %c0_176 = arith.constant 0 : index
    %c0_177 = arith.constant 0 : index
    %197 = vector.load %arg8[%c7_175, %c0_176, %c0_177] : memref<8x9x32xbf16, #tpu.memory_space<vmem>>, vector<1x9x32xbf16>
    %198 = vector.shape_cast %197 : vector<1x9x32xbf16> to vector<9x32xbf16>
    %cst_178 = arith.constant dense<0.000000e+00> : vector<1x32xf32>
    %199 = tpu.matmul %196, %198, %cst_178 {dimension_numbers = #tpu.dot_dimension_numbers<[1], [0], [0], [1], [0, 0, 1, 1], [], []>} : vector<1x9xbf16>, vector<9x32xbf16>, vector<1x32xf32> -> vector<1x32xf32>
    %200 = arith.addf %195, %199 : vector<1x32xf32>
    %201 = arith.truncf %200 : vector<1x32xf32> to vector<1x32xbf16>
    %c0_179 = arith.constant 0 : index
    %c0_180 = arith.constant 0 : index
    %202 = vector.load %arg10[%c0_179, %c0_180] : memref<32x8xbf16, #tpu.memory_space<vmem>>, vector<32x8xbf16>
    %cst_181 = arith.constant dense<0.000000e+00> : vector<1x8xf32>
    %203 = tpu.matmul %201, %202, %cst_181 {dimension_numbers = #tpu.dot_dimension_numbers<[1], [0], [0], [1], [0, 0, 1, 1], [], []>} : vector<1x32xbf16>, vector<32x8xbf16>, vector<1x8xf32> -> vector<1x8xf32>
    %c0_182 = arith.constant 0 : index
    %c0_183 = arith.constant 0 : index
    %204 = vector.load %arg11[%c0_182, %c0_183] : memref<1x8xf32, #tpu.memory_space<vmem>>, vector<1x8xf32>
    %205 = arith.addf %203, %204 : vector<1x8xf32>
    %c0_184 = arith.constant 0 : index
    %c0_185 = arith.constant 0 : index
    %206 = vector.load %arg12[%c0_184, %c0_185] : memref<32x8xbf16, #tpu.memory_space<vmem>>, vector<32x8xbf16>
    %cst_186 = arith.constant dense<0.000000e+00> : vector<1x8xf32>
    %207 = tpu.matmul %201, %206, %cst_186 {dimension_numbers = #tpu.dot_dimension_numbers<[1], [0], [0], [1], [0, 0, 1, 1], [], []>} : vector<1x32xbf16>, vector<32x8xbf16>, vector<1x8xf32> -> vector<1x8xf32>
    %c0_187 = arith.constant 0 : index
    %c0_188 = arith.constant 0 : index
    %208 = vector.load %arg13[%c0_187, %c0_188] : memref<1x8xf32, #tpu.memory_space<vmem>>, vector<1x8xf32>
    %209 = arith.addf %207, %208 : vector<1x8xf32>
    %cst_189 = arith.constant 0.000000e+00 : f32
    %210 = vector.broadcast %cst_189 : f32 to vector<1x8xf32>
    %211 = arith.maximumf %209, %210 : vector<1x8xf32>
    %212 = math.absf %209 : vector<1x8xf32>
    %cst_190 = arith.constant 0.000000e+00 : f32
    %213 = vector.broadcast %cst_190 : f32 to vector<1x8xf32>
    %214 = arith.subf %213, %212 : vector<1x8xf32>
    %215 = math.exp %214 : vector<1x8xf32>
    %216 = math.log1p %215 : vector<1x8xf32>
    %217 = arith.addf %211, %216 : vector<1x8xf32>
    %c0_191 = arith.constant 0 : index
    %c0_192 = arith.constant 0 : index
    %c0_193 = arith.constant 0 : index
    %218 = vector.load %arg14[%c0_191, %c0_192, %c0_193] : memref<1x1x8xf32, #tpu.memory_space<vmem>>, vector<1x1x8xf32>
    %219 = vector.shape_cast %218 : vector<1x1x8xf32> to vector<1x8xf32>
    %220 = vector.shape_cast %205 : vector<1x8xf32> to vector<1x1x8xf32>
    tpu.vector_store %arg14[%c0_191, %c0_192, %c0_193], %220 {strides = array<i32>} : memref<1x1x8xf32, #tpu.memory_space<vmem>>, vector<1x1x8xf32>,
    %c0_194 = arith.constant 0 : index
    %c0_195 = arith.constant 0 : index
    %c0_196 = arith.constant 0 : index
    %221 = vector.load %arg15[%c0_194, %c0_195, %c0_196] : memref<1x1x8xf32, #tpu.memory_space<vmem>>, vector<1x1x8xf32>
    %222 = vector.shape_cast %221 : vector<1x1x8xf32> to vector<1x8xf32>
    %223 = vector.shape_cast %217 : vector<1x8xf32> to vector<1x1x8xf32>
    tpu.vector_store %arg15[%c0_194, %c0_195, %c0_196], %223 {strides = array<i32>} : memref<1x1x8xf32, #tpu.memory_space<vmem>>, vector<1x1x8xf32>,
    return
  }
  func.func @transform_0(%arg0: i32) -> (i32, i32, i32) {
    %c0_i32 = arith.constant 0 : i32
    %c0_i32_0 = arith.constant 0 : i32
    %c0_i32_1 = arith.constant 0 : i32
    return %arg0, %c0_i32, %c0_i32_0 : i32, i32, i32
  }
  func.func @transform_1(%arg0: i32) -> (i32, i32, i32) {
    %c0_i32 = arith.constant 0 : i32
    %c0_i32_0 = arith.constant 0 : i32
    %c0_i32_1 = arith.constant 0 : i32
    %c0_i32_2 = arith.constant 0 : i32
    return %c0_i32, %c0_i32_0, %c0_i32_1 : i32, i32, i32
  }
  func.func @transform_2(%arg0: i32) -> (i32, i32) {
    %c0_i32 = arith.constant 0 : i32
    %c0_i32_0 = arith.constant 0 : i32
    %c0_i32_1 = arith.constant 0 : i32
    return %c0_i32, %c0_i32_0 : i32, i32
  }
  func.func @transform_3(%arg0: i32) -> (i32, i32, i32) {
    %c0_i32 = arith.constant 0 : i32
    %c0_i32_0 = arith.constant 0 : i32
    %c0_i32_1 = arith.constant 0 : i32
    %c0_i32_2 = arith.constant 0 : i32
    return %c0_i32, %c0_i32_0, %c0_i32_1 : i32, i32, i32
  }
  func.func @transform_4(%arg0: i32) -> (i32, i32, i32) {
    %c0_i32 = arith.constant 0 : i32
    %c0_i32_0 = arith.constant 0 : i32
    %c0_i32_1 = arith.constant 0 : i32
    %c0_i32_2 = arith.constant 0 : i32
    return %c0_i32, %c0_i32_0, %c0_i32_1 : i32, i32, i32
  }
  func.func @transform_5(%arg0: i32) -> (i32, i32) {
    %c0_i32 = arith.constant 0 : i32
    %c0_i32_0 = arith.constant 0 : i32
    %c0_i32_1 = arith.constant 0 : i32
    return %c0_i32, %c0_i32_0 : i32, i32
  }
  func.func @transform_6(%arg0: i32) -> (i32, i32, i32) {
    %c0_i32 = arith.constant 0 : i32
    %c0_i32_0 = arith.constant 0 : i32
    %c0_i32_1 = arith.constant 0 : i32
    %c0_i32_2 = arith.constant 0 : i32
    return %c0_i32, %c0_i32_0, %c0_i32_1 : i32, i32, i32
  }
  func.func @transform_7(%arg0: i32) -> (i32, i32, i32) {
    %c0_i32 = arith.constant 0 : i32
    %c0_i32_0 = arith.constant 0 : i32
    %c0_i32_1 = arith.constant 0 : i32
    %c0_i32_2 = arith.constant 0 : i32
    return %c0_i32, %c0_i32_0, %c0_i32_1 : i32, i32, i32
  }
  func.func @transform_8(%arg0: i32) -> (i32, i32) {
    %c0_i32 = arith.constant 0 : i32
    %c0_i32_0 = arith.constant 0 : i32
    %c0_i32_1 = arith.constant 0 : i32
    return %c0_i32, %c0_i32_0 : i32, i32
  }
  func.func @transform_9(%arg0: i32) -> (i32, i32) {
    %c0_i32 = arith.constant 0 : i32
    %c0_i32_0 = arith.constant 0 : i32
    %c0_i32_1 = arith.constant 0 : i32
    return %c0_i32, %c0_i32_0 : i32, i32
  }
  func.func @transform_10(%arg0: i32) -> (i32, i32) {
    %c0_i32 = arith.constant 0 : i32
    %c0_i32_0 = arith.constant 0 : i32
    %c0_i32_1 = arith.constant 0 : i32
    return %c0_i32, %c0_i32_0 : i32, i32
  }
  func.func @transform_11(%arg0: i32) -> (i32, i32) {
    %c0_i32 = arith.constant 0 : i32
    %c0_i32_0 = arith.constant 0 : i32
    %c0_i32_1 = arith.constant 0 : i32
    return %c0_i32, %c0_i32_0 : i32, i32
  }
  func.func @transform_12(%arg0: i32) -> (i32, i32) {
    %c0_i32 = arith.constant 0 : i32
    %c0_i32_0 = arith.constant 0 : i32
    %c0_i32_1 = arith.constant 0 : i32
    return %c0_i32, %c0_i32_0 : i32, i32
  }
  func.func @transform_13(%arg0: i32) -> (i32, i32, i32) {
    %c0_i32 = arith.constant 0 : i32
    %c0_i32_0 = arith.constant 0 : i32
    %c0_i32_1 = arith.constant 0 : i32
    return %arg0, %c0_i32, %c0_i32_0 : i32, i32, i32
  }
  func.func @transform_14(%arg0: i32) -> (i32, i32, i32) {
    %c0_i32 = arith.constant 0 : i32
    %c0_i32_0 = arith.constant 0 : i32
    %c0_i32_1 = arith.constant 0 : i32
    return %arg0, %c0_i32, %c0_i32_0 : i32, i32, i32
  }
}

</mosaic_0001>

<llo_original>
// kernel: ffg_conv_block_forward.1
$region0: #{ffg_conv_block_forward.1}
  #allocation0 [shape = 'u32[]', space=smem, size = 0x4, offset = 0x4, fixed_abs, tag = 'smem constant byte address 0x4 - core index']
  #allocation1 [shape = 'u32[144,128]{1,0:T(1,128)}', space=vmem, size = 0x12000, scoped, tag = 'internal scratch']
  %s0 = inlined_call_operand.vmem [shape: bf16[2,3,256], index: 0, kind: input, shape index: {}]
  %s1 = inlined_call_operand.vmem [shape: bf16[9,4,3], index: 1, kind: input, shape index: {}]
  %s2 = inlined_call_operand.vmem [shape: f32[4,1], index: 2, kind: input, shape index: {}]
  %s3 = inlined_call_operand.vmem [shape: bf16[9,256,49], index: 3, kind: input, shape index: {}]
  %s4 = inlined_call_operand.vmem [shape: bf16[9,8,4], index: 4, kind: input, shape index: {}]
  %s5 = inlined_call_operand.vmem [shape: f32[8,1], index: 5, kind: input, shape index: {}]
  %s6 = inlined_call_operand.vmem [shape: bf16[9,49,9], index: 6, kind: input, shape index: {}]
  %s7 = inlined_call_operand.vmem [shape: bf16[8,9,32], index: 7, kind: input, shape index: {}]
  %s8 = inlined_call_operand.vmem [shape: f32[1,32], index: 8, kind: input, shape index: {}]
  %s9 = inlined_call_operand.vmem [shape: bf16[32,8], index: 9, kind: input, shape index: {}]
  %s10 = inlined_call_operand.vmem [shape: f32[1,8], index: 10, kind: input, shape index: {}]
  %s11 = inlined_call_operand.vmem [shape: bf16[32,8], index: 11, kind: input, shape index: {}]
  %s12 = inlined_call_operand.vmem [shape: f32[1,8], index: 12, kind: input, shape index: {}]
  %s13 = inlined_call_operand.hbm [shape: f32[2,1,8], index: 13, kind: output, shape index: {0}]
  %s14 = inlined_call_operand.hbm [shape: f32[2,1,8], index: 14, kind: output, shape index: {1}]
  %15 = xla_tuple %s13, %s14
  %s16 = sld [smem:[#allocation0]]
  $region93: #{ffg_conv_block_forward.1} parent=0
    _
  %s18 = ssub.s32 1, %s16
  %s19 = scalar_select 0, %s18, %s16
  $region1: #{ffg_conv_block_forward.1} parent=0
    #allocation2 [shape = 'u8[1024]{0}', space=vmem, size = 0x400, scoped, tag = 'output window, operand 0']
    #allocation3 [shape = 's32[2]{0}', space=sflag, size = 0x8, scoped, tag = 'scoped memory for ffg_conv_block_forward.1']
    #allocation4 [shape = 'u8[1024]{0}', space=vmem, size = 0x400, scoped, tag = 'output window, operand 1']
    #allocation5 [shape = 's32[2]{0}', space=sflag, size = 0x8, scoped, tag = 'scoped memory for ffg_conv_block_forward.1']
    %20 = vsyncpa [#allocation3], 0
    %s21 = scalar_lea.sflag [#allocation3], 1
    %22 = vsyncpa %s21, 0
    %23 = vsyncpa [#allocation5], 0
    %s24 = scalar_lea.sflag [#allocation5], 1
    %25 = vsyncpa %s24, 0
    loop: start=0, step=1, limit=4
    $region2: #{ffg_conv_block_forward.1} parent=1 // loop_pre_header
      _
    $region3: #{ffg_conv_block_forward.1} parent=1 // loop_header
      %s27 = sphi 0, %s31
      %p28 = scmp.ge.s32.totalorder %s27, 4
      %s37 = sphi 0, %s39
      %s40 = sphi 0, %s37
      %s41 = sphi 0, %s40
      %s57 = sphi 0, %s41
      %s61 = sphi 0, %s61
      %s63 = sphi 0, %s61
      %s64 = sphi 0, %s63
      %s78 = sphi 0, %s64
      %s82 = sphi 0, %s82
      %s84 = sphi 0, %s82
      %s85 = sphi 0, %s84
      %s99 = sphi 0, %s85
      %s103 = sphi 0, %s103
      %s105 = sphi 0, %s103
      %s106 = sphi 0, %s105
      %s120 = sphi 0, %s106
      %s124 = sphi 0, %s124
      %s126 = sphi 0, %s124
      %s127 = sphi 0, %s126
      %s141 = sphi 0, %s127
      %s145 = sphi 0, %s145
      %s147 = sphi 0, %s145
      %s148 = sphi 0, %s147
      %s162 = sphi 0, %s148
      %s166 = sphi 0, %s166
      %s168 = sphi 0, %s166
      %s169 = sphi 0, %s168
      %s183 = sphi 0, %s169
      %s187 = sphi 0, %s187
      %s189 = sphi 0, %s187
      %s190 = sphi 0, %s189
      %s204 = sphi 0, %s190
      %s208 = sphi 0, %s208
      %s210 = sphi 0, %s208
      %s211 = sphi 0, %s210
      %s225 = sphi 0, %s211
      %s229 = sphi 0, %s229
      %s231 = sphi 0, %s229
      %s232 = sphi 0, %s231
      %s246 = sphi 0, %s232
      %s250 = sphi 0, %s250
      %s252 = sphi 0, %s250
      %s253 = sphi 0, %s252
      %s267 = sphi 0, %s253
      %s271 = sphi 0, %s271
      %s273 = sphi 0, %s271
      %s274 = sphi 0, %s273
      %s288 = sphi 0, %s274
      %s292 = sphi 0, %s292
      %s294 = sphi 0, %s292
      %s295 = sphi 0, %s294
      %s309 = sphi 0, %s295
      %s315 = sphi 0, %s317
      %s318 = sphi 0, %s315
      %s319 = sphi 0, %s318
      %s335 = sphi 0, %s319
      %s341 = sphi 0, %s343
      %s344 = sphi 0, %s341
      %s345 = sphi 0, %s344
      %s361 = sphi 0, %s345
    $region4: #{ffg_conv_block_forward.1} parent=1 // loop_header_branch
      %30 = sbr.rel (%p28) target = $region8
    $region5: #{ffg_conv_block_forward.1} parent=1 // loop_body
      %s32 = ssub.s32 %s27, 1
      %s33 = ssub.s32 %s27, 2
      %s34 = sadd.s32 %s27, 1
      %s35 = ssub.s32 %s27, %s34
      %p36 = scmp.eq.s32.totalorder %s35, 0
      %s38 = sadd.s32 %s37, 1
      %s39 = scalar_select %p36, %s37, %s38
      %p42 = pneg %p36
      %p43 = scmp.eq.s32.totalorder %s27, 1
      %p44 = por %p42, %p43
      %p45 = scmp.ne.s32.totalorder %s37, %s40
      %p46 = scmp.eq.s32.totalorder %s27, 0
      %p47 = por %p45, %p46
      %p48 = scmp.ne.s32.totalorder %s37, %s40
      %p49 = scmp.eq.s32.totalorder %s32, 1
      %p50 = por %p48, %p49
      %p51 = scmp.ne.s32.totalorder %s40, %s41
      %p52 = scmp.eq.s32.totalorder %s32, 0
      %p53 = por %p51, %p52
      %p54 = scmp.ne.s32.totalorder %s40, %s41
      %p55 = scmp.eq.s32.totalorder %s33, 1
      %p56 = por %p54, %p55
      %p58 = scmp.ne.s32.totalorder %s41, %s57
      %p59 = scmp.eq.s32.totalorder %s33, 0
      %p60 = por %p58, %p59
      %s62 = sadd.s32 %s61, 1
      %p65 = scmp.eq.s32.totalorder %s27, 1
      %p66 = scmp.ne.s32.totalorder %s61, %s63
      %p67 = scmp.eq.s32.totalorder %s27, 0
      %p68 = por %p66, %p67
      %p69 = scmp.ne.s32.totalorder %s61, %s63
      %p70 = scmp.eq.s32.totalorder %s32, 1
      %p71 = por %p69, %p70
      %p72 = scmp.ne.s32.totalorder %s63, %s64
      %p73 = scmp.eq.s32.totalorder %s32, 0
      %p74 = por %p72, %p73
      %p75 = scmp.ne.s32.totalorder %s63, %s64
      %p76 = scmp.eq.s32.totalorder %s33, 1
      %p77 = por %p75, %p76
      %p79 = scmp.ne.s32.totalorder %s64, %s78
      %p80 = scmp.eq.s32.totalorder %s33, 0
      %p81 = por %p79, %p80
      %s83 = sadd.s32 %s82, 1
      %p86 = scmp.eq.s32.totalorder %s27, 1
      %p87 = scmp.ne.s32.totalorder %s82, %s84
      %p88 = scmp.eq.s32.totalorder %s27, 0
      %p89 = por %p87, %p88
      %p90 = scmp.ne.s32.totalorder %s82, %s84
      %p91 = scmp.eq.s32.totalorder %s32, 1
      %p92 = por %p90, %p91
      %p93 = scmp.ne.s32.totalorder %s84, %s85
      %p94 = scmp.eq.s32.totalorder %s32, 0
      %p95 = por %p93, %p94
      %p96 = scmp.ne.s32.totalorder %s84, %s85
      %p97 = scmp.eq.s32.totalorder %s33, 1
      %p98 = por %p96, %p97
      %p100 = scmp.ne.s32.totalorder %s85, %s99
      %p101 = scmp.eq.s32.totalorder %s33, 0
      %p102 = por %p100, %p101
      %s104 = sadd.s32 %s103, 1
      %p107 = scmp.eq.s32.totalorder %s27, 1
      %p108 = scmp.ne.s32.totalorder %s103, %s105
      %p109 = scmp.eq.s32.totalorder %s27, 0
      %p110 = por %p108, %p109
      %p111 = scmp.ne.s32.totalorder %s103, %s105
      %p112 = scmp.eq.s32.totalorder %s32, 1
      %p113 = por %p111, %p112
      %p114 = scmp.ne.s32.totalorder %s105, %s106
      %p115 = scmp.eq.s32.totalorder %s32, 0
      %p116 = por %p114, %p115
      %p117 = scmp.ne.s32.totalorder %s105, %s106
      %p118 = scmp.eq.s32.totalorder %s33, 1
      %p119 = por %p117, %p118
      %p121 = scmp.ne.s32.totalorder %s106, %s120
      %p122 = scmp.eq.s32.totalorder %s33, 0
      %p123 = por %p121, %p122
      %s125 = sadd.s32 %s124, 1
      %p128 = scmp.eq.s32.totalorder %s27, 1
      %p129 = scmp.ne.s32.totalorder %s124, %s126
      %p130 = scmp.eq.s32.totalorder %s27, 0
      %p131 = por %p129, %p130
      %p132 = scmp.ne.s32.totalorder %s124, %s126
      %p133 = scmp.eq.s32.totalorder %s32, 1
      %p134 = por %p132, %p133
      %p135 = scmp.ne.s32.totalorder %s126, %s127
      %p136 = scmp.eq.s32.totalorder %s32, 0
      %p137 = por %p135, %p136
      %p138 = scmp.ne.s32.totalorder %s126, %s127
      %p139 = scmp.eq.s32.totalorder %s33, 1
      %p140 = por %p138, %p139
      %p142 = scmp.ne.s32.totalorder %s127, %s141
      %p143 = scmp.eq.s32.totalorder %s33, 0
      %p144 = por %p142, %p143
      %s146 = sadd.s32 %s145, 1
      %p149 = scmp.eq.s32.totalorder %s27, 1
      %p150 = scmp.ne.s32.totalorder %s145, %s147
      %p151 = scmp.eq.s32.totalorder %s27, 0
      %p152 = por %p150, %p151
      %p153 = scmp.ne.s32.totalorder %s145, %s147
      %p154 = scmp.eq.s32.totalorder %s32, 1
      %p155 = por %p153, %p154
      %p156 = scmp.ne.s32.totalorder %s147, %s148
      %p157 = scmp.eq.s32.totalorder %s32, 0
      %p158 = por %p156, %p157
      %p159 = scmp.ne.s32.totalorder %s147, %s148
      %p160 = scmp.eq.s32.totalorder %s33, 1
      %p161 = por %p159, %p160
      %p163 = scmp.ne.s32.totalorder %s148, %s162
      %p164 = scmp.eq.s32.totalorder %s33, 0
      %p165 = por %p163, %p164
      %s167 = sadd.s32 %s166, 1
      %p170 = scmp.eq.s32.totalorder %s27, 1
      %p171 = scmp.ne.s32.totalorder %s166, %s168
      %p172 = scmp.eq.s32.totalorder %s27, 0
      %p173 = por %p171, %p172
      %p174 = scmp.ne.s32.totalorder %s166, %s168
      %p175 = scmp.eq.s32.totalorder %s32, 1
      %p176 = por %p174, %p175
      %p177 = scmp.ne.s32.totalorder %s168, %s169
      %p178 = scmp.eq.s32.totalorder %s32, 0
      %p179 = por %p177, %p178
      %p180 = scmp.ne.s32.totalorder %s168, %s169
      %p181 = scmp.eq.s32.totalorder %s33, 1
      %p182 = por %p180, %p181
      %p184 = scmp.ne.s32.totalorder %s169, %s183
      %p185 = scmp.eq.s32.totalorder %s33, 0
      %p186 = por %p184, %p185
      %s188 = sadd.s32 %s187, 1
      %p191 = scmp.eq.s32.totalorder %s27, 1
      %p192 = scmp.ne.s32.totalorder %s187, %s189
      %p193 = scmp.eq.s32.totalorder %s27, 0
      %p194 = por %p192, %p193
      %p195 = scmp.ne.s32.totalorder %s187, %s189
      %p196 = scmp.eq.s32.totalorder %s32, 1
      %p197 = por %p195, %p196
      %p198 = scmp.ne.s32.totalorder %s189, %s190
      %p199 = scmp.eq.s32.totalorder %s32, 0
      %p200 = por %p198, %p199
      %p201 = scmp.ne.s32.totalorder %s189, %s190
      %p202 = scmp.eq.s32.totalorder %s33, 1
      %p203 = por %p201, %p202
      %p205 = scmp.ne.s32.totalorder %s190, %s204
      %p206 = scmp.eq.s32.totalorder %s33, 0
      %p207 = por %p205, %p206
      %s209 = sadd.s32 %s208, 1
      %p212 = scmp.eq.s32.totalorder %s27, 1
      %p213 = scmp.ne.s32.totalorder %s208, %s210
      %p214 = scmp.eq.s32.totalorder %s27, 0
      %p215 = por %p213, %p214
      %p216 = scmp.ne.s32.totalorder %s208, %s210
      %p217 = scmp.eq.s32.totalorder %s32, 1
      %p218 = por %p216, %p217
      %p219 = scmp.ne.s32.totalorder %s210, %s211
      %p220 = scmp.eq.s32.totalorder %s32, 0
      %p221 = por %p219, %p220
      %p222 = scmp.ne.s32.totalorder %s210, %s211
      %p223 = scmp.eq.s32.totalorder %s33, 1
      %p224 = por %p222, %p223
      %p226 = scmp.ne.s32.totalorder %s211, %s225
      %p227 = scmp.eq.s32.totalorder %s33, 0
      %p228 = por %p226, %p227
      %s230 = sadd.s32 %s229, 1
      %p233 = scmp.eq.s32.totalorder %s27, 1
      %p234 = scmp.ne.s32.totalorder %s229, %s231
      %p235 = scmp.eq.s32.totalorder %s27, 0
      %p236 = por %p234, %p235
      %p237 = scmp.ne.s32.totalorder %s229, %s231
      %p238 = scmp.eq.s32.totalorder %s32, 1
      %p239 = por %p237, %p238
      %p240 = scmp.ne.s32.totalorder %s231, %s232
      %p241 = scmp.eq.s32.totalorder %s32, 0
      %p242 = por %p240, %p241
      %p243 = scmp.ne.s32.totalorder %s231, %s232
      %p244 = scmp.eq.s32.totalorder %s33, 1
      %p245 = por %p243, %p244
      %p247 = scmp.ne.s32.totalorder %s232, %s246
      %p248 = scmp.eq.s32.totalorder %s33, 0
      %p249 = por %p247, %p248
      %s251 = sadd.s32 %s250, 1
      %p254 = scmp.eq.s32.totalorder %s27, 1
      %p255 = scmp.ne.s32.totalorder %s250, %s252
      %p256 = scmp.eq.s32.totalorder %s27, 0
      %p257 = por %p255, %p256
      %p258 = scmp.ne.s32.totalorder %s250, %s252
      %p259 = scmp.eq.s32.totalorder %s32, 1
      %p260 = por %p258, %p259
      %p261 = scmp.ne.s32.totalorder %s252, %s253
      %p262 = scmp.eq.s32.totalorder %s32, 0
      %p263 = por %p261, %p262
      %p264 = scmp.ne.s32.totalorder %s252, %s253
      %p265 = scmp.eq.s32.totalorder %s33, 1
      %p266 = por %p264, %p265
      %p268 = scmp.ne.s32.totalorder %s253, %s267
      %p269 = scmp.eq.s32.totalorder %s33, 0
      %p270 = por %p268, %p269
      %s272 = sadd.s32 %s271, 1
      %p275 = scmp.eq.s32.totalorder %s27, 1
      %p276 = scmp.ne.s32.totalorder %s271, %s273
      %p277 = scmp.eq.s32.totalorder %s27, 0
      %p278 = por %p276, %p277
      %p279 = scmp.ne.s32.totalorder %s271, %s273
      %p280 = scmp.eq.s32.totalorder %s32, 1
      %p281 = por %p279, %p280
      %p282 = scmp.ne.s32.totalorder %s273, %s274
      %p283 = scmp.eq.s32.totalorder %s32, 0
      %p284 = por %p282, %p283
      %p285 = scmp.ne.s32.totalorder %s273, %s274
      %p286 = scmp.eq.s32.totalorder %s33, 1
      %p287 = por %p285, %p286
      %p289 = scmp.ne.s32.totalorder %s274, %s288
      %p290 = scmp.eq.s32.totalorder %s33, 0
      %p291 = por %p289, %p290
      %s293 = sadd.s32 %s292, 1
      %p296 = scmp.eq.s32.totalorder %s27, 1
      %p297 = scmp.ne.s32.totalorder %s292, %s294
      %p298 = scmp.eq.s32.totalorder %s27, 0
      %p299 = por %p297, %p298
      %p300 = scmp.ne.s32.totalorder %s292, %s294
      %p301 = scmp.eq.s32.totalorder %s32, 1
      %p302 = por %p300, %p301
      %p303 = scmp.ne.s32.totalorder %s294, %s295
      %p304 = scmp.eq.s32.totalorder %s32, 0
      %p305 = por %p303, %p304
      %p306 = scmp.ne.s32.totalorder %s294, %s295
      %p307 = scmp.eq.s32.totalorder %s33, 1
      %p308 = por %p306, %p307
      %p310 = scmp.ne.s32.totalorder %s295, %s309
      %p311 = scmp.eq.s32.totalorder %s33, 0
      %p312 = por %p310, %p311
      %s313 = ssub.s32 %s27, %s34
      %p314 = scmp.eq.s32.totalorder %s313, 0
      %s316 = sadd.s32 %s315, 1
      %s317 = scalar_select %p314, %s315, %s316
      %p320 = pneg %p314
      %p321 = scmp.eq.s32.totalorder %s27, 1
      %p322 = por %p320, %p321
      %p323 = scmp.ne.s32.totalorder %s315, %s318
      %p324 = scmp.eq.s32.totalorder %s27, 0
      %p325 = por %p323, %p324
      %p326 = scmp.ne.s32.totalorder %s315, %s318
      %p327 = scmp.eq.s32.totalorder %s32, 1
      %p328 = por %p326, %p327
      %p329 = scmp.ne.s32.totalorder %s318, %s319
      %p330 = scmp.eq.s32.totalorder %s32, 0
      %p331 = por %p329, %p330
      %p332 = scmp.ne.s32.totalorder %s318, %s319
      %p333 = scmp.eq.s32.totalorder %s33, 1
      %p334 = por %p332, %p333
      %p336 = scmp.ne.s32.totalorder %s319, %s335
      %p337 = scmp.eq.s32.totalorder %s33, 0
      %p338 = por %p336, %p337
      %s339 = ssub.s32 %s27, %s34
      %p340 = scmp.eq.s32.totalorder %s339, 0
      %s342 = sadd.s32 %s341, 1
      %s343 = scalar_select %p340, %s341, %s342
      %p346 = pneg %p340
      %p347 = scmp.eq.s32.totalorder %s27, 1
      %p348 = por %p346, %p347
      %p349 = scmp.ne.s32.totalorder %s341, %s344
      %p350 = scmp.eq.s32.totalorder %s27, 0
      %p351 = por %p349, %p350
      %p352 = scmp.ne.s32.totalorder %s341, %s344
      %p353 = scmp.eq.s32.totalorder %s32, 1
      %p354 = por %p352, %p353
      %p355 = scmp.ne.s32.totalorder %s344, %s345
      %p356 = scmp.eq.s32.totalorder %s32, 0
      %p357 = por %p355, %p356
      %p358 = scmp.ne.s32.totalorder %s344, %s345
      %p359 = scmp.eq.s32.totalorder %s33, 1
      %p360 = por %p358, %p359
      %p362 = scmp.ne.s32.totalorder %s345, %s361
      %p363 = scmp.eq.s32.totalorder %s33, 0
      %p364 = por %p362, %p363
      %p365 = scmp.le.s32.totalorder 1, %s27
      %p366 = scmp.lt.s32.totalorder %s27, 3
      %p367 = pnand %p365, %p366
      %p368 = pneg %p367
      // Predicated region
      $region9: #{ffg_conv_block_forward.1} parent=5 // pred_check
        _
      $region10: #{ffg_conv_block_forward.1} parent=5 // pred_check_branch
        %370 = sbr.rel (%p367) target = $region12
      $region11: #{ffg_conv_block_forward.1} parent=5 // pred_region
        %s371 = ssub.s32 %s27, 1
        // Predicated region
        $region13: #{ffg_conv_block_forward.1} parent=11 // pred_check
          %p372 = pneg %p74
        $region14: #{ffg_conv_block_forward.1} parent=11 // pred_check_branch
          %374 = sbr.rel (%p372) target = $region16
        $region15: #{ffg_conv_block_forward.1} parent=11 // pred_region
          _
        $region16: #{ffg_conv_block_forward.1} parent=11 // pred_fallthru
          _
        // Predicated region
        $region17: #{ffg_conv_block_forward.1} parent=11 // pred_check
          %p375 = pneg %p95
        $region18: #{ffg_conv_block_forward.1} parent=11 // pred_check_branch
          %377 = sbr.rel (%p375) target = $region20
        $region19: #{ffg_conv_block_forward.1} parent=11 // pred_region
          _
        $region20: #{ffg_conv_block_forward.1} parent=11 // pred_fallthru
          _
        // Predicated region
        $region21: #{ffg_conv_block_forward.1} parent=11 // pred_check
          %p378 = pneg %p116
        $region22: #{ffg_conv_block_forward.1} parent=11 // pred_check_branch
          %380 = sbr.rel (%p378) target = $region24
        $region23: #{ffg_conv_block_forward.1} parent=11 // pred_region
          _
        $region24: #{ffg_conv_block_forward.1} parent=11 // pred_fallthru
          _
        // Predicated region
        $region25: #{ffg_conv_block_forward.1} parent=11 // pred_check
          %p381 = pneg %p137
        $region26: #{ffg_conv_block_forward.1} parent=11 // pred_check_branch
          %383 = sbr.rel (%p381) target = $region28
        $region27: #{ffg_conv_block_forward.1} parent=11 // pred_region
          _
        $region28: #{ffg_conv_block_forward.1} parent=11 // pred_fallthru
          _
        // Predicated region
        $region29: #{ffg_conv_block_forward.1} parent=11 // pred_check
          %p384 = pneg %p158
        $region30: #{ffg_conv_block_forward.1} parent=11 // pred_check_branch
          %386 = sbr.rel (%p384) target = $region32
        $region31: #{ffg_conv_block_forward.1} parent=11 // pred_region
          _
        $region32: #{ffg_conv_block_forward.1} parent=11 // pred_fallthru
          _
        // Predicated region
        $region33: #{ffg_conv_block_forward.1} parent=11 // pred_check
          %p387 = pneg %p179
        $region34: #{ffg_conv_block_forward.1} parent=11 // pred_check_branch
          %389 = sbr.rel (%p387) target = $region36
        $region35: #{ffg_conv_block_forward.1} parent=11 // pred_region
          _
        $region36: #{ffg_conv_block_forward.1} parent=11 // pred_fallthru
          _
        // Predicated region
        $region37: #{ffg_conv_block_forward.1} parent=11 // pred_check
          %p390 = pneg %p200
        $region38: #{ffg_conv_block_forward.1} parent=11 // pred_check_branch
          %392 = sbr.rel (%p390) target = $region40
        $region39: #{ffg_conv_block_forward.1} parent=11 // pred_region
          _
        $region40: #{ffg_conv_block_forward.1} parent=11 // pred_fallthru
          _
        // Predicated region
        $region41: #{ffg_conv_block_forward.1} parent=11 // pred_check
          %p393 = pneg %p221
        $region42: #{ffg_conv_block_forward.1} parent=11 // pred_check_branch
          %395 = sbr.rel (%p393) target = $region44
        $region43: #{ffg_conv_block_forward.1} parent=11 // pred_region
          _
        $region44: #{ffg_conv_block_forward.1} parent=11 // pred_fallthru
          _
        // Predicated region
        $region45: #{ffg_conv_block_forward.1} parent=11 // pred_check
          %p396 = pneg %p242
        $region46: #{ffg_conv_block_forward.1} parent=11 // pred_check_branch
          %398 = sbr.rel (%p396) target = $region48
        $region47: #{ffg_conv_block_forward.1} parent=11 // pred_region
          _
        $region48: #{ffg_conv_block_forward.1} parent=11 // pred_fallthru
          _
        // Predicated region
        $region49: #{ffg_conv_block_forward.1} parent=11 // pred_check
          %p399 = pneg %p263
        $region50: #{ffg_conv_block_forward.1} parent=11 // pred_check_branch
          %401 = sbr.rel (%p399) target = $region52
        $region51: #{ffg_conv_block_forward.1} parent=11 // pred_region
          _
        $region52: #{ffg_conv_block_forward.1} parent=11 // pred_fallthru
          _
        // Predicated region
        $region53: #{ffg_conv_block_forward.1} parent=11 // pred_check
          %p402 = pneg %p284
        $region54: #{ffg_conv_block_forward.1} parent=11 // pred_check_branch
          %404 = sbr.rel (%p402) target = $region56
        $region55: #{ffg_conv_block_forward.1} parent=11 // pred_region
          _
        $region56: #{ffg_conv_block_forward.1} parent=11 // pred_fallthru
          _
        // Predicated region
        $region57: #{ffg_conv_block_forward.1} parent=11 // pred_check
          %p405 = pneg %p305
        $region58: #{ffg_conv_block_forward.1} parent=11 // pred_check_branch
          %407 = sbr.rel (%p405) target = $region60
        $region59: #{ffg_conv_block_forward.1} parent=11 // pred_region
          _
        $region60: #{ffg_conv_block_forward.1} parent=11 // pred_fallthru
          _
      $region12: #{ffg_conv_block_forward.1} parent=5 // pred_fallthru
        _
      %p408 = scmp.lt.s32.totalorder %s27, 2
      // Predicated region
      $region61: #{ffg_conv_block_forward.1} parent=5 // pred_check
        %p409 = pneg %p408
      $region62: #{ffg_conv_block_forward.1} parent=5 // pred_check_branch
        %411 = sbr.rel (%p409) target = $region64
      $region63: #{ffg_conv_block_forward.1} parent=5 // pred_region
        // Predicated region
        $region65: #{ffg_conv_block_forward.1} parent=63 // pred_check
          %p412 = pneg %p47
        $region66: #{ffg_conv_block_forward.1} parent=63 // pred_check_branch
          %414 = sbr.rel (%p412) target = $region68
        $region67: #{ffg_conv_block_forward.1} parent=63 // pred_region
          %p415 = scmp.lt.s32.totalorder %s27, 1
          %s416 = scalar_select %p415, %s27, 1
          %s417 = smul.addr %s416, 2
          %s418 = smul.addr %s417, 2
          %s419 = scalar_lea.vmem %s0, %s418
        $region68: #{ffg_conv_block_forward.1} parent=63 // pred_fallthru
          _
      $region64: #{ffg_conv_block_forward.1} parent=5 // pred_fallthru
        _
      %p420 = scmp.le.s32.totalorder 1, %s27
      %p421 = scmp.lt.s32.totalorder %s27, 3
      %p422 = pnand %p420, %p421
      %p423 = pneg %p422
      // Predicated region
      $region69: #{ffg_conv_block_forward.1} parent=5 // pred_check
        _
      $region70: #{ffg_conv_block_forward.1} parent=5 // pred_check_branch
        %425 = sbr.rel (%p422) target = $region72
      $region71: #{ffg_conv_block_forward.1} parent=5 // pred_region
        %s426 = ssub.s32 %s27, 1
        %p427 = scmp.lt.s32.totalorder %s32, 1
        %s428 = scalar_select %p427, %s32, 1
        %s429 = smul.addr %s428, 2
        %s430 = smul.addr %s429, 2
        %s431 = scalar_lea.vmem %s0, %s430
        %p432 = pneg %p53
        %p433 = pneg %p50
        %p434 = pneg %p74
        %p435 = pneg %p71
        %p436 = pneg %p95
        %p437 = pneg %p92
        %p438 = pneg %p116
        %p439 = pneg %p113
        %p440 = pneg %p137
        %p441 = pneg %p134
        %p442 = pneg %p158
        %p443 = pneg %p155
        %p444 = pneg %p179
        %p445 = pneg %p176
        %p446 = pneg %p200
        %p447 = pneg %p197
        %p448 = pneg %p221
        %p449 = pneg %p218
        %p450 = pneg %p242
        %p451 = pneg %p239
        %p452 = pneg %p263
        %p453 = pneg %p260
        %p454 = pneg %p284
        %p455 = pneg %p281
        %p456 = pneg %p305
        %p457 = pneg %p302
        %p458 = pneg %p331
        %p459 = pneg %p328
        %s460 = sand.u32 %s318, 1
        %s461 = scalar_lea.sflag [#allocation3], %s460
        %s462 = sand.u32 %s318, 1
        %s463 = scalar_lea.vmem [#allocation2], %s462
        %p464 = pneg %p357
        %p465 = pneg %p354
        %s466 = sand.u32 %s344, 1
        %s467 = scalar_lea.sflag [#allocation5], %s466
        %s468 = sand.u32 %s344, 1
        %s469 = scalar_lea.vmem [#allocation4], %s468
        %p470 = scmp.lt.s32.totalorder %s32, 1
        %s471 = scalar_select %p470, %s32, 1
        %s472 = smul.addr %s471, 2
        %s473 = smul.addr %s472, 2
        %s474 = scalar_lea.vmem %s0, %s473
        %v476 = vld [vmem:[%s474] sm:$0xf]
        %v477 = vld [vmem:[%s3] sm:$0xf]
        %v478 = vld [vmem:[%s3 + $0x4] sm:$0xf]
        %v479 = vld [vmem:[%s3 + $0x8] sm:$0xf]
        %v480 = vld [vmem:[%s3 + $0xc] sm:$0xf]
        %v481 = vld [vmem:[%s3 + $0x10] sm:$0xf]
        %v482 = vld [vmem:[%s3 + $0x14] sm:$0xf]
        %v483 = vld [vmem:[%s3 + $0x18] sm:$0xf]
        %v484 = vld [vmem:[%s3 + $0x1c] sm:$0xf]
        %v485 = vld [vmem:[%s3 + $0x20] sm:$0xf]
        %v486 = vld [vmem:[%s3 + $0x24] sm:$0xf]
        %v487 = vld [vmem:[%s3 + $0x28] sm:$0xf]
        %v488 = vld [vmem:[%s3 + $0x2c] sm:$0xf]
        %v489 = vld [vmem:[%s3 + $0x30] sm:$0xf]
        %v490 = vld [vmem:[%s3 + $0x34] sm:$0xf]
        %v491 = vld [vmem:[%s3 + $0x38] sm:$0xf]
        %v492 = vld [vmem:[%s3 + $0x3c] sm:$0xf]
        %v493 = vld [vmem:[%s3 + $0x40] sm:$0xf]
        %v494 = vld [vmem:[%s3 + $0x44] sm:$0xf]
        %v495 = vld [vmem:[%s3 + $0x48] sm:$0xf]
        %v496 = vld [vmem:[%s3 + $0x4c] sm:$0xf]
        %v497 = vld [vmem:[%s3 + $0x50] sm:$0xf]
        %v498 = vld [vmem:[%s3 + $0x54] sm:$0xf]
        %v499 = vld [vmem:[%s3 + $0x58] sm:$0xf]
        %v500 = vld [vmem:[%s3 + $0x5c] sm:$0xf]
        %v501 = vld [vmem:[%s3 + $0x60] sm:$0xf]
        %v502 = vld [vmem:[%s3 + $0x64] sm:$0xf]
        %v503 = vld [vmem:[%s3 + $0x68] sm:$0xf]
        %v504 = vld [vmem:[%s3 + $0x6c] sm:$0xf]
        %v505 = vld [vmem:[%s3 + $0x70] sm:$0xf]
        %v506 = vld [vmem:[%s3 + $0x74] sm:$0xf]
        %v507 = vld [vmem:[%s3 + $0x78] sm:$0xf]
        %v508 = vld [vmem:[%s3 + $0x7c] sm:$0xf]
        %v511 = vunpack.c.l.s4 1983009808
        %v512 = vunpack.c.0.s8 %v511
        %v513 = vlaneseq
        %v514 = vshrl.u32 %v513, 7
        %v515 = vsub.s32 %v512, %v514
        %v516 = vrot.slane %v476, %v515
        %v517 = vcombine.high %v516, %v516
        %v552 = vunpack.c.l.b16 %v477
        %v553 = vunpack.c.l.b16 %v478
        %v554 = vunpack.c.l.b16 %v479
        %v555 = vunpack.c.l.b16 %v480
        %v556 = vunpack.c.l.b16 %v481
        %v557 = vunpack.c.l.b16 %v482
        %v558 = vunpack.c.l.b16 %v483
        %v559 = vunpack.c.l.b16 %v484
        %v560 = vunpack.c.l.b16 %v485
        %v561 = vunpack.c.l.b16 %v486
        %v562 = vunpack.c.l.b16 %v487
        %v563 = vunpack.c.l.b16 %v488
        %v564 = vunpack.c.l.b16 %v489
        %v565 = vunpack.c.l.b16 %v490
        %v566 = vunpack.c.l.b16 %v491
        %v567 = vunpack.c.l.b16 %v492
        %v568 = vunpack.c.l.b16 %v493
        %v569 = vunpack.c.l.b16 %v494
        %v570 = vunpack.c.l.b16 %v495
        %v571 = vunpack.c.l.b16 %v496
        %v572 = vunpack.c.l.b16 %v497
        %v573 = vunpack.c.l.b16 %v498
        %v574 = vunpack.c.l.b16 %v499
        %v575 = vunpack.c.l.b16 %v500
        %v576 = vunpack.c.l.b16 %v501
        %v577 = vunpack.c.l.b16 %v502
        %v578 = vunpack.c.l.b16 %v503
        %v579 = vunpack.c.l.b16 %v504
        %v580 = vunpack.c.l.b16 %v505
        %v581 = vunpack.c.l.b16 %v506
        %v582 = vunpack.c.l.b16 %v507
        %v583 = vunpack.c.l.b16 %v508
        %v584 = vpack.c.b16 %v553, %v552
        %v585 = vpack.c.b16 %v555, %v554
        %v586 = vpack.c.b16 %v557, %v556
        %v587 = vpack.c.b16 %v559, %v558
        %v588 = vpack.c.b16 %v561, %v560
        %v589 = vpack.c.b16 %v563, %v562
        %v590 = vpack.c.b16 %v565, %v564
        %v591 = vpack.c.b16 %v567, %v566
        %v592 = vpack.c.b16 %v569, %v568
        %v593 = vpack.c.b16 %v571, %v570
        %v594 = vpack.c.b16 %v573, %v572
        %v595 = vpack.c.b16 %v575, %v574
        %v596 = vpack.c.b16 %v577, %v576
        %v597 = vpack.c.b16 %v579, %v578
        %v598 = vpack.c.b16 %v581, %v580
        %v599 = vpack.c.b16 %v583, %v582
        %616 = vmatprep.subr.bf16.mxu0 0
        %617 = vmatpush1.bf16.msra.mxu0 %v584
        %618 = vmatprep.subr.bf16.mxu0 0
        %619 = vmatpush1.bf16.msra.mxu0 %v585
        %620 = vmatprep.subr.bf16.mxu0 0
        %621 = vmatpush1.bf16.msra.mxu0 %v586
        %622 = vmatprep.subr.bf16.mxu0 0
        %623 = vmatpush1.bf16.msra.mxu0 %v587
        %624 = vmatprep.subr.bf16.mxu0 0
        %625 = vmatpush1.bf16.msra.mxu0 %v588
        %626 = vmatprep.subr.bf16.mxu0 0
        %627 = vmatpush1.bf16.msra.mxu0 %v589
        %628 = vmatprep.subr.bf16.mxu0 0
        %629 = vmatpush1.bf16.msra.mxu0 %v590
        %630 = vmatprep.subr.bf16.mxu0 0
        %631 = vmatpush1.bf16.msra.mxu0 %v591
        %632 = vmatprep.subr.bf16.mxu0 0
        %633 = vmatpush1.bf16.msra.mxu0 %v592
        %634 = vmatprep.subr.bf16.mxu0 0
        %635 = vmatpush1.bf16.msra.mxu0 %v593
        %636 = vmatprep.subr.bf16.mxu0 0
        %637 = vmatpush1.bf16.msra.mxu0 %v594
        %638 = vmatprep.subr.bf16.mxu0 0
        %639 = vmatpush1.bf16.msra.mxu0 %v595
        %640 = vmatprep.subr.bf16.mxu0 0
        %641 = vmatpush1.bf16.msra.mxu0 %v596
        %642 = vmatprep.subr.bf16.mxu0 0
        %643 = vmatpush1.bf16.msra.mxu0 %v597
        %644 = vmatprep.subr.bf16.mxu0 0
        %645 = vmatpush1.bf16.msra.mxu0 %v598
        %646 = vmatprep.subr.bf16.mxu0 0
        %647 = vmatpush1.bf16.msra.mxu0 %v599
        %648 = vmatprep.mubr.bf16.mxu0 %v517
        %649 = vmatmul.mubr.bf16.gmra.mrb[0].mxu0 %v516
        %v650 = vpop.f32.mrb[0].mxu0
        %v651 = vadd.f32 0.0, %v650
        %v652 = vpop.f32.mrb[0].mxu0
        %v653 = vpop.f32.mrb[0].mxu0
        %v654 = vpop.f32.mrb[0].mxu0
        %655 = vdwg.mxu0
        %v656 = vpack.c.bf16 %v651, %v651
        %v657 = vld [vmem:[%s1] sm:$0x3]
        %s658 = scalar_lea.vmem %s3, 128
        %v659 = vld [vmem:[%s658] sm:$0xf]
        %v660 = vld [vmem:[%s658 + $0x4] sm:$0xf]
        %v661 = vld [vmem:[%s658 + $0x8] sm:$0xf]
        %v662 = vld [vmem:[%s658 + $0xc] sm:$0xf]
        %v663 = vld [vmem:[%s658 + $0x10] sm:$0xf]
        %v664 = vld [vmem:[%s658 + $0x14] sm:$0xf]
        %v665 = vld [vmem:[%s658 + $0x18] sm:$0xf]
        %v666 = vld [vmem:[%s658 + $0x1c] sm:$0xf]
        %v667 = vld [vmem:[%s658 + $0x20] sm:$0xf]
        %v668 = vld [vmem:[%s658 + $0x24] sm:$0xf]
        %v669 = vld [vmem:[%s658 + $0x28] sm:$0xf]
        %v670 = vld [vmem:[%s658 + $0x2c] sm:$0xf]
        %v671 = vld [vmem:[%s658 + $0x30] sm:$0xf]
        %v672 = vld [vmem:[%s658 + $0x34] sm:$0xf]
        %v673 = vld [vmem:[%s658 + $0x38] sm:$0xf]
        %v674 = vld [vmem:[%s658 + $0x3c] sm:$0xf]
        %v675 = vld [vmem:[%s658 + $0x40] sm:$0xf]
        %v676 = vld [vmem:[%s658 + $0x44] sm:$0xf]
        %v677 = vld [vmem:[%s658 + $0x48] sm:$0xf]
        %v678 = vld [vmem:[%s658 + $0x4c] sm:$0xf]
        %v679 = vld [vmem:[%s658 + $0x50] sm:$0xf]
        %v680 = vld [vmem:[%s658 + $0x54] sm:$0xf]
        %v681 = vld [vmem:[%s658 + $0x58] sm:$0xf]
        %v682 = vld [vmem:[%s658 + $0x5c] sm:$0xf]
        %v683 = vld [vmem:[%s658 + $0x60] sm:$0xf]
        %v684 = vld [vmem:[%s658 + $0x64] sm:$0xf]
        %v685 = vld [vmem:[%s658 + $0x68] sm:$0xf]
        %v686 = vld [vmem:[%s658 + $0x6c] sm:$0xf]
        %v687 = vld [vmem:[%s658 + $0x70] sm:$0xf]
        %v688 = vld [vmem:[%s658 + $0x74] sm:$0xf]
        %v689 = vld [vmem:[%s658 + $0x78] sm:$0xf]
        %v690 = vld [vmem:[%s658 + $0x7c] sm:$0xf]
        %v723 = vunpack.c.l.b16 %v659
        %v724 = vunpack.c.l.b16 %v660
        %v725 = vunpack.c.l.b16 %v661
        %v726 = vunpack.c.l.b16 %v662
        %v727 = vunpack.c.l.b16 %v663
        %v728 = vunpack.c.l.b16 %v664
        %v729 = vunpack.c.l.b16 %v665
        %v730 = vunpack.c.l.b16 %v666
        %v731 = vunpack.c.l.b16 %v667
        %v732 = vunpack.c.l.b16 %v668
        %v733 = vunpack.c.l.b16 %v669
        %v734 = vunpack.c.l.b16 %v670
        %v735 = vunpack.c.l.b16 %v671
        %v736 = vunpack.c.l.b16 %v672
        %v737 = vunpack.c.l.b16 %v673
        %v738 = vunpack.c.l.b16 %v674
        %v739 = vunpack.c.l.b16 %v675
        %v740 = vunpack.c.l.b16 %v676
        %v741 = vunpack.c.l.b16 %v677
        %v742 = vunpack.c.l.b16 %v678
        %v743 = vunpack.c.l.b16 %v679
        %v744 = vunpack.c.l.b16 %v680
        %v745 = vunpack.c.l.b16 %v681
        %v746 = vunpack.c.l.b16 %v682
        %v747 = vunpack.c.l.b16 %v683
        %v748 = vunpack.c.l.b16 %v684
        %v749 = vunpack.c.l.b16 %v685
        %v750 = vunpack.c.l.b16 %v686
        %v751 = vunpack.c.l.b16 %v687
        %v752 = vunpack.c.l.b16 %v688
        %v753 = vunpack.c.l.b16 %v689
        %v754 = vunpack.c.l.b16 %v690
        %v755 = vpack.c.b16 %v724, %v723
        %v756 = vpack.c.b16 %v726, %v725
        %v757 = vpack.c.b16 %v728, %v727
        %v758 = vpack.c.b16 %v730, %v729
        %v759 = vpack.c.b16 %v732, %v731
        %v760 = vpack.c.b16 %v734, %v733
        %v761 = vpack.c.b16 %v736, %v735
        %v762 = vpack.c.b16 %v738, %v737
        %v763 = vpack.c.b16 %v740, %v739
        %v764 = vpack.c.b16 %v742, %v741
        %v765 = vpack.c.b16 %v744, %v743
        %v766 = vpack.c.b16 %v746, %v745
        %v767 = vpack.c.b16 %v748, %v747
        %v768 = vpack.c.b16 %v750, %v749
        %v769 = vpack.c.b16 %v752, %v751
        %v770 = vpack.c.b16 %v754, %v753
        %787 = vmatprep.subr.bf16.mxu0 0
        %788 = vmatpush1.bf16.msra.mxu0 %v755
        %789 = vmatprep.subr.bf16.mxu0 0
        %790 = vmatpush1.bf16.msra.mxu0 %v756
        %791 = vmatprep.subr.bf16.mxu0 0
        %792 = vmatpush1.bf16.msra.mxu0 %v757
        %793 = vmatprep.subr.bf16.mxu0 0
        %794 = vmatpush1.bf16.msra.mxu0 %v758
        %795 = vmatprep.subr.bf16.mxu0 0
        %796 = vmatpush1.bf16.msra.mxu0 %v759
        %797 = vmatprep.subr.bf16.mxu0 0
        %798 = vmatpush1.bf16.msra.mxu0 %v760
        %799 = vmatprep.subr.bf16.mxu0 0
        %800 = vmatpush1.bf16.msra.mxu0 %v761
        %801 = vmatprep.subr.bf16.mxu0 0
        %802 = vmatpush1.bf16.msra.mxu0 %v762
        %803 = vmatprep.subr.bf16.mxu0 0
        %804 = vmatpush1.bf16.msra.mxu0 %v763
        %805 = vmatprep.subr.bf16.mxu0 0
        %806 = vmatpush1.bf16.msra.mxu0 %v764
        %807 = vmatprep.subr.bf16.mxu0 0
        %808 = vmatpush1.bf16.msra.mxu0 %v765
        %809 = vmatprep.subr.bf16.mxu0 0
        %810 = vmatpush1.bf16.msra.mxu0 %v766
        %811 = vmatprep.subr.bf16.mxu0 0
        %812 = vmatpush1.bf16.msra.mxu0 %v767
        %813 = vmatprep.subr.bf16.mxu0 0
        %814 = vmatpush1.bf16.msra.mxu0 %v768
        %815 = vmatprep.subr.bf16.mxu0 0
        %816 = vmatpush1.bf16.msra.mxu0 %v769
        %817 = vmatprep.subr.bf16.mxu0 0
        %818 = vmatpush1.bf16.msra.mxu0 %v770
        %819 = vmatprep.mubr.bf16.mxu0 %v517
        %820 = vmatmul.mubr.bf16.gmra.mrb[0].mxu0 %v516
        %v821 = vpop.f32.mrb[0].mxu0
        %v822 = vadd.f32 0.0, %v821
        %v823 = vpop.f32.mrb[0].mxu0
        %v824 = vpop.f32.mrb[0].mxu0
        %v825 = vpop.f32.mrb[0].mxu0
        %826 = vdwg.mxu0
        %v827 = vpack.c.bf16 %v822, %v822
        %s828 = scalar_lea.vmem %s1, 2
        %v829 = vld [vmem:[%s828] sm:$0x3]
        %vm830 = vcmask 23552
        %v832 = vsel %vm830, %v829, 0
        %vm834 = vcmask 1040384
        %vm835 = vcmask 1041408
        %v836 = vsel %vm834, 4294967295, 65535
        %v837 = vsel %vm835, %v836, 0
        %v839 = vand.u32 %v827, %v837
        %841 = vmatprep.subr.bf16.mxu0 0
        %842 = vmatpush1.bf16.msra.mxu0 %v839
        %843 = vmatprep.subr.bf16.mxu0 0
        %844 = vmatpush1.bf16.msra.mxu0 0
        %845 = vmatprep.subr.bf16.mxu0 0
        %846 = vmatpush1.bf16.msra.mxu0 0
        %847 = vmatprep.subr.bf16.mxu0 0
        %848 = vmatpush1.bf16.msra.mxu0 0
        %849 = vmatprep.subr.bf16.mxu0 0
        %850 = vmatpush1.bf16.msra.mxu0 0
        %851 = vmatprep.subr.bf16.mxu0 0
        %852 = vmatpush1.bf16.msra.mxu0 0
        %853 = vmatprep.subr.bf16.mxu0 0
        %854 = vmatpush1.bf16.msra.mxu0 0
        %855 = vmatprep.subr.bf16.mxu0 0
        %856 = vmatpush1.bf16.msra.mxu0 0
        %857 = vmatprep.subr.bf16.mxu0 0
        %858 = vmatpush1.bf16.msra.mxu0 0
        %859 = vmatprep.subr.bf16.mxu0 0
        %860 = vmatpush1.bf16.msra.mxu0 0
        %861 = vmatprep.subr.bf16.mxu0 0
        %862 = vmatpush1.bf16.msra.mxu0 0
        %863 = vmatprep.subr.bf16.mxu0 0
        %864 = vmatpush1.bf16.msra.mxu0 0
        %865 = vmatprep.subr.bf16.mxu0 0
        %866 = vmatpush1.bf16.msra.mxu0 0
        %867 = vmatprep.subr.bf16.mxu0 0
        %868 = vmatpush1.bf16.msra.mxu0 0
        %869 = vmatprep.subr.bf16.mxu0 0
        %870 = vmatpush1.bf16.msra.mxu0 0
        %871 = vmatprep.subr.bf16.mxu0 0
        %872 = vmatpush1.bf16.msra.mxu0 0
        %873 = vmatprep.mubr.bf16.mxu0 0
        %874 = vmatmul.mubr.bf16.gmra.mrb[0].mxu0 %v832
        %v875 = vpop.f32.mrb[0].mxu0
        %v876 = vadd.f32 0.0, %v875
        %v877 = vpop.f32.mrb[0].mxu0
        %v878 = vpop.f32.mrb[0].mxu0
        %v879 = vpop.f32.mrb[0].mxu0
        %880 = vdwg.mxu0
        %v882 = vsel %vm830, %v657, 0
        %v885 = vand.u32 %v656, %v837
        %887 = vmatprep.subr.bf16.mxu0 0
        %888 = vmatpush1.bf16.msra.mxu0 %v885
        %889 = vmatprep.subr.bf16.mxu0 0
        %890 = vmatpush1.bf16.msra.mxu0 0
        %891 = vmatprep.subr.bf16.mxu0 0
        %892 = vmatpush1.bf16.msra.mxu0 0
        %893 = vmatprep.subr.bf16.mxu0 0
        %894 = vmatpush1.bf16.msra.mxu0 0
        %895 = vmatprep.subr.bf16.mxu0 0
        %896 = vmatpush1.bf16.msra.mxu0 0
        %897 = vmatprep.subr.bf16.mxu0 0
        %898 = vmatpush1.bf16.msra.mxu0 0
        %899 = vmatprep.subr.bf16.mxu0 0
        %900 = vmatpush1.bf16.msra.mxu0 0
        %901 = vmatprep.subr.bf16.mxu0 0
        %902 = vmatpush1.bf16.msra.mxu0 0
        %903 = vmatprep.subr.bf16.mxu0 0
        %904 = vmatpush1.bf16.msra.mxu0 0
        %905 = vmatprep.subr.bf16.mxu0 0
        %906 = vmatpush1.bf16.msra.mxu0 0
        %907 = vmatprep.subr.bf16.mxu0 0
        %908 = vmatpush1.bf16.msra.mxu0 0
        %909 = vmatprep.subr.bf16.mxu0 0
        %910 = vmatpush1.bf16.msra.mxu0 0
        %911 = vmatprep.subr.bf16.mxu0 0
        %912 = vmatpush1.bf16.msra.mxu0 0
        %913 = vmatprep.subr.bf16.mxu0 0
        %914 = vmatpush1.bf16.msra.mxu0 0
        %915 = vmatprep.subr.bf16.mxu0 0
        %916 = vmatpush1.bf16.msra.mxu0 0
        %917 = vmatprep.subr.bf16.mxu0 0
        %918 = vmatpush1.bf16.msra.mxu0 0
        %919 = vmatprep.mubr.bf16.mxu0 0
        %920 = vmatmul.mubr.bf16.gmra.mrb[0].mxu0 %v882
        %v921 = vpop.f32.mrb[0].mxu0
        %v922 = vadd.f32 %v876, %v921
        %v923 = vpop.f32.mrb[0].mxu0
        %v924 = vpop.f32.mrb[0].mxu0
        %v925 = vpop.f32.mrb[0].mxu0
        %926 = vdwg.mxu0
        %s927 = scalar_lea.vmem %s3, 256
        %v928 = vld [vmem:[%s927] sm:$0xf]
        %v929 = vld [vmem:[%s927 + $0x4] sm:$0xf]
        %v930 = vld [vmem:[%s927 + $0x8] sm:$0xf]
        %v931 = vld [vmem:[%s927 + $0xc] sm:$0xf]
        %v932 = vld [vmem:[%s927 + $0x10] sm:$0xf]
        %v933 = vld [vmem:[%s927 + $0x14] sm:$0xf]
        %v934 = vld [vmem:[%s927 + $0x18] sm:$0xf]
        %v935 = vld [vmem:[%s927 + $0x1c] sm:$0xf]
        %v936 = vld [vmem:[%s927 + $0x20] sm:$0xf]
        %v937 = vld [vmem:[%s927 + $0x24] sm:$0xf]
        %v938 = vld [vmem:[%s927 + $0x28] sm:$0xf]
        %v939 = vld [vmem:[%s927 + $0x2c] sm:$0xf]
        %v940 = vld [vmem:[%s927 + $0x30] sm:$0xf]
        %v941 = vld [vmem:[%s927 + $0x34] sm:$0xf]
        %v942 = vld [vmem:[%s927 + $0x38] sm:$0xf]
        %v943 = vld [vmem:[%s927 + $0x3c] sm:$0xf]
        %v944 = vld [vmem:[%s927 + $0x40] sm:$0xf]
        %v945 = vld [vmem:[%s927 + $0x44] sm:$0xf]
        %v946 = vld [vmem:[%s927 + $0x48] sm:$0xf]
        %v947 = vld [vmem:[%s927 + $0x4c] sm:$0xf]
        %v948 = vld [vmem:[%s927 + $0x50] sm:$0xf]
        %v949 = vld [vmem:[%s927 + $0x54] sm:$0xf]
        %v950 = vld [vmem:[%s927 + $0x58] sm:$0xf]
        %v951 = vld [vmem:[%s927 + $0x5c] sm:$0xf]
        %v952 = vld [vmem:[%s927 + $0x60] sm:$0xf]
        %v953 = vld [vmem:[%s927 + $0x64] sm:$0xf]
        %v954 = vld [vmem:[%s927 + $0x68] sm:$0xf]
        %v955 = vld [vmem:[%s927 + $0x6c] sm:$0xf]
        %v956 = vld [vmem:[%s927 + $0x70] sm:$0xf]
        %v957 = vld [vmem:[%s927 + $0x74] sm:$0xf]
        %v958 = vld [vmem:[%s927 + $0x78] sm:$0xf]
        %v959 = vld [vmem:[%s927 + $0x7c] sm:$0xf]
        %v992 = vunpack.c.l.b16 %v928
        %v993 = vunpack.c.l.b16 %v929
        %v994 = vunpack.c.l.b16 %v930
        %v995 = vunpack.c.l.b16 %v931
        %v996 = vunpack.c.l.b16 %v932
        %v997 = vunpack.c.l.b16 %v933
        %v998 = vunpack.c.l.b16 %v934
        %v999 = vunpack.c.l.b16 %v935
        %v1000 = vunpack.c.l.b16 %v936
        %v1001 = vunpack.c.l.b16 %v937
        %v1002 = vunpack.c.l.b16 %v938
        %v1003 = vunpack.c.l.b16 %v939
        %v1004 = vunpack.c.l.b16 %v940
        %v1005 = vunpack.c.l.b16 %v941
        %v1006 = vunpack.c.l.b16 %v942
        %v1007 = vunpack.c.l.b16 %v943
        %v1008 = vunpack.c.l.b16 %v944
        %v1009 = vunpack.c.l.b16 %v945
        %v1010 = vunpack.c.l.b16 %v946
        %v1011 = vunpack.c.l.b16 %v947
        %v1012 = vunpack.c.l.b16 %v948
        %v1013 = vunpack.c.l.b16 %v949
        %v1014 = vunpack.c.l.b16 %v950
        %v1015 = vunpack.c.l.b16 %v951
        %v1016 = vunpack.c.l.b16 %v952
        %v1017 = vunpack.c.l.b16 %v953
        %v1018 = vunpack.c.l.b16 %v954
        %v1019 = vunpack.c.l.b16 %v955
        %v1020 = vunpack.c.l.b16 %v956
        %v1021 = vunpack.c.l.b16 %v957
        %v1022 = vunpack.c.l.b16 %v958
        %v1023 = vunpack.c.l.b16 %v959
        %v1024 = vpack.c.b16 %v993, %v992
        %v1025 = vpack.c.b16 %v995, %v994
        %v1026 = vpack.c.b16 %v997, %v996
        %v1027 = vpack.c.b16 %v999, %v998
        %v1028 = vpack.c.b16 %v1001, %v1000
        %v1029 = vpack.c.b16 %v1003, %v1002
        %v1030 = vpack.c.b16 %v1005, %v1004
        %v1031 = vpack.c.b16 %v1007, %v1006
        %v1032 = vpack.c.b16 %v1009, %v1008
        %v1033 = vpack.c.b16 %v1011, %v1010
        %v1034 = vpack.c.b16 %v1013, %v1012
        %v1035 = vpack.c.b16 %v1015, %v1014
        %v1036 = vpack.c.b16 %v1017, %v1016
        %v1037 = vpack.c.b16 %v1019, %v1018
        %v1038 = vpack.c.b16 %v1021, %v1020
        %v1039 = vpack.c.b16 %v1023, %v1022
        %1056 = vmatprep.subr.bf16.mxu0 0
        %1057 = vmatpush1.bf16.msra.mxu0 %v1024
        %1058 = vmatprep.subr.bf16.mxu0 0
        %1059 = vmatpush1.bf16.msra.mxu0 %v1025
        %1060 = vmatprep.subr.bf16.mxu0 0
        %1061 = vmatpush1.bf16.msra.mxu0 %v1026
        %1062 = vmatprep.subr.bf16.mxu0 0
        %1063 = vmatpush1.bf16.msra.mxu0 %v1027
        %1064 = vmatprep.subr.bf16.mxu0 0
        %1065 = vmatpush1.bf16.msra.mxu0 %v1028
        %1066 = vmatprep.subr.bf16.mxu0 0
        %1067 = vmatpush1.bf16.msra.mxu0 %v1029
        %1068 = vmatprep.subr.bf16.mxu0 0
        %1069 = vmatpush1.bf16.msra.mxu0 %v1030
        %1070 = vmatprep.subr.bf16.mxu0 0
        %1071 = vmatpush1.bf16.msra.mxu0 %v1031
        %1072 = vmatprep.subr.bf16.mxu0 0
        %1073 = vmatpush1.bf16.msra.mxu0 %v1032
        %1074 = vmatprep.subr.bf16.mxu0 0
        %1075 = vmatpush1.bf16.msra.mxu0 %v1033
        %1076 = vmatprep.subr.bf16.mxu0 0
        %1077 = vmatpush1.bf16.msra.mxu0 %v1034
        %1078 = vmatprep.subr.bf16.mxu0 0
        %1079 = vmatpush1.bf16.msra.mxu0 %v1035
        %1080 = vmatprep.subr.bf16.mxu0 0
        %1081 = vmatpush1.bf16.msra.mxu0 %v1036
        %1082 = vmatprep.subr.bf16.mxu0 0
        %1083 = vmatpush1.bf16.msra.mxu0 %v1037
        %1084 = vmatprep.subr.bf16.mxu0 0
        %1085 = vmatpush1.bf16.msra.mxu0 %v1038
        %1086 = vmatprep.subr.bf16.mxu0 0
        %1087 = vmatpush1.bf16.msra.mxu0 %v1039
        %1088 = vmatprep.mubr.bf16.mxu0 %v517
        %1089 = vmatmul.mubr.bf16.gmra.mrb[0].mxu0 %v516
        %v1090 = vpop.f32.mrb[0].mxu0
        %v1091 = vadd.f32 0.0, %v1090
        %v1092 = vpop.f32.mrb[0].mxu0
        %v1093 = vpop.f32.mrb[0].mxu0
        %v1094 = vpop.f32.mrb[0].mxu0
        %1095 = vdwg.mxu0
        %v1096 = vpack.c.bf16 %v1091, %v1091
        %s1097 = scalar_lea.vmem %s1, 4
        %v1098 = vld [vmem:[%s1097] sm:$0x3]
        %v1100 = vsel %vm830, %v1098, 0
        %v1103 = vand.u32 %v1096, %v837
        %1105 = vmatprep.subr.bf16.mxu0 0
        %1106 = vmatpush1.bf16.msra.mxu0 %v1103
        %1107 = vmatprep.subr.bf16.mxu0 0
        %1108 = vmatpush1.bf16.msra.mxu0 0
        %1109 = vmatprep.subr.bf16.mxu0 0
        %1110 = vmatpush1.bf16.msra.mxu0 0
        %1111 = vmatprep.subr.bf16.mxu0 0
        %1112 = vmatpush1.bf16.msra.mxu0 0
        %1113 = vmatprep.subr.bf16.mxu0 0
        %1114 = vmatpush1.bf16.msra.mxu0 0
        %1115 = vmatprep.subr.bf16.mxu0 0
        %1116 = vmatpush1.bf16.msra.mxu0 0
        %1117 = vmatprep.subr.bf16.mxu0 0
        %1118 = vmatpush1.bf16.msra.mxu0 0
        %1119 = vmatprep.subr.bf16.mxu0 0
        %1120 = vmatpush1.bf16.msra.mxu0 0
        %1121 = vmatprep.subr.bf16.mxu0 0
        %1122 = vmatpush1.bf16.msra.mxu0 0
        %1123 = vmatprep.subr.bf16.mxu0 0
        %1124 = vmatpush1.bf16.msra.mxu0 0
        %1125 = vmatprep.subr.bf16.mxu0 0
        %1126 = vmatpush1.bf16.msra.mxu0 0
        %1127 = vmatprep.subr.bf16.mxu0 0
        %1128 = vmatpush1.bf16.msra.mxu0 0
        %1129 = vmatprep.subr.bf16.mxu0 0
        %1130 = vmatpush1.bf16.msra.mxu0 0
        %1131 = vmatprep.subr.bf16.mxu0 0
        %1132 = vmatpush1.bf16.msra.mxu0 0
        %1133 = vmatprep.subr.bf16.mxu0 0
        %1134 = vmatpush1.bf16.msra.mxu0 0
        %1135 = vmatprep.subr.bf16.mxu0 0
        %1136 = vmatpush1.bf16.msra.mxu0 0
        %1137 = vmatprep.mubr.bf16.mxu0 0
        %1138 = vmatmul.mubr.bf16.gmra.mrb[0].mxu0 %v1100
        %v1139 = vpop.f32.mrb[0].mxu0
        %v1140 = vadd.f32 0.0, %v1139
        %v1141 = vpop.f32.mrb[0].mxu0
        %v1142 = vpop.f32.mrb[0].mxu0
        %v1143 = vpop.f32.mrb[0].mxu0
        %1144 = vdwg.mxu0
        %v1145 = vadd.f32 %v922, %v1140
        %s1146 = scalar_lea.vmem %s3, 384
        %v1147 = vld [vmem:[%s1146] sm:$0xf]
        %v1148 = vld [vmem:[%s1146 + $0x4] sm:$0xf]
        %v1149 = vld [vmem:[%s1146 + $0x8] sm:$0xf]
        %v1150 = vld [vmem:[%s1146 + $0xc] sm:$0xf]
        %v1151 = vld [vmem:[%s1146 + $0x10] sm:$0xf]
        %v1152 = vld [vmem:[%s1146 + $0x14] sm:$0xf]
        %v1153 = vld [vmem:[%s1146 + $0x18] sm:$0xf]
        %v1154 = vld [vmem:[%s1146 + $0x1c] sm:$0xf]
        %v1155 = vld [vmem:[%s1146 + $0x20] sm:$0xf]
        %v1156 = vld [vmem:[%s1146 + $0x24] sm:$0xf]
        %v1157 = vld [vmem:[%s1146 + $0x28] sm:$0xf]
        %v1158 = vld [vmem:[%s1146 + $0x2c] sm:$0xf]
        %v1159 = vld [vmem:[%s1146 + $0x30] sm:$0xf]
        %v1160 = vld [vmem:[%s1146 + $0x34] sm:$0xf]
        %v1161 = vld [vmem:[%s1146 + $0x38] sm:$0xf]
        %v1162 = vld [vmem:[%s1146 + $0x3c] sm:$0xf]
        %v1163 = vld [vmem:[%s1146 + $0x40] sm:$0xf]
        %v1164 = vld [vmem:[%s1146 + $0x44] sm:$0xf]
        %v1165 = vld [vmem:[%s1146 + $0x48] sm:$0xf]
        %v1166 = vld [vmem:[%s1146 + $0x4c] sm:$0xf]
        %v1167 = vld [vmem:[%s1146 + $0x50] sm:$0xf]
        %v1168 = vld [vmem:[%s1146 + $0x54] sm:$0xf]
        %v1169 = vld [vmem:[%s1146 + $0x58] sm:$0xf]
        %v1170 = vld [vmem:[%s1146 + $0x5c] sm:$0xf]
        %v1171 = vld [vmem:[%s1146 + $0x60] sm:$0xf]
        %v1172 = vld [vmem:[%s1146 + $0x64] sm:$0xf]
        %v1173 = vld [vmem:[%s1146 + $0x68] sm:$0xf]
        %v1174 = vld [vmem:[%s1146 + $0x6c] sm:$0xf]
        %v1175 = vld [vmem:[%s1146 + $0x70] sm:$0xf]
        %v1176 = vld [vmem:[%s1146 + $0x74] sm:$0xf]
        %v1177 = vld [vmem:[%s1146 + $0x78] sm:$0xf]
        %v1178 = vld [vmem:[%s1146 + $0x7c] sm:$0xf]
        %v1211 = vunpack.c.l.b16 %v1147
        %v1212 = vunpack.c.l.b16 %v1148
        %v1213 = vunpack.c.l.b16 %v1149
        %v1214 = vunpack.c.l.b16 %v1150
        %v1215 = vunpack.c.l.b16 %v1151
        %v1216 = vunpack.c.l.b16 %v1152
        %v1217 = vunpack.c.l.b16 %v1153
        %v1218 = vunpack.c.l.b16 %v1154
        %v1219 = vunpack.c.l.b16 %v1155
        %v1220 = vunpack.c.l.b16 %v1156
        %v1221 = vunpack.c.l.b16 %v1157
        %v1222 = vunpack.c.l.b16 %v1158
        %v1223 = vunpack.c.l.b16 %v1159
        %v1224 = vunpack.c.l.b16 %v1160
        %v1225 = vunpack.c.l.b16 %v1161
        %v1226 = vunpack.c.l.b16 %v1162
        %v1227 = vunpack.c.l.b16 %v1163
        %v1228 = vunpack.c.l.b16 %v1164
        %v1229 = vunpack.c.l.b16 %v1165
        %v1230 = vunpack.c.l.b16 %v1166
        %v1231 = vunpack.c.l.b16 %v1167
        %v1232 = vunpack.c.l.b16 %v1168
        %v1233 = vunpack.c.l.b16 %v1169
        %v1234 = vunpack.c.l.b16 %v1170
        %v1235 = vunpack.c.l.b16 %v1171
        %v1236 = vunpack.c.l.b16 %v1172
        %v1237 = vunpack.c.l.b16 %v1173
        %v1238 = vunpack.c.l.b16 %v1174
        %v1239 = vunpack.c.l.b16 %v1175
        %v1240 = vunpack.c.l.b16 %v1176
        %v1241 = vunpack.c.l.b16 %v1177
        %v1242 = vunpack.c.l.b16 %v1178
        %v1243 = vpack.c.b16 %v1212, %v1211
        %v1244 = vpack.c.b16 %v1214, %v1213
        %v1245 = vpack.c.b16 %v1216, %v1215
        %v1246 = vpack.c.b16 %v1218, %v1217
        %v1247 = vpack.c.b16 %v1220, %v1219
        %v1248 = vpack.c.b16 %v1222, %v1221
        %v1249 = vpack.c.b16 %v1224, %v1223
        %v1250 = vpack.c.b16 %v1226, %v1225
        %v1251 = vpack.c.b16 %v1228, %v1227
        %v1252 = vpack.c.b16 %v1230, %v1229
        %v1253 = vpack.c.b16 %v1232, %v1231
        %v1254 = vpack.c.b16 %v1234, %v1233
        %v1255 = vpack.c.b16 %v1236, %v1235
        %v1256 = vpack.c.b16 %v1238, %v1237
        %v1257 = vpack.c.b16 %v1240, %v1239
        %v1258 = vpack.c.b16 %v1242, %v1241
        %1275 = vmatprep.subr.bf16.mxu0 0
        %1276 = vmatpush1.bf16.msra.mxu0 %v1243
        %1277 = vmatprep.subr.bf16.mxu0 0
        %1278 = vmatpush1.bf16.msra.mxu0 %v1244
        %1279 = vmatprep.subr.bf16.mxu0 0
        %1280 = vmatpush1.bf16.msra.mxu0 %v1245
        %1281 = vmatprep.subr.bf16.mxu0 0
        %1282 = vmatpush1.bf16.msra.mxu0 %v1246
        %1283 = vmatprep.subr.bf16.mxu0 0
        %1284 = vmatpush1.bf16.msra.mxu0 %v1247
        %1285 = vmatprep.subr.bf16.mxu0 0
        %1286 = vmatpush1.bf16.msra.mxu0 %v1248
        %1287 = vmatprep.subr.bf16.mxu0 0
        %1288 = vmatpush1.bf16.msra.mxu0 %v1249
        %1289 = vmatprep.subr.bf16.mxu0 0
        %1290 = vmatpush1.bf16.msra.mxu0 %v1250
        %1291 = vmatprep.subr.bf16.mxu0 0
        %1292 = vmatpush1.bf16.msra.mxu0 %v1251
        %1293 = vmatprep.subr.bf16.mxu0 0
        %1294 = vmatpush1.bf16.msra.mxu0 %v1252
        %1295 = vmatprep.subr.bf16.mxu0 0
        %1296 = vmatpush1.bf16.msra.mxu0 %v1253
        %1297 = vmatprep.subr.bf16.mxu0 0
        %1298 = vmatpush1.bf16.msra.mxu0 %v1254
        %1299 = vmatprep.subr.bf16.mxu0 0
        %1300 = vmatpush1.bf16.msra.mxu0 %v1255
        %1301 = vmatprep.subr.bf16.mxu0 0
        %1302 = vmatpush1.bf16.msra.mxu0 %v1256
        %1303 = vmatprep.subr.bf16.mxu0 0
        %1304 = vmatpush1.bf16.msra.mxu0 %v1257
        %1305 = vmatprep.subr.bf16.mxu0 0
        %1306 = vmatpush1.bf16.msra.mxu0 %v1258
        %1307 = vmatprep.mubr.bf16.mxu0 %v517
        %1308 = vmatmul.mubr.bf16.gmra.mrb[0].mxu0 %v516
        %v1309 = vpop.f32.mrb[0].mxu0
        %v1310 = vadd.f32 0.0, %v1309
        %v1311 = vpop.f32.mrb[0].mxu0
        %v1312 = vpop.f32.mrb[0].mxu0
        %v1313 = vpop.f32.mrb[0].mxu0
        %1314 = vdwg.mxu0
        %v1315 = vpack.c.bf16 %v1310, %v1310
        %s1316 = scalar_lea.vmem %s1, 6
        %v1317 = vld [vmem:[%s1316] sm:$0x3]
        %v1319 = vsel %vm830, %v1317, 0
        %v1322 = vand.u32 %v1315, %v837
        %1324 = vmatprep.subr.bf16.mxu0 0
        %1325 = vmatpush1.bf16.msra.mxu0 %v1322
        %1326 = vmatprep.subr.bf16.mxu0 0
        %1327 = vmatpush1.bf16.msra.mxu0 0
        %1328 = vmatprep.subr.bf16.mxu0 0
        %1329 = vmatpush1.bf16.msra.mxu0 0
        %1330 = vmatprep.subr.bf16.mxu0 0
        %1331 = vmatpush1.bf16.msra.mxu0 0
        %1332 = vmatprep.subr.bf16.mxu0 0
        %1333 = vmatpush1.bf16.msra.mxu0 0
        %1334 = vmatprep.subr.bf16.mxu0 0
        %1335 = vmatpush1.bf16.msra.mxu0 0
        %1336 = vmatprep.subr.bf16.mxu0 0
        %1337 = vmatpush1.bf16.msra.mxu0 0
        %1338 = vmatprep.subr.bf16.mxu0 0
        %1339 = vmatpush1.bf16.msra.mxu0 0
        %1340 = vmatprep.subr.bf16.mxu0 0
        %1341 = vmatpush1.bf16.msra.mxu0 0
        %1342 = vmatprep.subr.bf16.mxu0 0
        %1343 = vmatpush1.bf16.msra.mxu0 0
        %1344 = vmatprep.subr.bf16.mxu0 0
        %1345 = vmatpush1.bf16.msra.mxu0 0
        %1346 = vmatprep.subr.bf16.mxu0 0
        %1347 = vmatpush1.bf16.msra.mxu0 0
        %1348 = vmatprep.subr.bf16.mxu0 0
        %1349 = vmatpush1.bf16.msra.mxu0 0
        %1350 = vmatprep.subr.bf16.mxu0 0
        %1351 = vmatpush1.bf16.msra.mxu0 0
        %1352 = vmatprep.subr.bf16.mxu0 0
        %1353 = vmatpush1.bf16.msra.mxu0 0
        %1354 = vmatprep.subr.bf16.mxu0 0
        %1355 = vmatpush1.bf16.msra.mxu0 0
        %1356 = vmatprep.mubr.bf16.mxu0 0
        %1357 = vmatmul.mubr.bf16.gmra.mrb[0].mxu0 %v1319
        %v1358 = vpop.f32.mrb[0].mxu0
        %v1359 = vadd.f32 0.0, %v1358
        %v1360 = vpop.f32.mrb[0].mxu0
        %v1361 = vpop.f32.mrb[0].mxu0
        %v1362 = vpop.f32.mrb[0].mxu0
        %1363 = vdwg.mxu0
        %v1364 = vadd.f32 %v1145, %v1359
        %s1365 = scalar_lea.vmem %s3, 512
        %v1366 = vld [vmem:[%s1365] sm:$0xf]
        %v1367 = vld [vmem:[%s1365 + $0x4] sm:$0xf]
        %v1368 = vld [vmem:[%s1365 + $0x8] sm:$0xf]
        %v1369 = vld [vmem:[%s1365 + $0xc] sm:$0xf]
        %v1370 = vld [vmem:[%s1365 + $0x10] sm:$0xf]
        %v1371 = vld [vmem:[%s1365 + $0x14] sm:$0xf]
        %v1372 = vld [vmem:[%s1365 + $0x18] sm:$0xf]
        %v1373 = vld [vmem:[%s1365 + $0x1c] sm:$0xf]
        %v1374 = vld [vmem:[%s1365 + $0x20] sm:$0xf]
        %v1375 = vld [vmem:[%s1365 + $0x24] sm:$0xf]
        %v1376 = vld [vmem:[%s1365 + $0x28] sm:$0xf]
        %v1377 = vld [vmem:[%s1365 + $0x2c] sm:$0xf]
        %v1378 = vld [vmem:[%s1365 + $0x30] sm:$0xf]
        %v1379 = vld [vmem:[%s1365 + $0x34] sm:$0xf]
        %v1380 = vld [vmem:[%s1365 + $0x38] sm:$0xf]
        %v1381 = vld [vmem:[%s1365 + $0x3c] sm:$0xf]
        %v1382 = vld [vmem:[%s1365 + $0x40] sm:$0xf]
        %v1383 = vld [vmem:[%s1365 + $0x44] sm:$0xf]
        %v1384 = vld [vmem:[%s1365 + $0x48] sm:$0xf]
        %v1385 = vld [vmem:[%s1365 + $0x4c] sm:$0xf]
        %v1386 = vld [vmem:[%s1365 + $0x50] sm:$0xf]
        %v1387 = vld [vmem:[%s1365 + $0x54] sm:$0xf]
        %v1388 = vld [vmem:[%s1365 + $0x58] sm:$0xf]
        %v1389 = vld [vmem:[%s1365 + $0x5c] sm:$0xf]
        %v1390 = vld [vmem:[%s1365 + $0x60] sm:$0xf]
        %v1391 = vld [vmem:[%s1365 + $0x64] sm:$0xf]
        %v1392 = vld [vmem:[%s1365 + $0x68] sm:$0xf]
        %v1393 = vld [vmem:[%s1365 + $0x6c] sm:$0xf]
        %v1394 = vld [vmem:[%s1365 + $0x70] sm:$0xf]
        %v1395 = vld [vmem:[%s1365 + $0x74] sm:$0xf]
        %v1396 = vld [vmem:[%s1365 + $0x78] sm:$0xf]
        %v1397 = vld [vmem:[%s1365 + $0x7c] sm:$0xf]
        %v1430 = vunpack.c.l.b16 %v1366
        %v1431 = vunpack.c.l.b16 %v1367
        %v1432 = vunpack.c.l.b16 %v1368
        %v1433 = vunpack.c.l.b16 %v1369
        %v1434 = vunpack.c.l.b16 %v1370
        %v1435 = vunpack.c.l.b16 %v1371
        %v1436 = vunpack.c.l.b16 %v1372
        %v1437 = vunpack.c.l.b16 %v1373
        %v1438 = vunpack.c.l.b16 %v1374
        %v1439 = vunpack.c.l.b16 %v1375
        %v1440 = vunpack.c.l.b16 %v1376
        %v1441 = vunpack.c.l.b16 %v1377
        %v1442 = vunpack.c.l.b16 %v1378
        %v1443 = vunpack.c.l.b16 %v1379
        %v1444 = vunpack.c.l.b16 %v1380
        %v1445 = vunpack.c.l.b16 %v1381
        %v1446 = vunpack.c.l.b16 %v1382
        %v1447 = vunpack.c.l.b16 %v1383
        %v1448 = vunpack.c.l.b16 %v1384
        %v1449 = vunpack.c.l.b16 %v1385
        %v1450 = vunpack.c.l.b16 %v1386
        %v1451 = vunpack.c.l.b16 %v1387
        %v1452 = vunpack.c.l.b16 %v1388
        %v1453 = vunpack.c.l.b16 %v1389
        %v1454 = vunpack.c.l.b16 %v1390
        %v1455 = vunpack.c.l.b16 %v1391
        %v1456 = vunpack.c.l.b16 %v1392
        %v1457 = vunpack.c.l.b16 %v1393
        %v1458 = vunpack.c.l.b16 %v1394
        %v1459 = vunpack.c.l.b16 %v1395
        %v1460 = vunpack.c.l.b16 %v1396
        %v1461 = vunpack.c.l.b16 %v1397
        %v1462 = vpack.c.b16 %v1431, %v1430
        %v1463 = vpack.c.b16 %v1433, %v1432
        %v1464 = vpack.c.b16 %v1435, %v1434
        %v1465 = vpack.c.b16 %v1437, %v1436
        %v1466 = vpack.c.b16 %v1439, %v1438
        %v1467 = vpack.c.b16 %v1441, %v1440
        %v1468 = vpack.c.b16 %v1443, %v1442
        %v1469 = vpack.c.b16 %v1445, %v1444
        %v1470 = vpack.c.b16 %v1447, %v1446
        %v1471 = vpack.c.b16 %v1449, %v1448
        %v1472 = vpack.c.b16 %v1451, %v1450
        %v1473 = vpack.c.b16 %v1453, %v1452
        %v1474 = vpack.c.b16 %v1455, %v1454
        %v1475 = vpack.c.b16 %v1457, %v1456
        %v1476 = vpack.c.b16 %v1459, %v1458
        %v1477 = vpack.c.b16 %v1461, %v1460
        %1494 = vmatprep.subr.bf16.mxu0 0
        %1495 = vmatpush1.bf16.msra.mxu0 %v1462
        %1496 = vmatprep.subr.bf16.mxu0 0
        %1497 = vmatpush1.bf16.msra.mxu0 %v1463
        %1498 = vmatprep.subr.bf16.mxu0 0
        %1499 = vmatpush1.bf16.msra.mxu0 %v1464
        %1500 = vmatprep.subr.bf16.mxu0 0
        %1501 = vmatpush1.bf16.msra.mxu0 %v1465
        %1502 = vmatprep.subr.bf16.mxu0 0
        %1503 = vmatpush1.bf16.msra.mxu0 %v1466
        %1504 = vmatprep.subr.bf16.mxu0 0
        %1505 = vmatpush1.bf16.msra.mxu0 %v1467
        %1506 = vmatprep.subr.bf16.mxu0 0
        %1507 = vmatpush1.bf16.msra.mxu0 %v1468
        %1508 = vmatprep.subr.bf16.mxu0 0
        %1509 = vmatpush1.bf16.msra.mxu0 %v1469
        %1510 = vmatprep.subr.bf16.mxu0 0
        %1511 = vmatpush1.bf16.msra.mxu0 %v1470
        %1512 = vmatprep.subr.bf16.mxu0 0
        %1513 = vmatpush1.bf16.msra.mxu0 %v1471
        %1514 = vmatprep.subr.bf16.mxu0 0
        %1515 = vmatpush1.bf16.msra.mxu0 %v1472
        %1516 = vmatprep.subr.bf16.mxu0 0
        %1517 = vmatpush1.bf16.msra.mxu0 %v1473
        %1518 = vmatprep.subr.bf16.mxu0 0
        %1519 = vmatpush1.bf16.msra.mxu0 %v1474
        %1520 = vmatprep.subr.bf16.mxu0 0
        %1521 = vmatpush1.bf16.msra.mxu0 %v1475
        %1522 = vmatprep.subr.bf16.mxu0 0
        %1523 = vmatpush1.bf16.msra.mxu0 %v1476
        %1524 = vmatprep.subr.bf16.mxu0 0
        %1525 = vmatpush1.bf16.msra.mxu0 %v1477
        %1526 = vmatprep.mubr.bf16.mxu0 %v517
        %1527 = vmatmul.mubr.bf16.gmra.mrb[0].mxu0 %v516
        %v1528 = vpop.f32.mrb[0].mxu0
        %v1529 = vadd.f32 0.0, %v1528
        %v1530 = vpop.f32.mrb[0].mxu0
        %v1531 = vpop.f32.mrb[0].mxu0
        %v1532 = vpop.f32.mrb[0].mxu0
        %1533 = vdwg.mxu0
        %v1534 = vpack.c.bf16 %v1529, %v1529
        %s1535 = scalar_lea.vmem %s1, 8
        %v1536 = vld [vmem:[%s1535] sm:$0x3]
        %v1538 = vsel %vm830, %v1536, 0
        %v1541 = vand.u32 %v1534, %v837
        %1543 = vmatprep.subr.bf16.mxu0 0
        %1544 = vmatpush1.bf16.msra.mxu0 %v1541
        %1545 = vmatprep.subr.bf16.mxu0 0
        %1546 = vmatpush1.bf16.msra.mxu0 0
        %1547 = vmatprep.subr.bf16.mxu0 0
        %1548 = vmatpush1.bf16.msra.mxu0 0
        %1549 = vmatprep.subr.bf16.mxu0 0
        %1550 = vmatpush1.bf16.msra.mxu0 0
        %1551 = vmatprep.subr.bf16.mxu0 0
        %1552 = vmatpush1.bf16.msra.mxu0 0
        %1553 = vmatprep.subr.bf16.mxu0 0
        %1554 = vmatpush1.bf16.msra.mxu0 0
        %1555 = vmatprep.subr.bf16.mxu0 0
        %1556 = vmatpush1.bf16.msra.mxu0 0
        %1557 = vmatprep.subr.bf16.mxu0 0
        %1558 = vmatpush1.bf16.msra.mxu0 0
        %1559 = vmatprep.subr.bf16.mxu0 0
        %1560 = vmatpush1.bf16.msra.mxu0 0
        %1561 = vmatprep.subr.bf16.mxu0 0
        %1562 = vmatpush1.bf16.msra.mxu0 0
        %1563 = vmatprep.subr.bf16.mxu0 0
        %1564 = vmatpush1.bf16.msra.mxu0 0
        %1565 = vmatprep.subr.bf16.mxu0 0
        %1566 = vmatpush1.bf16.msra.mxu0 0
        %1567 = vmatprep.subr.bf16.mxu0 0
        %1568 = vmatpush1.bf16.msra.mxu0 0
        %1569 = vmatprep.subr.bf16.mxu0 0
        %1570 = vmatpush1.bf16.msra.mxu0 0
        %1571 = vmatprep.subr.bf16.mxu0 0
        %1572 = vmatpush1.bf16.msra.mxu0 0
        %1573 = vmatprep.subr.bf16.mxu0 0
        %1574 = vmatpush1.bf16.msra.mxu0 0
        %1575 = vmatprep.mubr.bf16.mxu0 0
        %1576 = vmatmul.mubr.bf16.gmra.mrb[0].mxu0 %v1538
        %v1577 = vpop.f32.mrb[0].mxu0
        %v1578 = vadd.f32 0.0, %v1577
        %v1579 = vpop.f32.mrb[0].mxu0
        %v1580 = vpop.f32.mrb[0].mxu0
        %v1581 = vpop.f32.mrb[0].mxu0
        %1582 = vdwg.mxu0
        %v1583 = vadd.f32 %v1364, %v1578
        %s1584 = scalar_lea.vmem %s3, 640
        %v1585 = vld [vmem:[%s1584] sm:$0xf]
        %v1586 = vld [vmem:[%s1584 + $0x4] sm:$0xf]
        %v1587 = vld [vmem:[%s1584 + $0x8] sm:$0xf]
        %v1588 = vld [vmem:[%s1584 + $0xc] sm:$0xf]
        %v1589 = vld [vmem:[%s1584 + $0x10] sm:$0xf]
        %v1590 = vld [vmem:[%s1584 + $0x14] sm:$0xf]
        %v1591 = vld [vmem:[%s1584 + $0x18] sm:$0xf]
        %v1592 = vld [vmem:[%s1584 + $0x1c] sm:$0xf]
        %v1593 = vld [vmem:[%s1584 + $0x20] sm:$0xf]
        %v1594 = vld [vmem:[%s1584 + $0x24] sm:$0xf]
        %v1595 = vld [vmem:[%s1584 + $0x28] sm:$0xf]
        %v1596 = vld [vmem:[%s1584 + $0x2c] sm:$0xf]
        %v1597 = vld [vmem:[%s1584 + $0x30] sm:$0xf]
        %v1598 = vld [vmem:[%s1584 + $0x34] sm:$0xf]
        %v1599 = vld [vmem:[%s1584 + $0x38] sm:$0xf]
        %v1600 = vld [vmem:[%s1584 + $0x3c] sm:$0xf]
        %v1601 = vld [vmem:[%s1584 + $0x40] sm:$0xf]
        %v1602 = vld [vmem:[%s1584 + $0x44] sm:$0xf]
        %v1603 = vld [vmem:[%s1584 + $0x48] sm:$0xf]
        %v1604 = vld [vmem:[%s1584 + $0x4c] sm:$0xf]
        %v1605 = vld [vmem:[%s1584 + $0x50] sm:$0xf]
        %v1606 = vld [vmem:[%s1584 + $0x54] sm:$0xf]
        %v1607 = vld [vmem:[%s1584 + $0x58] sm:$0xf]
        %v1608 = vld [vmem:[%s1584 + $0x5c] sm:$0xf]
        %v1609 = vld [vmem:[%s1584 + $0x60] sm:$0xf]
        %v1610 = vld [vmem:[%s1584 + $0x64] sm:$0xf]
        %v1611 = vld [vmem:[%s1584 + $0x68] sm:$0xf]
        %v1612 = vld [vmem:[%s1584 + $0x6c] sm:$0xf]
        %v1613 = vld [vmem:[%s1584 + $0x70] sm:$0xf]
        %v1614 = vld [vmem:[%s1584 + $0x74] sm:$0xf]
        %v1615 = vld [vmem:[%s1584 + $0x78] sm:$0xf]
        %v1616 = vld [vmem:[%s1584 + $0x7c] sm:$0xf]
        %v1649 = vunpack.c.l.b16 %v1585
        %v1650 = vunpack.c.l.b16 %v1586
        %v1651 = vunpack.c.l.b16 %v1587
        %v1652 = vunpack.c.l.b16 %v1588
        %v1653 = vunpack.c.l.b16 %v1589
        %v1654 = vunpack.c.l.b16 %v1590
        %v1655 = vunpack.c.l.b16 %v1591
        %v1656 = vunpack.c.l.b16 %v1592
        %v1657 = vunpack.c.l.b16 %v1593
        %v1658 = vunpack.c.l.b16 %v1594
        %v1659 = vunpack.c.l.b16 %v1595
        %v1660 = vunpack.c.l.b16 %v1596
        %v1661 = vunpack.c.l.b16 %v1597
        %v1662 = vunpack.c.l.b16 %v1598
        %v1663 = vunpack.c.l.b16 %v1599
        %v1664 = vunpack.c.l.b16 %v1600
        %v1665 = vunpack.c.l.b16 %v1601
        %v1666 = vunpack.c.l.b16 %v1602
        %v1667 = vunpack.c.l.b16 %v1603
        %v1668 = vunpack.c.l.b16 %v1604
        %v1669 = vunpack.c.l.b16 %v1605
        %v1670 = vunpack.c.l.b16 %v1606
        %v1671 = vunpack.c.l.b16 %v1607
        %v1672 = vunpack.c.l.b16 %v1608
        %v1673 = vunpack.c.l.b16 %v1609
        %v1674 = vunpack.c.l.b16 %v1610
        %v1675 = vunpack.c.l.b16 %v1611
        %v1676 = vunpack.c.l.b16 %v1612
        %v1677 = vunpack.c.l.b16 %v1613
        %v1678 = vunpack.c.l.b16 %v1614
        %v1679 = vunpack.c.l.b16 %v1615
        %v1680 = vunpack.c.l.b16 %v1616
        %v1681 = vpack.c.b16 %v1650, %v1649
        %v1682 = vpack.c.b16 %v1652, %v1651
        %v1683 = vpack.c.b16 %v1654, %v1653
        %v1684 = vpack.c.b16 %v1656, %v1655
        %v1685 = vpack.c.b16 %v1658, %v1657
        %v1686 = vpack.c.b16 %v1660, %v1659
        %v1687 = vpack.c.b16 %v1662, %v1661
        %v1688 = vpack.c.b16 %v1664, %v1663
        %v1689 = vpack.c.b16 %v1666, %v1665
        %v1690 = vpack.c.b16 %v1668, %v1667
        %v1691 = vpack.c.b16 %v1670, %v1669
        %v1692 = vpack.c.b16 %v1672, %v1671
        %v1693 = vpack.c.b16 %v1674, %v1673
        %v1694 = vpack.c.b16 %v1676, %v1675
        %v1695 = vpack.c.b16 %v1678, %v1677
        %v1696 = vpack.c.b16 %v1680, %v1679
        %1713 = vmatprep.subr.bf16.mxu0 0
        %1714 = vmatpush1.bf16.msra.mxu0 %v1681
        %1715 = vmatprep.subr.bf16.mxu0 0
        %1716 = vmatpush1.bf16.msra.mxu0 %v1682
        %1717 = vmatprep.subr.bf16.mxu0 0
        %1718 = vmatpush1.bf16.msra.mxu0 %v1683
        %1719 = vmatprep.subr.bf16.mxu0 0
        %1720 = vmatpush1.bf16.msra.mxu0 %v1684
        %1721 = vmatprep.subr.bf16.mxu0 0
        %1722 = vmatpush1.bf16.msra.mxu0 %v1685
        %1723 = vmatprep.subr.bf16.mxu0 0
        %1724 = vmatpush1.bf16.msra.mxu0 %v1686
        %1725 = vmatprep.subr.bf16.mxu0 0
        %1726 = vmatpush1.bf16.msra.mxu0 %v1687
        %1727 = vmatprep.subr.bf16.mxu0 0
        %1728 = vmatpush1.bf16.msra.mxu0 %v1688
        %1729 = vmatprep.subr.bf16.mxu0 0
        %1730 = vmatpush1.bf16.msra.mxu0 %v1689
        %1731 = vmatprep.subr.bf16.mxu0 0
        %1732 = vmatpush1.bf16.msra.mxu0 %v1690
        %1733 = vmatprep.subr.bf16.mxu0 0
        %1734 = vmatpush1.bf16.msra.mxu0 %v1691
        %1735 = vmatprep.subr.bf16.mxu0 0
        %1736 = vmatpush1.bf16.msra.mxu0 %v1692
        %1737 = vmatprep.subr.bf16.mxu0 0
        %1738 = vmatpush1.bf16.msra.mxu0 %v1693
        %1739 = vmatprep.subr.bf16.mxu0 0
        %1740 = vmatpush1.bf16.msra.mxu0 %v1694
        %1741 = vmatprep.subr.bf16.mxu0 0
        %1742 = vmatpush1.bf16.msra.mxu0 %v1695
        %1743 = vmatprep.subr.bf16.mxu0 0
        %1744 = vmatpush1.bf16.msra.mxu0 %v1696
        %1745 = vmatprep.mubr.bf16.mxu0 %v517
        %1746 = vmatmul.mubr.bf16.gmra.mrb[0].mxu0 %v516
        %v1747 = vpop.f32.mrb[0].mxu0
        %v1748 = vadd.f32 0.0, %v1747
        %v1749 = vpop.f32.mrb[0].mxu0
        %v1750 = vpop.f32.mrb[0].mxu0
        %v1751 = vpop.f32.mrb[0].mxu0
        %1752 = vdwg.mxu0
        %v1753 = vpack.c.bf16 %v1748, %v1748
        %s1754 = scalar_lea.vmem %s1, 10
        %v1755 = vld [vmem:[%s1754] sm:$0x3]
        %v1757 = vsel %vm830, %v1755, 0
        %v1760 = vand.u32 %v1753, %v837
        %1762 = vmatprep.subr.bf16.mxu0 0
        %1763 = vmatpush1.bf16.msra.mxu0 %v1760
        %1764 = vmatprep.subr.bf16.mxu0 0
        %1765 = vmatpush1.bf16.msra.mxu0 0
        %1766 = vmatprep.subr.bf16.mxu0 0
        %1767 = vmatpush1.bf16.msra.mxu0 0
        %1768 = vmatprep.subr.bf16.mxu0 0
        %1769 = vmatpush1.bf16.msra.mxu0 0
        %1770 = vmatprep.subr.bf16.mxu0 0
        %1771 = vmatpush1.bf16.msra.mxu0 0
        %1772 = vmatprep.subr.bf16.mxu0 0
        %1773 = vmatpush1.bf16.msra.mxu0 0
        %1774 = vmatprep.subr.bf16.mxu0 0
        %1775 = vmatpush1.bf16.msra.mxu0 0
        %1776 = vmatprep.subr.bf16.mxu0 0
        %1777 = vmatpush1.bf16.msra.mxu0 0
        %1778 = vmatprep.subr.bf16.mxu0 0
        %1779 = vmatpush1.bf16.msra.mxu0 0
        %1780 = vmatprep.subr.bf16.mxu0 0
        %1781 = vmatpush1.bf16.msra.mxu0 0
        %1782 = vmatprep.subr.bf16.mxu0 0
        %1783 = vmatpush1.bf16.msra.mxu0 0
        %1784 = vmatprep.subr.bf16.mxu0 0
        %1785 = vmatpush1.bf16.msra.mxu0 0
        %1786 = vmatprep.subr.bf16.mxu0 0
        %1787 = vmatpush1.bf16.msra.mxu0 0
        %1788 = vmatprep.subr.bf16.mxu0 0
        %1789 = vmatpush1.bf16.msra.mxu0 0
        %1790 = vmatprep.subr.bf16.mxu0 0
        %1791 = vmatpush1.bf16.msra.mxu0 0
        %1792 = vmatprep.subr.bf16.mxu0 0
        %1793 = vmatpush1.bf16.msra.mxu0 0
        %1794 = vmatprep.mubr.bf16.mxu0 0
        %1795 = vmatmul.mubr.bf16.gmra.mrb[0].mxu0 %v1757
        %v1796 = vpop.f32.mrb[0].mxu0
        %v1797 = vadd.f32 0.0, %v1796
        %v1798 = vpop.f32.mrb[0].mxu0
        %v1799 = vpop.f32.mrb[0].mxu0
        %v1800 = vpop.f32.mrb[0].mxu0
        %1801 = vdwg.mxu0
        %v1802 = vadd.f32 %v1583, %v1797
        %s1803 = scalar_lea.vmem %s3, 768
        %v1804 = vld [vmem:[%s1803] sm:$0xf]
        %v1805 = vld [vmem:[%s1803 + $0x4] sm:$0xf]
        %v1806 = vld [vmem:[%s1803 + $0x8] sm:$0xf]
        %v1807 = vld [vmem:[%s1803 + $0xc] sm:$0xf]
        %v1808 = vld [vmem:[%s1803 + $0x10] sm:$0xf]
        %v1809 = vld [vmem:[%s1803 + $0x14] sm:$0xf]
        %v1810 = vld [vmem:[%s1803 + $0x18] sm:$0xf]
        %v1811 = vld [vmem:[%s1803 + $0x1c] sm:$0xf]
        %v1812 = vld [vmem:[%s1803 + $0x20] sm:$0xf]
        %v1813 = vld [vmem:[%s1803 + $0x24] sm:$0xf]
        %v1814 = vld [vmem:[%s1803 + $0x28] sm:$0xf]
        %v1815 = vld [vmem:[%s1803 + $0x2c] sm:$0xf]
        %v1816 = vld [vmem:[%s1803 + $0x30] sm:$0xf]
        %v1817 = vld [vmem:[%s1803 + $0x34] sm:$0xf]
        %v1818 = vld [vmem:[%s1803 + $0x38] sm:$0xf]
        %v1819 = vld [vmem:[%s1803 + $0x3c] sm:$0xf]
        %v1820 = vld [vmem:[%s1803 + $0x40] sm:$0xf]
        %v1821 = vld [vmem:[%s1803 + $0x44] sm:$0xf]
        %v1822 = vld [vmem:[%s1803 + $0x48] sm:$0xf]
        %v1823 = vld [vmem:[%s1803 + $0x4c] sm:$0xf]
        %v1824 = vld [vmem:[%s1803 + $0x50] sm:$0xf]
        %v1825 = vld [vmem:[%s1803 + $0x54] sm:$0xf]
        %v1826 = vld [vmem:[%s1803 + $0x58] sm:$0xf]
        %v1827 = vld [vmem:[%s1803 + $0x5c] sm:$0xf]
        %v1828 = vld [vmem:[%s1803 + $0x60] sm:$0xf]
        %v1829 = vld [vmem:[%s1803 + $0x64] sm:$0xf]
        %v1830 = vld [vmem:[%s1803 + $0x68] sm:$0xf]
        %v1831 = vld [vmem:[%s1803 + $0x6c] sm:$0xf]
        %v1832 = vld [vmem:[%s1803 + $0x70] sm:$0xf]
        %v1833 = vld [vmem:[%s1803 + $0x74] sm:$0xf]
        %v1834 = vld [vmem:[%s1803 + $0x78] sm:$0xf]
        %v1835 = vld [vmem:[%s1803 + $0x7c] sm:$0xf]
        %v1868 = vunpack.c.l.b16 %v1804
        %v1869 = vunpack.c.l.b16 %v1805
        %v1870 = vunpack.c.l.b16 %v1806
        %v1871 = vunpack.c.l.b16 %v1807
        %v1872 = vunpack.c.l.b16 %v1808
        %v1873 = vunpack.c.l.b16 %v1809
        %v1874 = vunpack.c.l.b16 %v1810
        %v1875 = vunpack.c.l.b16 %v1811
        %v1876 = vunpack.c.l.b16 %v1812
        %v1877 = vunpack.c.l.b16 %v1813
        %v1878 = vunpack.c.l.b16 %v1814
        %v1879 = vunpack.c.l.b16 %v1815
        %v1880 = vunpack.c.l.b16 %v1816
        %v1881 = vunpack.c.l.b16 %v1817
        %v1882 = vunpack.c.l.b16 %v1818
        %v1883 = vunpack.c.l.b16 %v1819
        %v1884 = vunpack.c.l.b16 %v1820
        %v1885 = vunpack.c.l.b16 %v1821
        %v1886 = vunpack.c.l.b16 %v1822
        %v1887 = vunpack.c.l.b16 %v1823
        %v1888 = vunpack.c.l.b16 %v1824
        %v1889 = vunpack.c.l.b16 %v1825
        %v1890 = vunpack.c.l.b16 %v1826
        %v1891 = vunpack.c.l.b16 %v1827
        %v1892 = vunpack.c.l.b16 %v1828
        %v1893 = vunpack.c.l.b16 %v1829
        %v1894 = vunpack.c.l.b16 %v1830
        %v1895 = vunpack.c.l.b16 %v1831
        %v1896 = vunpack.c.l.b16 %v1832
        %v1897 = vunpack.c.l.b16 %v1833
        %v1898 = vunpack.c.l.b16 %v1834
        %v1899 = vunpack.c.l.b16 %v1835
        %v1900 = vpack.c.b16 %v1869, %v1868
        %v1901 = vpack.c.b16 %v1871, %v1870
        %v1902 = vpack.c.b16 %v1873, %v1872
        %v1903 = vpack.c.b16 %v1875, %v1874
        %v1904 = vpack.c.b16 %v1877, %v1876
        %v1905 = vpack.c.b16 %v1879, %v1878
        %v1906 = vpack.c.b16 %v1881, %v1880
        %v1907 = vpack.c.b16 %v1883, %v1882
        %v1908 = vpack.c.b16 %v1885, %v1884
        %v1909 = vpack.c.b16 %v1887, %v1886
        %v1910 = vpack.c.b16 %v1889, %v1888
        %v1911 = vpack.c.b16 %v1891, %v1890
        %v1912 = vpack.c.b16 %v1893, %v1892
        %v1913 = vpack.c.b16 %v1895, %v1894
        %v1914 = vpack.c.b16 %v1897, %v1896
        %v1915 = vpack.c.b16 %v1899, %v1898
        %1932 = vmatprep.subr.bf16.mxu0 0
        %1933 = vmatpush1.bf16.msra.mxu0 %v1900
        %1934 = vmatprep.subr.bf16.mxu0 0
        %1935 = vmatpush1.bf16.msra.mxu0 %v1901
        %1936 = vmatprep.subr.bf16.mxu0 0
        %1937 = vmatpush1.bf16.msra.mxu0 %v1902
        %1938 = vmatprep.subr.bf16.mxu0 0
        %1939 = vmatpush1.bf16.msra.mxu0 %v1903
        %1940 = vmatprep.subr.bf16.mxu0 0
        %1941 = vmatpush1.bf16.msra.mxu0 %v1904
        %1942 = vmatprep.subr.bf16.mxu0 0
        %1943 = vmatpush1.bf16.msra.mxu0 %v1905
        %1944 = vmatprep.subr.bf16.mxu0 0
        %1945 = vmatpush1.bf16.msra.mxu0 %v1906
        %1946 = vmatprep.subr.bf16.mxu0 0
        %1947 = vmatpush1.bf16.msra.mxu0 %v1907
        %1948 = vmatprep.subr.bf16.mxu0 0
        %1949 = vmatpush1.bf16.msra.mxu0 %v1908
        %1950 = vmatprep.subr.bf16.mxu0 0
        %1951 = vmatpush1.bf16.msra.mxu0 %v1909
        %1952 = vmatprep.subr.bf16.mxu0 0
        %1953 = vmatpush1.bf16.msra.mxu0 %v1910
        %1954 = vmatprep.subr.bf16.mxu0 0
        %1955 = vmatpush1.bf16.msra.mxu0 %v1911
        %1956 = vmatprep.subr.bf16.mxu0 0
        %1957 = vmatpush1.bf16.msra.mxu0 %v1912
        %1958 = vmatprep.subr.bf16.mxu0 0
        %1959 = vmatpush1.bf16.msra.mxu0 %v1913
        %1960 = vmatprep.subr.bf16.mxu0 0
        %1961 = vmatpush1.bf16.msra.mxu0 %v1914
        %1962 = vmatprep.subr.bf16.mxu0 0
        %1963 = vmatpush1.bf16.msra.mxu0 %v1915
        %1964 = vmatprep.mubr.bf16.mxu0 %v517
        %1965 = vmatmul.mubr.bf16.gmra.mrb[0].mxu0 %v516
        %v1966 = vpop.f32.mrb[0].mxu0
        %v1967 = vadd.f32 0.0, %v1966
        %v1968 = vpop.f32.mrb[0].mxu0
        %v1969 = vpop.f32.mrb[0].mxu0
        %v1970 = vpop.f32.mrb[0].mxu0
        %1971 = vdwg.mxu0
        %v1972 = vpack.c.bf16 %v1967, %v1967
        %s1973 = scalar_lea.vmem %s1, 12
        %v1974 = vld [vmem:[%s1973] sm:$0x3]
        %v1976 = vsel %vm830, %v1974, 0
        %v1979 = vand.u32 %v1972, %v837
        %1981 = vmatprep.subr.bf16.mxu0 0
        %1982 = vmatpush1.bf16.msra.mxu0 %v1979
        %1983 = vmatprep.subr.bf16.mxu0 0
        %1984 = vmatpush1.bf16.msra.mxu0 0
        %1985 = vmatprep.subr.bf16.mxu0 0
        %1986 = vmatpush1.bf16.msra.mxu0 0
        %1987 = vmatprep.subr.bf16.mxu0 0
        %1988 = vmatpush1.bf16.msra.mxu0 0
        %1989 = vmatprep.subr.bf16.mxu0 0
        %1990 = vmatpush1.bf16.msra.mxu0 0
        %1991 = vmatprep.subr.bf16.mxu0 0
        %1992 = vmatpush1.bf16.msra.mxu0 0
        %1993 = vmatprep.subr.bf16.mxu0 0
        %1994 = vmatpush1.bf16.msra.mxu0 0
        %1995 = vmatprep.subr.bf16.mxu0 0
        %1996 = vmatpush1.bf16.msra.mxu0 0
        %1997 = vmatprep.subr.bf16.mxu0 0
        %1998 = vmatpush1.bf16.msra.mxu0 0
        %1999 = vmatprep.subr.bf16.mxu0 0
        %2000 = vmatpush1.bf16.msra.mxu0 0
        %2001 = vmatprep.subr.bf16.mxu0 0
        %2002 = vmatpush1.bf16.msra.mxu0 0
        %2003 = vmatprep.subr.bf16.mxu0 0
        %2004 = vmatpush1.bf16.msra.mxu0 0
        %2005 = vmatprep.subr.bf16.mxu0 0
        %2006 = vmatpush1.bf16.msra.mxu0 0
        %2007 = vmatprep.subr.bf16.mxu0 0
        %2008 = vmatpush1.bf16.msra.mxu0 0
        %2009 = vmatprep.subr.bf16.mxu0 0
        %2010 = vmatpush1.bf16.msra.mxu0 0
        %2011 = vmatprep.subr.bf16.mxu0 0
        %2012 = vmatpush1.bf16.msra.mxu0 0
        %2013 = vmatprep.mubr.bf16.mxu0 0
        %2014 = vmatmul.mubr.bf16.gmra.mrb[0].mxu0 %v1976
        %v2015 = vpop.f32.mrb[0].mxu0
        %v2016 = vadd.f32 0.0, %v2015
        %v2017 = vpop.f32.mrb[0].mxu0
        %v2018 = vpop.f32.mrb[0].mxu0
        %v2019 = vpop.f32.mrb[0].mxu0
        %2020 = vdwg.mxu0
        %v2021 = vadd.f32 %v1802, %v2016
        %s2022 = scalar_lea.vmem %s3, 896
        %v2023 = vld [vmem:[%s2022] sm:$0xf]
        %v2024 = vld [vmem:[%s2022 + $0x4] sm:$0xf]
        %v2025 = vld [vmem:[%s2022 + $0x8] sm:$0xf]
        %v2026 = vld [vmem:[%s2022 + $0xc] sm:$0xf]
        %v2027 = vld [vmem:[%s2022 + $0x10] sm:$0xf]
        %v2028 = vld [vmem:[%s2022 + $0x14] sm:$0xf]
        %v2029 = vld [vmem:[%s2022 + $0x18] sm:$0xf]
        %v2030 = vld [vmem:[%s2022 + $0x1c] sm:$0xf]
        %v2031 = vld [vmem:[%s2022 + $0x20] sm:$0xf]
        %v2032 = vld [vmem:[%s2022 + $0x24] sm:$0xf]
        %v2033 = vld [vmem:[%s2022 + $0x28] sm:$0xf]
        %v2034 = vld [vmem:[%s2022 + $0x2c] sm:$0xf]
        %v2035 = vld [vmem:[%s2022 + $0x30] sm:$0xf]
        %v2036 = vld [vmem:[%s2022 + $0x34] sm:$0xf]
        %v2037 = vld [vmem:[%s2022 + $0x38] sm:$0xf]
        %v2038 = vld [vmem:[%s2022 + $0x3c] sm:$0xf]
        %v2039 = vld [vmem:[%s2022 + $0x40] sm:$0xf]
        %v2040 = vld [vmem:[%s2022 + $0x44] sm:$0xf]
        %v2041 = vld [vmem:[%s2022 + $0x48] sm:$0xf]
        %v2042 = vld [vmem:[%s2022 + $0x4c] sm:$0xf]
        %v2043 = vld [vmem:[%s2022 + $0x50] sm:$0xf]
        %v2044 = vld [vmem:[%s2022 + $0x54] sm:$0xf]
        %v2045 = vld [vmem:[%s2022 + $0x58] sm:$0xf]
        %v2046 = vld [vmem:[%s2022 + $0x5c] sm:$0xf]
        %v2047 = vld [vmem:[%s2022 + $0x60] sm:$0xf]
        %v2048 = vld [vmem:[%s2022 + $0x64] sm:$0xf]
        %v2049 = vld [vmem:[%s2022 + $0x68] sm:$0xf]
        %v2050 = vld [vmem:[%s2022 + $0x6c] sm:$0xf]
        %v2051 = vld [vmem:[%s2022 + $0x70] sm:$0xf]
        %v2052 = vld [vmem:[%s2022 + $0x74] sm:$0xf]
        %v2053 = vld [vmem:[%s2022 + $0x78] sm:$0xf]
        %v2054 = vld [vmem:[%s2022 + $0x7c] sm:$0xf]
        %v2087 = vunpack.c.l.b16 %v2023
        %v2088 = vunpack.c.l.b16 %v2024
        %v2089 = vunpack.c.l.b16 %v2025
        %v2090 = vunpack.c.l.b16 %v2026
        %v2091 = vunpack.c.l.b16 %v2027
        %v2092 = vunpack.c.l.b16 %v2028
        %v2093 = vunpack.c.l.b16 %v2029
        %v2094 = vunpack.c.l.b16 %v2030
        %v2095 = vunpack.c.l.b16 %v2031
        %v2096 = vunpack.c.l.b16 %v2032
        %v2097 = vunpack.c.l.b16 %v2033
        %v2098 = vunpack.c.l.b16 %v2034
        %v2099 = vunpack.c.l.b16 %v2035
        %v2100 = vunpack.c.l.b16 %v2036
        %v2101 = vunpack.c.l.b16 %v2037
        %v2102 = vunpack.c.l.b16 %v2038
        %v2103 = vunpack.c.l.b16 %v2039
        %v2104 = vunpack.c.l.b16 %v2040
        %v2105 = vunpack.c.l.b16 %v2041
        %v2106 = vunpack.c.l.b16 %v2042
        %v2107 = vunpack.c.l.b16 %v2043
        %v2108 = vunpack.c.l.b16 %v2044
        %v2109 = vunpack.c.l.b16 %v2045
        %v2110 = vunpack.c.l.b16 %v2046
        %v2111 = vunpack.c.l.b16 %v2047
        %v2112 = vunpack.c.l.b16 %v2048
        %v2113 = vunpack.c.l.b16 %v2049
        %v2114 = vunpack.c.l.b16 %v2050
        %v2115 = vunpack.c.l.b16 %v2051
        %v2116 = vunpack.c.l.b16 %v2052
        %v2117 = vunpack.c.l.b16 %v2053
        %v2118 = vunpack.c.l.b16 %v2054
        %v2119 = vpack.c.b16 %v2088, %v2087
        %v2120 = vpack.c.b16 %v2090, %v2089
        %v2121 = vpack.c.b16 %v2092, %v2091
        %v2122 = vpack.c.b16 %v2094, %v2093
        %v2123 = vpack.c.b16 %v2096, %v2095
        %v2124 = vpack.c.b16 %v2098, %v2097
        %v2125 = vpack.c.b16 %v2100, %v2099
        %v2126 = vpack.c.b16 %v2102, %v2101
        %v2127 = vpack.c.b16 %v2104, %v2103
        %v2128 = vpack.c.b16 %v2106, %v2105
        %v2129 = vpack.c.b16 %v2108, %v2107
        %v2130 = vpack.c.b16 %v2110, %v2109
        %v2131 = vpack.c.b16 %v2112, %v2111
        %v2132 = vpack.c.b16 %v2114, %v2113
        %v2133 = vpack.c.b16 %v2116, %v2115
        %v2134 = vpack.c.b16 %v2118, %v2117
        %2151 = vmatprep.subr.bf16.mxu0 0
        %2152 = vmatpush1.bf16.msra.mxu0 %v2119
        %2153 = vmatprep.subr.bf16.mxu0 0
        %2154 = vmatpush1.bf16.msra.mxu0 %v2120
        %2155 = vmatprep.subr.bf16.mxu0 0
        %2156 = vmatpush1.bf16.msra.mxu0 %v2121
        %2157 = vmatprep.subr.bf16.mxu0 0
        %2158 = vmatpush1.bf16.msra.mxu0 %v2122
        %2159 = vmatprep.subr.bf16.mxu0 0
        %2160 = vmatpush1.bf16.msra.mxu0 %v2123
        %2161 = vmatprep.subr.bf16.mxu0 0
        %2162 = vmatpush1.bf16.msra.mxu0 %v2124
        %2163 = vmatprep.subr.bf16.mxu0 0
        %2164 = vmatpush1.bf16.msra.mxu0 %v2125
        %2165 = vmatprep.subr.bf16.mxu0 0
        %2166 = vmatpush1.bf16.msra.mxu0 %v2126
        %2167 = vmatprep.subr.bf16.mxu0 0
        %2168 = vmatpush1.bf16.msra.mxu0 %v2127
        %2169 = vmatprep.subr.bf16.mxu0 0
        %2170 = vmatpush1.bf16.msra.mxu0 %v2128
        %2171 = vmatprep.subr.bf16.mxu0 0
        %2172 = vmatpush1.bf16.msra.mxu0 %v2129
        %2173 = vmatprep.subr.bf16.mxu0 0
        %2174 = vmatpush1.bf16.msra.mxu0 %v2130
        %2175 = vmatprep.subr.bf16.mxu0 0
        %2176 = vmatpush1.bf16.msra.mxu0 %v2131
        %2177 = vmatprep.subr.bf16.mxu0 0
        %2178 = vmatpush1.bf16.msra.mxu0 %v2132
        %2179 = vmatprep.subr.bf16.mxu0 0
        %2180 = vmatpush1.bf16.msra.mxu0 %v2133
        %2181 = vmatprep.subr.bf16.mxu0 0
        %2182 = vmatpush1.bf16.msra.mxu0 %v2134
        %2183 = vmatprep.mubr.bf16.mxu0 %v517
        %2184 = vmatmul.mubr.bf16.gmra.mrb[0].mxu0 %v516
        %v2185 = vpop.f32.mrb[0].mxu0
        %v2186 = vadd.f32 0.0, %v2185
        %v2187 = vpop.f32.mrb[0].mxu0
        %v2188 = vpop.f32.mrb[0].mxu0
        %v2189 = vpop.f32.mrb[0].mxu0
        %2190 = vdwg.mxu0
        %v2191 = vpack.c.bf16 %v2186, %v2186
        %s2192 = scalar_lea.vmem %s1, 14
        %v2193 = vld [vmem:[%s2192] sm:$0x3]
        %v2195 = vsel %vm830, %v2193, 0
        %v2198 = vand.u32 %v2191, %v837
        %2200 = vmatprep.subr.bf16.mxu0 0
        %2201 = vmatpush1.bf16.msra.mxu0 %v2198
        %2202 = vmatprep.subr.bf16.mxu0 0
        %2203 = vmatpush1.bf16.msra.mxu0 0
        %2204 = vmatprep.subr.bf16.mxu0 0
        %2205 = vmatpush1.bf16.msra.mxu0 0
        %2206 = vmatprep.subr.bf16.mxu0 0
        %2207 = vmatpush1.bf16.msra.mxu0 0
        %2208 = vmatprep.subr.bf16.mxu0 0
        %2209 = vmatpush1.bf16.msra.mxu0 0
        %2210 = vmatprep.subr.bf16.mxu0 0
        %2211 = vmatpush1.bf16.msra.mxu0 0
        %2212 = vmatprep.subr.bf16.mxu0 0
        %2213 = vmatpush1.bf16.msra.mxu0 0
        %2214 = vmatprep.subr.bf16.mxu0 0
        %2215 = vmatpush1.bf16.msra.mxu0 0
        %2216 = vmatprep.subr.bf16.mxu0 0
        %2217 = vmatpush1.bf16.msra.mxu0 0
        %2218 = vmatprep.subr.bf16.mxu0 0
        %2219 = vmatpush1.bf16.msra.mxu0 0
        %2220 = vmatprep.subr.bf16.mxu0 0
        %2221 = vmatpush1.bf16.msra.mxu0 0
        %2222 = vmatprep.subr.bf16.mxu0 0
        %2223 = vmatpush1.bf16.msra.mxu0 0
        %2224 = vmatprep.subr.bf16.mxu0 0
        %2225 = vmatpush1.bf16.msra.mxu0 0
        %2226 = vmatprep.subr.bf16.mxu0 0
        %2227 = vmatpush1.bf16.msra.mxu0 0
        %2228 = vmatprep.subr.bf16.mxu0 0
        %2229 = vmatpush1.bf16.msra.mxu0 0
        %2230 = vmatprep.subr.bf16.mxu0 0
        %2231 = vmatpush1.bf16.msra.mxu0 0
        %2232 = vmatprep.mubr.bf16.mxu0 0
        %2233 = vmatmul.mubr.bf16.gmra.mrb[0].mxu0 %v2195
        %v2234 = vpop.f32.mrb[0].mxu0
        %v2235 = vadd.f32 0.0, %v2234
        %v2236 = vpop.f32.mrb[0].mxu0
        %v2237 = vpop.f32.mrb[0].mxu0
        %v2238 = vpop.f32.mrb[0].mxu0
        %2239 = vdwg.mxu0
        %v2240 = vadd.f32 %v2021, %v2235
        %s2241 = scalar_lea.vmem %s3, 1024
        %v2242 = vld [vmem:[%s2241] sm:$0xf]
        %v2243 = vld [vmem:[%s2241 + $0x4] sm:$0xf]
        %v2244 = vld [vmem:[%s2241 + $0x8] sm:$0xf]
        %v2245 = vld [vmem:[%s2241 + $0xc] sm:$0xf]
        %v2246 = vld [vmem:[%s2241 + $0x10] sm:$0xf]
        %v2247 = vld [vmem:[%s2241 + $0x14] sm:$0xf]
        %v2248 = vld [vmem:[%s2241 + $0x18] sm:$0xf]
        %v2249 = vld [vmem:[%s2241 + $0x1c] sm:$0xf]
        %v2250 = vld [vmem:[%s2241 + $0x20] sm:$0xf]
        %v2251 = vld [vmem:[%s2241 + $0x24] sm:$0xf]
        %v2252 = vld [vmem:[%s2241 + $0x28] sm:$0xf]
        %v2253 = vld [vmem:[%s2241 + $0x2c] sm:$0xf]
        %v2254 = vld [vmem:[%s2241 + $0x30] sm:$0xf]
        %v2255 = vld [vmem:[%s2241 + $0x34] sm:$0xf]
        %v2256 = vld [vmem:[%s2241 + $0x38] sm:$0xf]
        %v2257 = vld [vmem:[%s2241 + $0x3c] sm:$0xf]
        %v2258 = vld [vmem:[%s2241 + $0x40] sm:$0xf]
        %v2259 = vld [vmem:[%s2241 + $0x44] sm:$0xf]
        %v2260 = vld [vmem:[%s2241 + $0x48] sm:$0xf]
        %v2261 = vld [vmem:[%s2241 + $0x4c] sm:$0xf]
        %v2262 = vld [vmem:[%s2241 + $0x50] sm:$0xf]
        %v2263 = vld [vmem:[%s2241 + $0x54] sm:$0xf]
        %v2264 = vld [vmem:[%s2241 + $0x58] sm:$0xf]
        %v2265 = vld [vmem:[%s2241 + $0x5c] sm:$0xf]
        %v2266 = vld [vmem:[%s2241 + $0x60] sm:$0xf]
        %v2267 = vld [vmem:[%s2241 + $0x64] sm:$0xf]
        %v2268 = vld [vmem:[%s2241 + $0x68] sm:$0xf]
        %v2269 = vld [vmem:[%s2241 + $0x6c] sm:$0xf]
        %v2270 = vld [vmem:[%s2241 + $0x70] sm:$0xf]
        %v2271 = vld [vmem:[%s2241 + $0x74] sm:$0xf]
        %v2272 = vld [vmem:[%s2241 + $0x78] sm:$0xf]
        %v2273 = vld [vmem:[%s2241 + $0x7c] sm:$0xf]
        %v2306 = vunpack.c.l.b16 %v2242
        %v2307 = vunpack.c.l.b16 %v2243
        %v2308 = vunpack.c.l.b16 %v2244
        %v2309 = vunpack.c.l.b16 %v2245
        %v2310 = vunpack.c.l.b16 %v2246
        %v2311 = vunpack.c.l.b16 %v2247
        %v2312 = vunpack.c.l.b16 %v2248
        %v2313 = vunpack.c.l.b16 %v2249
        %v2314 = vunpack.c.l.b16 %v2250
        %v2315 = vunpack.c.l.b16 %v2251
        %v2316 = vunpack.c.l.b16 %v2252
        %v2317 = vunpack.c.l.b16 %v2253
        %v2318 = vunpack.c.l.b16 %v2254
        %v2319 = vunpack.c.l.b16 %v2255
        %v2320 = vunpack.c.l.b16 %v2256
        %v2321 = vunpack.c.l.b16 %v2257
        %v2322 = vunpack.c.l.b16 %v2258
        %v2323 = vunpack.c.l.b16 %v2259
        %v2324 = vunpack.c.l.b16 %v2260
        %v2325 = vunpack.c.l.b16 %v2261
        %v2326 = vunpack.c.l.b16 %v2262
        %v2327 = vunpack.c.l.b16 %v2263
        %v2328 = vunpack.c.l.b16 %v2264
        %v2329 = vunpack.c.l.b16 %v2265
        %v2330 = vunpack.c.l.b16 %v2266
        %v2331 = vunpack.c.l.b16 %v2267
        %v2332 = vunpack.c.l.b16 %v2268
        %v2333 = vunpack.c.l.b16 %v2269
        %v2334 = vunpack.c.l.b16 %v2270
        %v2335 = vunpack.c.l.b16 %v2271
        %v2336 = vunpack.c.l.b16 %v2272
        %v2337 = vunpack.c.l.b16 %v2273
        %v2338 = vpack.c.b16 %v2307, %v2306
        %v2339 = vpack.c.b16 %v2309, %v2308
        %v2340 = vpack.c.b16 %v2311, %v2310
        %v2341 = vpack.c.b16 %v2313, %v2312
        %v2342 = vpack.c.b16 %v2315, %v2314
        %v2343 = vpack.c.b16 %v2317, %v2316
        %v2344 = vpack.c.b16 %v2319, %v2318
        %v2345 = vpack.c.b16 %v2321, %v2320
        %v2346 = vpack.c.b16 %v2323, %v2322
        %v2347 = vpack.c.b16 %v2325, %v2324
        %v2348 = vpack.c.b16 %v2327, %v2326
        %v2349 = vpack.c.b16 %v2329, %v2328
        %v2350 = vpack.c.b16 %v2331, %v2330
        %v2351 = vpack.c.b16 %v2333, %v2332
        %v2352 = vpack.c.b16 %v2335, %v2334
        %v2353 = vpack.c.b16 %v2337, %v2336
        %2370 = vmatprep.subr.bf16.mxu0 0
        %2371 = vmatpush1.bf16.msra.mxu0 %v2338
        %2372 = vmatprep.subr.bf16.mxu0 0
        %2373 = vmatpush1.bf16.msra.mxu0 %v2339
        %2374 = vmatprep.subr.bf16.mxu0 0
        %2375 = vmatpush1.bf16.msra.mxu0 %v2340
        %2376 = vmatprep.subr.bf16.mxu0 0
        %2377 = vmatpush1.bf16.msra.mxu0 %v2341
        %2378 = vmatprep.subr.bf16.mxu0 0
        %2379 = vmatpush1.bf16.msra.mxu0 %v2342
        %2380 = vmatprep.subr.bf16.mxu0 0
        %2381 = vmatpush1.bf16.msra.mxu0 %v2343
        %2382 = vmatprep.subr.bf16.mxu0 0
        %2383 = vmatpush1.bf16.msra.mxu0 %v2344
        %2384 = vmatprep.subr.bf16.mxu0 0
        %2385 = vmatpush1.bf16.msra.mxu0 %v2345
        %2386 = vmatprep.subr.bf16.mxu0 0
        %2387 = vmatpush1.bf16.msra.mxu0 %v2346
        %2388 = vmatprep.subr.bf16.mxu0 0
        %2389 = vmatpush1.bf16.msra.mxu0 %v2347
        %2390 = vmatprep.subr.bf16.mxu0 0
        %2391 = vmatpush1.bf16.msra.mxu0 %v2348
        %2392 = vmatprep.subr.bf16.mxu0 0
        %2393 = vmatpush1.bf16.msra.mxu0 %v2349
        %2394 = vmatprep.subr.bf16.mxu0 0
        %2395 = vmatpush1.bf16.msra.mxu0 %v2350
        %2396 = vmatprep.subr.bf16.mxu0 0
        %2397 = vmatpush1.bf16.msra.mxu0 %v2351
        %2398 = vmatprep.subr.bf16.mxu0 0
        %2399 = vmatpush1.bf16.msra.mxu0 %v2352
        %2400 = vmatprep.subr.bf16.mxu0 0
        %2401 = vmatpush1.bf16.msra.mxu0 %v2353
        %2402 = vmatprep.mubr.bf16.mxu0 %v517
        %2403 = vmatmul.mubr.bf16.gmra.mrb[0].mxu0 %v516
        %v2404 = vpop.f32.mrb[0].mxu0
        %v2405 = vadd.f32 0.0, %v2404
        %v2406 = vpop.f32.mrb[0].mxu0
        %v2407 = vpop.f32.mrb[0].mxu0
        %v2408 = vpop.f32.mrb[0].mxu0
        %2409 = vdwg.mxu0
        %v2410 = vpack.c.bf16 %v2405, %v2405
        %s2411 = scalar_lea.vmem %s1, 16
        %v2412 = vld [vmem:[%s2411] sm:$0x3]
        %v2414 = vsel %vm830, %v2412, 0
        %v2417 = vand.u32 %v2410, %v837
        %2419 = vmatprep.subr.bf16.mxu0 0
        %2420 = vmatpush1.bf16.msra.mxu0 %v2417
        %2421 = vmatprep.subr.bf16.mxu0 0
        %2422 = vmatpush1.bf16.msra.mxu0 0
        %2423 = vmatprep.subr.bf16.mxu0 0
        %2424 = vmatpush1.bf16.msra.mxu0 0
        %2425 = vmatprep.subr.bf16.mxu0 0
        %2426 = vmatpush1.bf16.msra.mxu0 0
        %2427 = vmatprep.subr.bf16.mxu0 0
        %2428 = vmatpush1.bf16.msra.mxu0 0
        %2429 = vmatprep.subr.bf16.mxu0 0
        %2430 = vmatpush1.bf16.msra.mxu0 0
        %2431 = vmatprep.subr.bf16.mxu0 0
        %2432 = vmatpush1.bf16.msra.mxu0 0
        %2433 = vmatprep.subr.bf16.mxu0 0
        %2434 = vmatpush1.bf16.msra.mxu0 0
        %2435 = vmatprep.subr.bf16.mxu0 0
        %2436 = vmatpush1.bf16.msra.mxu0 0
        %2437 = vmatprep.subr.bf16.mxu0 0
        %2438 = vmatpush1.bf16.msra.mxu0 0
        %2439 = vmatprep.subr.bf16.mxu0 0
        %2440 = vmatpush1.bf16.msra.mxu0 0
        %2441 = vmatprep.subr.bf16.mxu0 0
        %2442 = vmatpush1.bf16.msra.mxu0 0
        %2443 = vmatprep.subr.bf16.mxu0 0
        %2444 = vmatpush1.bf16.msra.mxu0 0
        %2445 = vmatprep.subr.bf16.mxu0 0
        %2446 = vmatpush1.bf16.msra.mxu0 0
        %2447 = vmatprep.subr.bf16.mxu0 0
        %2448 = vmatpush1.bf16.msra.mxu0 0
        %2449 = vmatprep.subr.bf16.mxu0 0
        %2450 = vmatpush1.bf16.msra.mxu0 0
        %2451 = vmatprep.mubr.bf16.mxu0 0
        %2452 = vmatmul.mubr.bf16.gmra.mrb[0].mxu0 %v2414
        %v2453 = vpop.f32.mrb[0].mxu0
        %v2454 = vadd.f32 0.0, %v2453
        %v2455 = vpop.f32.mrb[0].mxu0
        %v2456 = vpop.f32.mrb[0].mxu0
        %v2457 = vpop.f32.mrb[0].mxu0
        %2458 = vdwg.mxu0
        %v2459 = vadd.f32 %v2240, %v2454
        %v2460 = vld [vmem:[%s2] sm:$0xf]
        %2462 = vset.pattern.permute.xlu0 0
        %2463 = vperm.xlu0 %2462, %v2460
        %v2464 = vpop.permute.xlu0 %2463
        %v2466 = vadd.f32 %v2459, %v2464
        %v2467 = vmax.f32 %v2466, 0.0
        %v2468 = vpack.c.bf16 %v2467, %v2467
        %v2469 = vld [vmem:[%s6] sm:$0xf]
        %v2470 = vld [vmem:[%s6 + $0x4] sm:$0xf]
        %v2471 = vld [vmem:[%s6 + $0x8] sm:$0xf]
        %v2472 = vld [vmem:[%s6 + $0xc] sm:$0xf]
        %v2473 = vld [vmem:[%s6 + $0x10] sm:$0xf]
        %v2474 = vld [vmem:[%s6 + $0x14] sm:$0xf]
        %v2475 = vld [vmem:[%s6 + $0x18] sm:$0x1]
        %v2483 = vunpack.c.l.b16 %v2469
        %v2484 = vunpack.c.l.b16 %v2470
        %v2485 = vunpack.c.l.b16 %v2471
        %v2486 = vunpack.c.l.b16 %v2472
        %v2487 = vunpack.c.l.b16 %v2473
        %v2488 = vunpack.c.l.b16 %v2474
        %v2489 = vunpack.c.l.b16 %v2475
        %v2490 = vpack.c.b16 %v2484, %v2483
        %v2491 = vpack.c.b16 %v2486, %v2485
        %v2492 = vpack.c.b16 %v2488, %v2487
        %v2493 = vpack.c.b16 %v2489, %v2489
        %vm2497 = vcmask 400384
        %v2499 = vsel %vm2497, %v2468, 0
        %v2501 = vsel 0, 4294967295, 65535
        %v2502 = vsel %vm834, %v2501, 0
        %v2504 = vand.u32 %v2493, %v2502
        %2506 = vmatprep.subr.bf16.mxu0 0
        %2507 = vmatpush1.bf16.msra.mxu0 %v2490
        %2508 = vmatprep.subr.bf16.mxu0 0
        %2509 = vmatpush1.bf16.msra.mxu0 %v2491
        %2510 = vmatprep.subr.bf16.mxu0 0
        %2511 = vmatpush1.bf16.msra.mxu0 %v2492
        %2512 = vmatprep.subr.bf16.mxu0 0
        %2513 = vmatpush1.bf16.msra.mxu0 %v2504
        %2514 = vmatprep.subr.bf16.mxu0 0
        %2515 = vmatpush1.bf16.msra.mxu0 0
        %2516 = vmatprep.subr.bf16.mxu0 0
        %2517 = vmatpush1.bf16.msra.mxu0 0
        %2518 = vmatprep.subr.bf16.mxu0 0
        %2519 = vmatpush1.bf16.msra.mxu0 0
        %2520 = vmatprep.subr.bf16.mxu0 0
        %2521 = vmatpush1.bf16.msra.mxu0 0
        %2522 = vmatprep.subr.bf16.mxu0 0
        %2523 = vmatpush1.bf16.msra.mxu0 0
        %2524 = vmatprep.subr.bf16.mxu0 0
        %2525 = vmatpush1.bf16.msra.mxu0 0
        %2526 = vmatprep.subr.bf16.mxu0 0
        %2527 = vmatpush1.bf16.msra.mxu0 0
        %2528 = vmatprep.subr.bf16.mxu0 0
        %2529 = vmatpush1.bf16.msra.mxu0 0
        %2530 = vmatprep.subr.bf16.mxu0 0
        %2531 = vmatpush1.bf16.msra.mxu0 0
        %2532 = vmatprep.subr.bf16.mxu0 0
        %2533 = vmatpush1.bf16.msra.mxu0 0
        %2534 = vmatprep.subr.bf16.mxu0 0
        %2535 = vmatpush1.bf16.msra.mxu0 0
        %2536 = vmatprep.subr.bf16.mxu0 0
        %2537 = vmatpush1.bf16.msra.mxu0 0
        %2538 = vmatprep.mubr.bf16.mxu0 0
        %2539 = vmatmul.mubr.bf16.gmra.mrb[0].mxu0 %v2499
        %v2540 = vpop.f32.mrb[0].mxu0
        %v2541 = vadd.f32 0.0, %v2540
        %v2542 = vpop.f32.mrb[0].mxu0
        %v2543 = vpop.f32.mrb[0].mxu0
        %v2544 = vpop.f32.mrb[0].mxu0
        %2545 = vdwg.mxu0
        %v2546 = vpack.c.bf16 %v2541, %v2541
        %v2547 = vld [vmem:[%s4] sm:$0xf]
        %s2548 = scalar_lea.vmem %s6, 28
        %v2549 = vld [vmem:[%s2548] sm:$0xf]
        %v2550 = vld [vmem:[%s2548 + $0x4] sm:$0xf]
        %v2551 = vld [vmem:[%s2548 + $0x8] sm:$0xf]
        %v2552 = vld [vmem:[%s2548 + $0xc] sm:$0xf]
        %v2553 = vld [vmem:[%s2548 + $0x10] sm:$0xf]
        %v2554 = vld [vmem:[%s2548 + $0x14] sm:$0xf]
        %v2555 = vld [vmem:[%s2548 + $0x18] sm:$0x1]
        %v2563 = vunpack.c.l.b16 %v2549
        %v2564 = vunpack.c.l.b16 %v2550
        %v2565 = vunpack.c.l.b16 %v2551
        %v2566 = vunpack.c.l.b16 %v2552
        %v2567 = vunpack.c.l.b16 %v2553
        %v2568 = vunpack.c.l.b16 %v2554
        %v2569 = vunpack.c.l.b16 %v2555
        %v2570 = vpack.c.b16 %v2564, %v2563
        %v2571 = vpack.c.b16 %v2566, %v2565
        %v2572 = vpack.c.b16 %v2568, %v2567
        %v2573 = vpack.c.b16 %v2569, %v2569
        %v2578 = vand.u32 %v2573, %v2502
        %2580 = vmatprep.subr.bf16.mxu0 0
        %2581 = vmatpush1.bf16.msra.mxu0 %v2570
        %2582 = vmatprep.subr.bf16.mxu0 0
        %2583 = vmatpush1.bf16.msra.mxu0 %v2571
        %2584 = vmatprep.subr.bf16.mxu0 0
        %2585 = vmatpush1.bf16.msra.mxu0 %v2572
        %2586 = vmatprep.subr.bf16.mxu0 0
        %2587 = vmatpush1.bf16.msra.mxu0 %v2578
        %2588 = vmatprep.subr.bf16.mxu0 0
        %2589 = vmatpush1.bf16.msra.mxu0 0
        %2590 = vmatprep.subr.bf16.mxu0 0
        %2591 = vmatpush1.bf16.msra.mxu0 0
        %2592 = vmatprep.subr.bf16.mxu0 0
        %2593 = vmatpush1.bf16.msra.mxu0 0
        %2594 = vmatprep.subr.bf16.mxu0 0
        %2595 = vmatpush1.bf16.msra.mxu0 0
        %2596 = vmatprep.subr.bf16.mxu0 0
        %2597 = vmatpush1.bf16.msra.mxu0 0
        %2598 = vmatprep.subr.bf16.mxu0 0
        %2599 = vmatpush1.bf16.msra.mxu0 0
        %2600 = vmatprep.subr.bf16.mxu0 0
        %2601 = vmatpush1.bf16.msra.mxu0 0
        %2602 = vmatprep.subr.bf16.mxu0 0
        %2603 = vmatpush1.bf16.msra.mxu0 0
        %2604 = vmatprep.subr.bf16.mxu0 0
        %2605 = vmatpush1.bf16.msra.mxu0 0
        %2606 = vmatprep.subr.bf16.mxu0 0
        %2607 = vmatpush1.bf16.msra.mxu0 0
        %2608 = vmatprep.subr.bf16.mxu0 0
        %2609 = vmatpush1.bf16.msra.mxu0 0
        %2610 = vmatprep.subr.bf16.mxu0 0
        %2611 = vmatpush1.bf16.msra.mxu0 0
        %2612 = vmatprep.mubr.bf16.mxu0 0
        %2613 = vmatmul.mubr.bf16.gmra.mrb[0].mxu0 %v2499
        %v2614 = vpop.f32.mrb[0].mxu0
        %v2615 = vadd.f32 0.0, %v2614
        %v2616 = vpop.f32.mrb[0].mxu0
        %v2617 = vpop.f32.mrb[0].mxu0
        %v2618 = vpop.f32.mrb[0].mxu0
        %2619 = vdwg.mxu0
        %v2620 = vpack.c.bf16 %v2615, %v2615
        %s2621 = scalar_lea.vmem %s4, 4
        %v2622 = vld [vmem:[%s2621] sm:$0xf]
        %vm2623 = vcmask 31744
        %v2625 = vsel %vm2623, %v2622, 0
        %v2628 = vsel %vm835, %v2620, 0
        %2630 = vmatprep.subr.bf16.mxu0 0
        %2631 = vmatpush1.bf16.msra.mxu0 %v2628
        %2632 = vmatprep.subr.bf16.mxu0 0
        %2633 = vmatpush1.bf16.msra.mxu0 0
        %2634 = vmatprep.subr.bf16.mxu0 0
        %2635 = vmatpush1.bf16.msra.mxu0 0
        %2636 = vmatprep.subr.bf16.mxu0 0
        %2637 = vmatpush1.bf16.msra.mxu0 0
        %2638 = vmatprep.subr.bf16.mxu0 0
        %2639 = vmatpush1.bf16.msra.mxu0 0
        %2640 = vmatprep.subr.bf16.mxu0 0
        %2641 = vmatpush1.bf16.msra.mxu0 0
        %2642 = vmatprep.subr.bf16.mxu0 0
        %2643 = vmatpush1.bf16.msra.mxu0 0
        %2644 = vmatprep.subr.bf16.mxu0 0
        %2645 = vmatpush1.bf16.msra.mxu0 0
        %2646 = vmatprep.subr.bf16.mxu0 0
        %2647 = vmatpush1.bf16.msra.mxu0 0
        %2648 = vmatprep.subr.bf16.mxu0 0
        %2649 = vmatpush1.bf16.msra.mxu0 0
        %2650 = vmatprep.subr.bf16.mxu0 0
        %2651 = vmatpush1.bf16.msra.mxu0 0
        %2652 = vmatprep.subr.bf16.mxu0 0
        %2653 = vmatpush1.bf16.msra.mxu0 0
        %2654 = vmatprep.subr.bf16.mxu0 0
        %2655 = vmatpush1.bf16.msra.mxu0 0
        %2656 = vmatprep.subr.bf16.mxu0 0
        %2657 = vmatpush1.bf16.msra.mxu0 0
        %2658 = vmatprep.subr.bf16.mxu0 0
        %2659 = vmatpush1.bf16.msra.mxu0 0
        %2660 = vmatprep.subr.bf16.mxu0 0
        %2661 = vmatpush1.bf16.msra.mxu0 0
        %2662 = vmatprep.mubr.bf16.mxu0 0
        %2663 = vmatmul.mubr.bf16.gmra.mrb[0].mxu0 %v2625
        %v2664 = vpop.f32.mrb[0].mxu0
        %v2665 = vadd.f32 0.0, %v2664
        %v2666 = vpop.f32.mrb[0].mxu0
        %v2667 = vpop.f32.mrb[0].mxu0
        %v2668 = vpop.f32.mrb[0].mxu0
        %2669 = vdwg.mxu0
        %v2671 = vsel %vm2623, %v2547, 0
        %v2674 = vsel %vm835, %v2546, 0
        %2676 = vmatprep.subr.bf16.mxu0 0
        %2677 = vmatpush1.bf16.msra.mxu0 %v2674
        %2678 = vmatprep.subr.bf16.mxu0 0
        %2679 = vmatpush1.bf16.msra.mxu0 0
        %2680 = vmatprep.subr.bf16.mxu0 0
        %2681 = vmatpush1.bf16.msra.mxu0 0
        %2682 = vmatprep.subr.bf16.mxu0 0
        %2683 = vmatpush1.bf16.msra.mxu0 0
        %2684 = vmatprep.subr.bf16.mxu0 0
        %2685 = vmatpush1.bf16.msra.mxu0 0
        %2686 = vmatprep.subr.bf16.mxu0 0
        %2687 = vmatpush1.bf16.msra.mxu0 0
        %2688 = vmatprep.subr.bf16.mxu0 0
        %2689 = vmatpush1.bf16.msra.mxu0 0
        %2690 = vmatprep.subr.bf16.mxu0 0
        %2691 = vmatpush1.bf16.msra.mxu0 0
        %2692 = vmatprep.subr.bf16.mxu0 0
        %2693 = vmatpush1.bf16.msra.mxu0 0
        %2694 = vmatprep.subr.bf16.mxu0 0
        %2695 = vmatpush1.bf16.msra.mxu0 0
        %2696 = vmatprep.subr.bf16.mxu0 0
        %2697 = vmatpush1.bf16.msra.mxu0 0
        %2698 = vmatprep.subr.bf16.mxu0 0
        %2699 = vmatpush1.bf16.msra.mxu0 0
        %2700 = vmatprep.subr.bf16.mxu0 0
        %2701 = vmatpush1.bf16.msra.mxu0 0
        %2702 = vmatprep.subr.bf16.mxu0 0
        %2703 = vmatpush1.bf16.msra.mxu0 0
        %2704 = vmatprep.subr.bf16.mxu0 0
        %2705 = vmatpush1.bf16.msra.mxu0 0
        %2706 = vmatprep.subr.bf16.mxu0 0
        %2707 = vmatpush1.bf16.msra.mxu0 0
        %2708 = vmatprep.mubr.bf16.mxu0 0
        %2709 = vmatmul.mubr.bf16.gmra.mrb[0].mxu0 %v2671
        %v2710 = vpop.f32.mrb[0].mxu0
        %v2711 = vadd.f32 %v2665, %v2710
        %v2712 = vpop.f32.mrb[0].mxu0
        %v2713 = vpop.f32.mrb[0].mxu0
        %v2714 = vpop.f32.mrb[0].mxu0
        %2715 = vdwg.mxu0
        %s2716 = scalar_lea.vmem %s6, 56
        %v2717 = vld [vmem:[%s2716] sm:$0xf]
        %v2718 = vld [vmem:[%s2716 + $0x4] sm:$0xf]
        %v2719 = vld [vmem:[%s2716 + $0x8] sm:$0xf]
        %v2720 = vld [vmem:[%s2716 + $0xc] sm:$0xf]
        %v2721 = vld [vmem:[%s2716 + $0x10] sm:$0xf]
        %v2722 = vld [vmem:[%s2716 + $0x14] sm:$0xf]
        %v2723 = vld [vmem:[%s2716 + $0x18] sm:$0x1]
        %v2731 = vunpack.c.l.b16 %v2717
        %v2732 = vunpack.c.l.b16 %v2718
        %v2733 = vunpack.c.l.b16 %v2719
        %v2734 = vunpack.c.l.b16 %v2720
        %v2735 = vunpack.c.l.b16 %v2721
        %v2736 = vunpack.c.l.b16 %v2722
        %v2737 = vunpack.c.l.b16 %v2723
        %v2738 = vpack.c.b16 %v2732, %v2731
        %v2739 = vpack.c.b16 %v2734, %v2733
        %v2740 = vpack.c.b16 %v2736, %v2735
        %v2741 = vpack.c.b16 %v2737, %v2737
        %v2746 = vand.u32 %v2741, %v2502
        %2748 = vmatprep.subr.bf16.mxu0 0
        %2749 = vmatpush1.bf16.msra.mxu0 %v2738
        %2750 = vmatprep.subr.bf16.mxu0 0
        %2751 = vmatpush1.bf16.msra.mxu0 %v2739
        %2752 = vmatprep.subr.bf16.mxu0 0
        %2753 = vmatpush1.bf16.msra.mxu0 %v2740
        %2754 = vmatprep.subr.bf16.mxu0 0
        %2755 = vmatpush1.bf16.msra.mxu0 %v2746
        %2756 = vmatprep.subr.bf16.mxu0 0
        %2757 = vmatpush1.bf16.msra.mxu0 0
        %2758 = vmatprep.subr.bf16.mxu0 0
        %2759 = vmatpush1.bf16.msra.mxu0 0
        %2760 = vmatprep.subr.bf16.mxu0 0
        %2761 = vmatpush1.bf16.msra.mxu0 0
        %2762 = vmatprep.subr.bf16.mxu0 0
        %2763 = vmatpush1.bf16.msra.mxu0 0
        %2764 = vmatprep.subr.bf16.mxu0 0
        %2765 = vmatpush1.bf16.msra.mxu0 0
        %2766 = vmatprep.subr.bf16.mxu0 0
        %2767 = vmatpush1.bf16.msra.mxu0 0
        %2768 = vmatprep.subr.bf16.mxu0 0
        %2769 = vmatpush1.bf16.msra.mxu0 0
        %2770 = vmatprep.subr.bf16.mxu0 0
        %2771 = vmatpush1.bf16.msra.mxu0 0
        %2772 = vmatprep.subr.bf16.mxu0 0
        %2773 = vmatpush1.bf16.msra.mxu0 0
        %2774 = vmatprep.subr.bf16.mxu0 0
        %2775 = vmatpush1.bf16.msra.mxu0 0
        %2776 = vmatprep.subr.bf16.mxu0 0
        %2777 = vmatpush1.bf16.msra.mxu0 0
        %2778 = vmatprep.subr.bf16.mxu0 0
        %2779 = vmatpush1.bf16.msra.mxu0 0
        %2780 = vmatprep.mubr.bf16.mxu0 0
        %2781 = vmatmul.mubr.bf16.gmra.mrb[0].mxu0 %v2499
        %v2782 = vpop.f32.mrb[0].mxu0
        %v2783 = vadd.f32 0.0, %v2782
        %v2784 = vpop.f32.mrb[0].mxu0
        %v2785 = vpop.f32.mrb[0].mxu0
        %v2786 = vpop.f32.mrb[0].mxu0
        %2787 = vdwg.mxu0
        %v2788 = vpack.c.bf16 %v2783, %v2783
        %s2789 = scalar_lea.vmem %s4, 8
        %v2790 = vld [vmem:[%s2789] sm:$0xf]
        %v2792 = vsel %vm2623, %v2790, 0
        %v2795 = vsel %vm835, %v2788, 0
        %2797 = vmatprep.subr.bf16.mxu0 0
        %2798 = vmatpush1.bf16.msra.mxu0 %v2795
        %2799 = vmatprep.subr.bf16.mxu0 0
        %2800 = vmatpush1.bf16.msra.mxu0 0
        %2801 = vmatprep.subr.bf16.mxu0 0
        %2802 = vmatpush1.bf16.msra.mxu0 0
        %2803 = vmatprep.subr.bf16.mxu0 0
        %2804 = vmatpush1.bf16.msra.mxu0 0
        %2805 = vmatprep.subr.bf16.mxu0 0
        %2806 = vmatpush1.bf16.msra.mxu0 0
        %2807 = vmatprep.subr.bf16.mxu0 0
        %2808 = vmatpush1.bf16.msra.mxu0 0
        %2809 = vmatprep.subr.bf16.mxu0 0
        %2810 = vmatpush1.bf16.msra.mxu0 0
        %2811 = vmatprep.subr.bf16.mxu0 0
        %2812 = vmatpush1.bf16.msra.mxu0 0
        %2813 = vmatprep.subr.bf16.mxu0 0
        %2814 = vmatpush1.bf16.msra.mxu0 0
        %2815 = vmatprep.subr.bf16.mxu0 0
        %2816 = vmatpush1.bf16.msra.mxu0 0
        %2817 = vmatprep.subr.bf16.mxu0 0
        %2818 = vmatpush1.bf16.msra.mxu0 0
        %2819 = vmatprep.subr.bf16.mxu0 0
        %2820 = vmatpush1.bf16.msra.mxu0 0
        %2821 = vmatprep.subr.bf16.mxu0 0
        %2822 = vmatpush1.bf16.msra.mxu0 0
        %2823 = vmatprep.subr.bf16.mxu0 0
        %2824 = vmatpush1.bf16.msra.mxu0 0
        %2825 = vmatprep.subr.bf16.mxu0 0
        %2826 = vmatpush1.bf16.msra.mxu0 0
        %2827 = vmatprep.subr.bf16.mxu0 0
        %2828 = vmatpush1.bf16.msra.mxu0 0
        %2829 = vmatprep.mubr.bf16.mxu0 0
        %2830 = vmatmul.mubr.bf16.gmra.mrb[0].mxu0 %v2792
        %v2831 = vpop.f32.mrb[0].mxu0
        %v2832 = vadd.f32 0.0, %v2831
        %v2833 = vpop.f32.mrb[0].mxu0
        %v2834 = vpop.f32.mrb[0].mxu0
        %v2835 = vpop.f32.mrb[0].mxu0
        %2836 = vdwg.mxu0
        %v2837 = vadd.f32 %v2711, %v2832
        %s2838 = scalar_lea.vmem %s6, 84
        %v2839 = vld [vmem:[%s2838] sm:$0xf]
        %v2840 = vld [vmem:[%s2838 + $0x4] sm:$0xf]
        %v2841 = vld [vmem:[%s2838 + $0x8] sm:$0xf]
        %v2842 = vld [vmem:[%s2838 + $0xc] sm:$0xf]
        %v2843 = vld [vmem:[%s2838 + $0x10] sm:$0xf]
        %v2844 = vld [vmem:[%s2838 + $0x14] sm:$0xf]
        %v2845 = vld [vmem:[%s2838 + $0x18] sm:$0x1]
        %v2853 = vunpack.c.l.b16 %v2839
        %v2854 = vunpack.c.l.b16 %v2840
        %v2855 = vunpack.c.l.b16 %v2841
        %v2856 = vunpack.c.l.b16 %v2842
        %v2857 = vunpack.c.l.b16 %v2843
        %v2858 = vunpack.c.l.b16 %v2844
        %v2859 = vunpack.c.l.b16 %v2845
        %v2860 = vpack.c.b16 %v2854, %v2853
        %v2861 = vpack.c.b16 %v2856, %v2855
        %v2862 = vpack.c.b16 %v2858, %v2857
        %v2863 = vpack.c.b16 %v2859, %v2859
        %v2868 = vand.u32 %v2863, %v2502
        %2870 = vmatprep.subr.bf16.mxu0 0
        %2871 = vmatpush1.bf16.msra.mxu0 %v2860
        %2872 = vmatprep.subr.bf16.mxu0 0
        %2873 = vmatpush1.bf16.msra.mxu0 %v2861
        %2874 = vmatprep.subr.bf16.mxu0 0
        %2875 = vmatpush1.bf16.msra.mxu0 %v2862
        %2876 = vmatprep.subr.bf16.mxu0 0
        %2877 = vmatpush1.bf16.msra.mxu0 %v2868
        %2878 = vmatprep.subr.bf16.mxu0 0
        %2879 = vmatpush1.bf16.msra.mxu0 0
        %2880 = vmatprep.subr.bf16.mxu0 0
        %2881 = vmatpush1.bf16.msra.mxu0 0
        %2882 = vmatprep.subr.bf16.mxu0 0
        %2883 = vmatpush1.bf16.msra.mxu0 0
        %2884 = vmatprep.subr.bf16.mxu0 0
        %2885 = vmatpush1.bf16.msra.mxu0 0
        %2886 = vmatprep.subr.bf16.mxu0 0
        %2887 = vmatpush1.bf16.msra.mxu0 0
        %2888 = vmatprep.subr.bf16.mxu0 0
        %2889 = vmatpush1.bf16.msra.mxu0 0
        %2890 = vmatprep.subr.bf16.mxu0 0
        %2891 = vmatpush1.bf16.msra.mxu0 0
        %2892 = vmatprep.subr.bf16.mxu0 0
        %2893 = vmatpush1.bf16.msra.mxu0 0
        %2894 = vmatprep.subr.bf16.mxu0 0
        %2895 = vmatpush1.bf16.msra.mxu0 0
        %2896 = vmatprep.subr.bf16.mxu0 0
        %2897 = vmatpush1.bf16.msra.mxu0 0
        %2898 = vmatprep.subr.bf16.mxu0 0
        %2899 = vmatpush1.bf16.msra.mxu0 0
        %2900 = vmatprep.subr.bf16.mxu0 0
        %2901 = vmatpush1.bf16.msra.mxu0 0
        %2902 = vmatprep.mubr.bf16.mxu0 0
        %2903 = vmatmul.mubr.bf16.gmra.mrb[0].mxu0 %v2499
        %v2904 = vpop.f32.mrb[0].mxu0
        %v2905 = vadd.f32 0.0, %v2904
        %v2906 = vpop.f32.mrb[0].mxu0
        %v2907 = vpop.f32.mrb[0].mxu0
        %v2908 = vpop.f32.mrb[0].mxu0
        %2909 = vdwg.mxu0
        %v2910 = vpack.c.bf16 %v2905, %v2905
        %s2911 = scalar_lea.vmem %s4, 12
        %v2912 = vld [vmem:[%s2911] sm:$0xf]
        %v2914 = vsel %vm2623, %v2912, 0
        %v2917 = vsel %vm835, %v2910, 0
        %2919 = vmatprep.subr.bf16.mxu0 0
        %2920 = vmatpush1.bf16.msra.mxu0 %v2917
        %2921 = vmatprep.subr.bf16.mxu0 0
        %2922 = vmatpush1.bf16.msra.mxu0 0
        %2923 = vmatprep.subr.bf16.mxu0 0
        %2924 = vmatpush1.bf16.msra.mxu0 0
        %2925 = vmatprep.subr.bf16.mxu0 0
        %2926 = vmatpush1.bf16.msra.mxu0 0
        %2927 = vmatprep.subr.bf16.mxu0 0
        %2928 = vmatpush1.bf16.msra.mxu0 0
        %2929 = vmatprep.subr.bf16.mxu0 0
        %2930 = vmatpush1.bf16.msra.mxu0 0
        %2931 = vmatprep.subr.bf16.mxu0 0
        %2932 = vmatpush1.bf16.msra.mxu0 0
        %2933 = vmatprep.subr.bf16.mxu0 0
        %2934 = vmatpush1.bf16.msra.mxu0 0
        %2935 = vmatprep.subr.bf16.mxu0 0
        %2936 = vmatpush1.bf16.msra.mxu0 0
        %2937 = vmatprep.subr.bf16.mxu0 0
        %2938 = vmatpush1.bf16.msra.mxu0 0
        %2939 = vmatprep.subr.bf16.mxu0 0
        %2940 = vmatpush1.bf16.msra.mxu0 0
        %2941 = vmatprep.subr.bf16.mxu0 0
        %2942 = vmatpush1.bf16.msra.mxu0 0
        %2943 = vmatprep.subr.bf16.mxu0 0
        %2944 = vmatpush1.bf16.msra.mxu0 0
        %2945 = vmatprep.subr.bf16.mxu0 0
        %2946 = vmatpush1.bf16.msra.mxu0 0
        %2947 = vmatprep.subr.bf16.mxu0 0
        %2948 = vmatpush1.bf16.msra.mxu0 0
        %2949 = vmatprep.subr.bf16.mxu0 0
        %2950 = vmatpush1.bf16.msra.mxu0 0
        %2951 = vmatprep.mubr.bf16.mxu0 0
        %2952 = vmatmul.mubr.bf16.gmra.mrb[0].mxu0 %v2914
        %v2953 = vpop.f32.mrb[0].mxu0
        %v2954 = vadd.f32 0.0, %v2953
        %v2955 = vpop.f32.mrb[0].mxu0
        %v2956 = vpop.f32.mrb[0].mxu0
        %v2957 = vpop.f32.mrb[0].mxu0
        %2958 = vdwg.mxu0
        %v2959 = vadd.f32 %v2837, %v2954
        %s2960 = scalar_lea.vmem %s6, 112
        %v2961 = vld [vmem:[%s2960] sm:$0xf]
        %v2962 = vld [vmem:[%s2960 + $0x4] sm:$0xf]
        %v2963 = vld [vmem:[%s2960 + $0x8] sm:$0xf]
        %v2964 = vld [vmem:[%s2960 + $0xc] sm:$0xf]
        %v2965 = vld [vmem:[%s2960 + $0x10] sm:$0xf]
        %v2966 = vld [vmem:[%s2960 + $0x14] sm:$0xf]
        %v2967 = vld [vmem:[%s2960 + $0x18] sm:$0x1]
        %v2975 = vunpack.c.l.b16 %v2961
        %v2976 = vunpack.c.l.b16 %v2962
        %v2977 = vunpack.c.l.b16 %v2963
        %v2978 = vunpack.c.l.b16 %v2964
        %v2979 = vunpack.c.l.b16 %v2965
        %v2980 = vunpack.c.l.b16 %v2966
        %v2981 = vunpack.c.l.b16 %v2967
        %v2982 = vpack.c.b16 %v2976, %v2975
        %v2983 = vpack.c.b16 %v2978, %v2977
        %v2984 = vpack.c.b16 %v2980, %v2979
        %v2985 = vpack.c.b16 %v2981, %v2981
        %v2990 = vand.u32 %v2985, %v2502
        %2992 = vmatprep.subr.bf16.mxu0 0
        %2993 = vmatpush1.bf16.msra.mxu0 %v2982
        %2994 = vmatprep.subr.bf16.mxu0 0
        %2995 = vmatpush1.bf16.msra.mxu0 %v2983
        %2996 = vmatprep.subr.bf16.mxu0 0
        %2997 = vmatpush1.bf16.msra.mxu0 %v2984
        %2998 = vmatprep.subr.bf16.mxu0 0
        %2999 = vmatpush1.bf16.msra.mxu0 %v2990
        %3000 = vmatprep.subr.bf16.mxu0 0
        %3001 = vmatpush1.bf16.msra.mxu0 0
        %3002 = vmatprep.subr.bf16.mxu0 0
        %3003 = vmatpush1.bf16.msra.mxu0 0
        %3004 = vmatprep.subr.bf16.mxu0 0
        %3005 = vmatpush1.bf16.msra.mxu0 0
        %3006 = vmatprep.subr.bf16.mxu0 0
        %3007 = vmatpush1.bf16.msra.mxu0 0
        %3008 = vmatprep.subr.bf16.mxu0 0
        %3009 = vmatpush1.bf16.msra.mxu0 0
        %3010 = vmatprep.subr.bf16.mxu0 0
        %3011 = vmatpush1.bf16.msra.mxu0 0
        %3012 = vmatprep.subr.bf16.mxu0 0
        %3013 = vmatpush1.bf16.msra.mxu0 0
        %3014 = vmatprep.subr.bf16.mxu0 0
        %3015 = vmatpush1.bf16.msra.mxu0 0
        %3016 = vmatprep.subr.bf16.mxu0 0
        %3017 = vmatpush1.bf16.msra.mxu0 0
        %3018 = vmatprep.subr.bf16.mxu0 0
        %3019 = vmatpush1.bf16.msra.mxu0 0
        %3020 = vmatprep.subr.bf16.mxu0 0
        %3021 = vmatpush1.bf16.msra.mxu0 0
        %3022 = vmatprep.subr.bf16.mxu0 0
        %3023 = vmatpush1.bf16.msra.mxu0 0
        %3024 = vmatprep.mubr.bf16.mxu0 0
        %3025 = vmatmul.mubr.bf16.gmra.mrb[0].mxu0 %v2499
        %v3026 = vpop.f32.mrb[0].mxu0
        %v3027 = vadd.f32 0.0, %v3026
        %v3028 = vpop.f32.mrb[0].mxu0
        %v3029 = vpop.f32.mrb[0].mxu0
        %v3030 = vpop.f32.mrb[0].mxu0
        %3031 = vdwg.mxu0
        %v3032 = vpack.c.bf16 %v3027, %v3027
        %s3033 = scalar_lea.vmem %s4, 16
        %v3034 = vld [vmem:[%s3033] sm:$0xf]
        %v3036 = vsel %vm2623, %v3034, 0
        %v3039 = vsel %vm835, %v3032, 0
        %3041 = vmatprep.subr.bf16.mxu0 0
        %3042 = vmatpush1.bf16.msra.mxu0 %v3039
        %3043 = vmatprep.subr.bf16.mxu0 0
        %3044 = vmatpush1.bf16.msra.mxu0 0
        %3045 = vmatprep.subr.bf16.mxu0 0
        %3046 = vmatpush1.bf16.msra.mxu0 0
        %3047 = vmatprep.subr.bf16.mxu0 0
        %3048 = vmatpush1.bf16.msra.mxu0 0
        %3049 = vmatprep.subr.bf16.mxu0 0
        %3050 = vmatpush1.bf16.msra.mxu0 0
        %3051 = vmatprep.subr.bf16.mxu0 0
        %3052 = vmatpush1.bf16.msra.mxu0 0
        %3053 = vmatprep.subr.bf16.mxu0 0
        %3054 = vmatpush1.bf16.msra.mxu0 0
        %3055 = vmatprep.subr.bf16.mxu0 0
        %3056 = vmatpush1.bf16.msra.mxu0 0
        %3057 = vmatprep.subr.bf16.mxu0 0
        %3058 = vmatpush1.bf16.msra.mxu0 0
        %3059 = vmatprep.subr.bf16.mxu0 0
        %3060 = vmatpush1.bf16.msra.mxu0 0
        %3061 = vmatprep.subr.bf16.mxu0 0
        %3062 = vmatpush1.bf16.msra.mxu0 0
        %3063 = vmatprep.subr.bf16.mxu0 0
        %3064 = vmatpush1.bf16.msra.mxu0 0
        %3065 = vmatprep.subr.bf16.mxu0 0
        %3066 = vmatpush1.bf16.msra.mxu0 0
        %3067 = vmatprep.subr.bf16.mxu0 0
        %3068 = vmatpush1.bf16.msra.mxu0 0
        %3069 = vmatprep.subr.bf16.mxu0 0
        %3070 = vmatpush1.bf16.msra.mxu0 0
        %3071 = vmatprep.subr.bf16.mxu0 0
        %3072 = vmatpush1.bf16.msra.mxu0 0
        %3073 = vmatprep.mubr.bf16.mxu0 0
        %3074 = vmatmul.mubr.bf16.gmra.mrb[0].mxu0 %v3036
        %v3075 = vpop.f32.mrb[0].mxu0
        %v3076 = vadd.f32 0.0, %v3075
        %v3077 = vpop.f32.mrb[0].mxu0
        %v3078 = vpop.f32.mrb[0].mxu0
        %v3079 = vpop.f32.mrb[0].mxu0
        %3080 = vdwg.mxu0
        %v3081 = vadd.f32 %v2959, %v3076
        %s3082 = scalar_lea.vmem %s6, 140
        %v3083 = vld [vmem:[%s3082] sm:$0xf]
        %v3084 = vld [vmem:[%s3082 + $0x4] sm:$0xf]
        %v3085 = vld [vmem:[%s3082 + $0x8] sm:$0xf]
        %v3086 = vld [vmem:[%s3082 + $0xc] sm:$0xf]
        %v3087 = vld [vmem:[%s3082 + $0x10] sm:$0xf]
        %v3088 = vld [vmem:[%s3082 + $0x14] sm:$0xf]
        %v3089 = vld [vmem:[%s3082 + $0x18] sm:$0x1]
        %v3097 = vunpack.c.l.b16 %v3083
        %v3098 = vunpack.c.l.b16 %v3084
        %v3099 = vunpack.c.l.b16 %v3085
        %v3100 = vunpack.c.l.b16 %v3086
        %v3101 = vunpack.c.l.b16 %v3087
        %v3102 = vunpack.c.l.b16 %v3088
        %v3103 = vunpack.c.l.b16 %v3089
        %v3104 = vpack.c.b16 %v3098, %v3097
        %v3105 = vpack.c.b16 %v3100, %v3099
        %v3106 = vpack.c.b16 %v3102, %v3101
        %v3107 = vpack.c.b16 %v3103, %v3103
        %v3112 = vand.u32 %v3107, %v2502
        %3114 = vmatprep.subr.bf16.mxu0 0
        %3115 = vmatpush1.bf16.msra.mxu0 %v3104
        %3116 = vmatprep.subr.bf16.mxu0 0
        %3117 = vmatpush1.bf16.msra.mxu0 %v3105
        %3118 = vmatprep.subr.bf16.mxu0 0
        %3119 = vmatpush1.bf16.msra.mxu0 %v3106
        %3120 = vmatprep.subr.bf16.mxu0 0
        %3121 = vmatpush1.bf16.msra.mxu0 %v3112
        %3122 = vmatprep.subr.bf16.mxu0 0
        %3123 = vmatpush1.bf16.msra.mxu0 0
        %3124 = vmatprep.subr.bf16.mxu0 0
        %3125 = vmatpush1.bf16.msra.mxu0 0
        %3126 = vmatprep.subr.bf16.mxu0 0
        %3127 = vmatpush1.bf16.msra.mxu0 0
        %3128 = vmatprep.subr.bf16.mxu0 0
        %3129 = vmatpush1.bf16.msra.mxu0 0
        %3130 = vmatprep.subr.bf16.mxu0 0
        %3131 = vmatpush1.bf16.msra.mxu0 0
        %3132 = vmatprep.subr.bf16.mxu0 0
        %3133 = vmatpush1.bf16.msra.mxu0 0
        %3134 = vmatprep.subr.bf16.mxu0 0
        %3135 = vmatpush1.bf16.msra.mxu0 0
        %3136 = vmatprep.subr.bf16.mxu0 0
        %3137 = vmatpush1.bf16.msra.mxu0 0
        %3138 = vmatprep.subr.bf16.mxu0 0
        %3139 = vmatpush1.bf16.msra.mxu0 0
        %3140 = vmatprep.subr.bf16.mxu0 0
        %3141 = vmatpush1.bf16.msra.mxu0 0
        %3142 = vmatprep.subr.bf16.mxu0 0
        %3143 = vmatpush1.bf16.msra.mxu0 0
        %3144 = vmatprep.subr.bf16.mxu0 0
        %3145 = vmatpush1.bf16.msra.mxu0 0
        %3146 = vmatprep.mubr.bf16.mxu0 0
        %3147 = vmatmul.mubr.bf16.gmra.mrb[0].mxu0 %v2499
        %v3148 = vpop.f32.mrb[0].mxu0
        %v3149 = vadd.f32 0.0, %v3148
        %v3150 = vpop.f32.mrb[0].mxu0
        %v3151 = vpop.f32.mrb[0].mxu0
        %v3152 = vpop.f32.mrb[0].mxu0
        %3153 = vdwg.mxu0
        %v3154 = vpack.c.bf16 %v3149, %v3149
        %s3155 = scalar_lea.vmem %s4, 20
        %v3156 = vld [vmem:[%s3155] sm:$0xf]
        %v3158 = vsel %vm2623, %v3156, 0
        %v3161 = vsel %vm835, %v3154, 0
        %3163 = vmatprep.subr.bf16.mxu0 0
        %3164 = vmatpush1.bf16.msra.mxu0 %v3161
        %3165 = vmatprep.subr.bf16.mxu0 0
        %3166 = vmatpush1.bf16.msra.mxu0 0
        %3167 = vmatprep.subr.bf16.mxu0 0
        %3168 = vmatpush1.bf16.msra.mxu0 0
        %3169 = vmatprep.subr.bf16.mxu0 0
        %3170 = vmatpush1.bf16.msra.mxu0 0
        %3171 = vmatprep.subr.bf16.mxu0 0
        %3172 = vmatpush1.bf16.msra.mxu0 0
        %3173 = vmatprep.subr.bf16.mxu0 0
        %3174 = vmatpush1.bf16.msra.mxu0 0
        %3175 = vmatprep.subr.bf16.mxu0 0
        %3176 = vmatpush1.bf16.msra.mxu0 0
        %3177 = vmatprep.subr.bf16.mxu0 0
        %3178 = vmatpush1.bf16.msra.mxu0 0
        %3179 = vmatprep.subr.bf16.mxu0 0
        %3180 = vmatpush1.bf16.msra.mxu0 0
        %3181 = vmatprep.subr.bf16.mxu0 0
        %3182 = vmatpush1.bf16.msra.mxu0 0
        %3183 = vmatprep.subr.bf16.mxu0 0
        %3184 = vmatpush1.bf16.msra.mxu0 0
        %3185 = vmatprep.subr.bf16.mxu0 0
        %3186 = vmatpush1.bf16.msra.mxu0 0
        %3187 = vmatprep.subr.bf16.mxu0 0
        %3188 = vmatpush1.bf16.msra.mxu0 0
        %3189 = vmatprep.subr.bf16.mxu0 0
        %3190 = vmatpush1.bf16.msra.mxu0 0
        %3191 = vmatprep.subr.bf16.mxu0 0
        %3192 = vmatpush1.bf16.msra.mxu0 0
        %3193 = vmatprep.subr.bf16.mxu0 0
        %3194 = vmatpush1.bf16.msra.mxu0 0
        %3195 = vmatprep.mubr.bf16.mxu0 0
        %3196 = vmatmul.mubr.bf16.gmra.mrb[0].mxu0 %v3158
        %v3197 = vpop.f32.mrb[0].mxu0
        %v3198 = vadd.f32 0.0, %v3197
        %v3199 = vpop.f32.mrb[0].mxu0
        %v3200 = vpop.f32.mrb[0].mxu0
        %v3201 = vpop.f32.mrb[0].mxu0
        %3202 = vdwg.mxu0
        %v3203 = vadd.f32 %v3081, %v3198
        %s3204 = scalar_lea.vmem %s6, 168
        %v3205 = vld [vmem:[%s3204] sm:$0xf]
        %v3206 = vld [vmem:[%s3204 + $0x4] sm:$0xf]
        %v3207 = vld [vmem:[%s3204 + $0x8] sm:$0xf]
        %v3208 = vld [vmem:[%s3204 + $0xc] sm:$0xf]
        %v3209 = vld [vmem:[%s3204 + $0x10] sm:$0xf]
        %v3210 = vld [vmem:[%s3204 + $0x14] sm:$0xf]
        %v3211 = vld [vmem:[%s3204 + $0x18] sm:$0x1]
        %v3219 = vunpack.c.l.b16 %v3205
        %v3220 = vunpack.c.l.b16 %v3206
        %v3221 = vunpack.c.l.b16 %v3207
        %v3222 = vunpack.c.l.b16 %v3208
        %v3223 = vunpack.c.l.b16 %v3209
        %v3224 = vunpack.c.l.b16 %v3210
        %v3225 = vunpack.c.l.b16 %v3211
        %v3226 = vpack.c.b16 %v3220, %v3219
        %v3227 = vpack.c.b16 %v3222, %v3221
        %v3228 = vpack.c.b16 %v3224, %v3223
        %v3229 = vpack.c.b16 %v3225, %v3225
        %v3234 = vand.u32 %v3229, %v2502
        %3236 = vmatprep.subr.bf16.mxu0 0
        %3237 = vmatpush1.bf16.msra.mxu0 %v3226
        %3238 = vmatprep.subr.bf16.mxu0 0
        %3239 = vmatpush1.bf16.msra.mxu0 %v3227
        %3240 = vmatprep.subr.bf16.mxu0 0
        %3241 = vmatpush1.bf16.msra.mxu0 %v3228
        %3242 = vmatprep.subr.bf16.mxu0 0
        %3243 = vmatpush1.bf16.msra.mxu0 %v3234
        %3244 = vmatprep.subr.bf16.mxu0 0
        %3245 = vmatpush1.bf16.msra.mxu0 0
        %3246 = vmatprep.subr.bf16.mxu0 0
        %3247 = vmatpush1.bf16.msra.mxu0 0
        %3248 = vmatprep.subr.bf16.mxu0 0
        %3249 = vmatpush1.bf16.msra.mxu0 0
        %3250 = vmatprep.subr.bf16.mxu0 0
        %3251 = vmatpush1.bf16.msra.mxu0 0
        %3252 = vmatprep.subr.bf16.mxu0 0
        %3253 = vmatpush1.bf16.msra.mxu0 0
        %3254 = vmatprep.subr.bf16.mxu0 0
        %3255 = vmatpush1.bf16.msra.mxu0 0
        %3256 = vmatprep.subr.bf16.mxu0 0
        %3257 = vmatpush1.bf16.msra.mxu0 0
        %3258 = vmatprep.subr.bf16.mxu0 0
        %3259 = vmatpush1.bf16.msra.mxu0 0
        %3260 = vmatprep.subr.bf16.mxu0 0
        %3261 = vmatpush1.bf16.msra.mxu0 0
        %3262 = vmatprep.subr.bf16.mxu0 0
        %3263 = vmatpush1.bf16.msra.mxu0 0
        %3264 = vmatprep.subr.bf16.mxu0 0
        %3265 = vmatpush1.bf16.msra.mxu0 0
        %3266 = vmatprep.subr.bf16.mxu0 0
        %3267 = vmatpush1.bf16.msra.mxu0 0
        %3268 = vmatprep.mubr.bf16.mxu0 0
        %3269 = vmatmul.mubr.bf16.gmra.mrb[0].mxu0 %v2499
        %v3270 = vpop.f32.mrb[0].mxu0
        %v3271 = vadd.f32 0.0, %v3270
        %v3272 = vpop.f32.mrb[0].mxu0
        %v3273 = vpop.f32.mrb[0].mxu0
        %v3274 = vpop.f32.mrb[0].mxu0
        %3275 = vdwg.mxu0
        %v3276 = vpack.c.bf16 %v3271, %v3271
        %s3277 = scalar_lea.vmem %s4, 24
        %v3278 = vld [vmem:[%s3277] sm:$0xf]
        %v3280 = vsel %vm2623, %v3278, 0
        %v3283 = vsel %vm835, %v3276, 0
        %3285 = vmatprep.subr.bf16.mxu0 0
        %3286 = vmatpush1.bf16.msra.mxu0 %v3283
        %3287 = vmatprep.subr.bf16.mxu0 0
        %3288 = vmatpush1.bf16.msra.mxu0 0
        %3289 = vmatprep.subr.bf16.mxu0 0
        %3290 = vmatpush1.bf16.msra.mxu0 0
        %3291 = vmatprep.subr.bf16.mxu0 0
        %3292 = vmatpush1.bf16.msra.mxu0 0
        %3293 = vmatprep.subr.bf16.mxu0 0
        %3294 = vmatpush1.bf16.msra.mxu0 0
        %3295 = vmatprep.subr.bf16.mxu0 0
        %3296 = vmatpush1.bf16.msra.mxu0 0
        %3297 = vmatprep.subr.bf16.mxu0 0
        %3298 = vmatpush1.bf16.msra.mxu0 0
        %3299 = vmatprep.subr.bf16.mxu0 0
        %3300 = vmatpush1.bf16.msra.mxu0 0
        %3301 = vmatprep.subr.bf16.mxu0 0
        %3302 = vmatpush1.bf16.msra.mxu0 0
        %3303 = vmatprep.subr.bf16.mxu0 0
        %3304 = vmatpush1.bf16.msra.mxu0 0
        %3305 = vmatprep.subr.bf16.mxu0 0
        %3306 = vmatpush1.bf16.msra.mxu0 0
        %3307 = vmatprep.subr.bf16.mxu0 0
        %3308 = vmatpush1.bf16.msra.mxu0 0
        %3309 = vmatprep.subr.bf16.mxu0 0
        %3310 = vmatpush1.bf16.msra.mxu0 0
        %3311 = vmatprep.subr.bf16.mxu0 0
        %3312 = vmatpush1.bf16.msra.mxu0 0
        %3313 = vmatprep.subr.bf16.mxu0 0
        %3314 = vmatpush1.bf16.msra.mxu0 0
        %3315 = vmatprep.subr.bf16.mxu0 0
        %3316 = vmatpush1.bf16.msra.mxu0 0
        %3317 = vmatprep.mubr.bf16.mxu0 0
        %3318 = vmatmul.mubr.bf16.gmra.mrb[0].mxu0 %v3280
        %v3319 = vpop.f32.mrb[0].mxu0
        %v3320 = vadd.f32 0.0, %v3319
        %v3321 = vpop.f32.mrb[0].mxu0
        %v3322 = vpop.f32.mrb[0].mxu0
        %v3323 = vpop.f32.mrb[0].mxu0
        %3324 = vdwg.mxu0
        %v3325 = vadd.f32 %v3203, %v3320
        %s3326 = scalar_lea.vmem %s6, 196
        %v3327 = vld [vmem:[%s3326] sm:$0xf]
        %v3328 = vld [vmem:[%s3326 + $0x4] sm:$0xf]
        %v3329 = vld [vmem:[%s3326 + $0x8] sm:$0xf]
        %v3330 = vld [vmem:[%s3326 + $0xc] sm:$0xf]
        %v3331 = vld [vmem:[%s3326 + $0x10] sm:$0xf]
        %v3332 = vld [vmem:[%s3326 + $0x14] sm:$0xf]
        %v3333 = vld [vmem:[%s3326 + $0x18] sm:$0x1]
        %v3341 = vunpack.c.l.b16 %v3327
        %v3342 = vunpack.c.l.b16 %v3328
        %v3343 = vunpack.c.l.b16 %v3329
        %v3344 = vunpack.c.l.b16 %v3330
        %v3345 = vunpack.c.l.b16 %v3331
        %v3346 = vunpack.c.l.b16 %v3332
        %v3347 = vunpack.c.l.b16 %v3333
        %v3348 = vpack.c.b16 %v3342, %v3341
        %v3349 = vpack.c.b16 %v3344, %v3343
        %v3350 = vpack.c.b16 %v3346, %v3345
        %v3351 = vpack.c.b16 %v3347, %v3347
        %v3356 = vand.u32 %v3351, %v2502
        %3358 = vmatprep.subr.bf16.mxu0 0
        %3359 = vmatpush1.bf16.msra.mxu0 %v3348
        %3360 = vmatprep.subr.bf16.mxu0 0
        %3361 = vmatpush1.bf16.msra.mxu0 %v3349
        %3362 = vmatprep.subr.bf16.mxu0 0
        %3363 = vmatpush1.bf16.msra.mxu0 %v3350
        %3364 = vmatprep.subr.bf16.mxu0 0
        %3365 = vmatpush1.bf16.msra.mxu0 %v3356
        %3366 = vmatprep.subr.bf16.mxu0 0
        %3367 = vmatpush1.bf16.msra.mxu0 0
        %3368 = vmatprep.subr.bf16.mxu0 0
        %3369 = vmatpush1.bf16.msra.mxu0 0
        %3370 = vmatprep.subr.bf16.mxu0 0
        %3371 = vmatpush1.bf16.msra.mxu0 0
        %3372 = vmatprep.subr.bf16.mxu0 0
        %3373 = vmatpush1.bf16.msra.mxu0 0
        %3374 = vmatprep.subr.bf16.mxu0 0
        %3375 = vmatpush1.bf16.msra.mxu0 0
        %3376 = vmatprep.subr.bf16.mxu0 0
        %3377 = vmatpush1.bf16.msra.mxu0 0
        %3378 = vmatprep.subr.bf16.mxu0 0
        %3379 = vmatpush1.bf16.msra.mxu0 0
        %3380 = vmatprep.subr.bf16.mxu0 0
        %3381 = vmatpush1.bf16.msra.mxu0 0
        %3382 = vmatprep.subr.bf16.mxu0 0
        %3383 = vmatpush1.bf16.msra.mxu0 0
        %3384 = vmatprep.subr.bf16.mxu0 0
        %3385 = vmatpush1.bf16.msra.mxu0 0
        %3386 = vmatprep.subr.bf16.mxu0 0
        %3387 = vmatpush1.bf16.msra.mxu0 0
        %3388 = vmatprep.subr.bf16.mxu0 0
        %3389 = vmatpush1.bf16.msra.mxu0 0
        %3390 = vmatprep.mubr.bf16.mxu0 0
        %3391 = vmatmul.mubr.bf16.gmra.mrb[0].mxu0 %v2499
        %v3392 = vpop.f32.mrb[0].mxu0
        %v3393 = vadd.f32 0.0, %v3392
        %v3394 = vpop.f32.mrb[0].mxu0
        %v3395 = vpop.f32.mrb[0].mxu0
        %v3396 = vpop.f32.mrb[0].mxu0
        %3397 = vdwg.mxu0
        %v3398 = vpack.c.bf16 %v3393, %v3393
        %s3399 = scalar_lea.vmem %s4, 28
        %v3400 = vld [vmem:[%s3399] sm:$0xf]
        %v3402 = vsel %vm2623, %v3400, 0
        %v3405 = vsel %vm835, %v3398, 0
        %3407 = vmatprep.subr.bf16.mxu0 0
        %3408 = vmatpush1.bf16.msra.mxu0 %v3405
        %3409 = vmatprep.subr.bf16.mxu0 0
        %3410 = vmatpush1.bf16.msra.mxu0 0
        %3411 = vmatprep.subr.bf16.mxu0 0
        %3412 = vmatpush1.bf16.msra.mxu0 0
        %3413 = vmatprep.subr.bf16.mxu0 0
        %3414 = vmatpush1.bf16.msra.mxu0 0
        %3415 = vmatprep.subr.bf16.mxu0 0
        %3416 = vmatpush1.bf16.msra.mxu0 0
        %3417 = vmatprep.subr.bf16.mxu0 0
        %3418 = vmatpush1.bf16.msra.mxu0 0
        %3419 = vmatprep.subr.bf16.mxu0 0
        %3420 = vmatpush1.bf16.msra.mxu0 0
        %3421 = vmatprep.subr.bf16.mxu0 0
        %3422 = vmatpush1.bf16.msra.mxu0 0
        %3423 = vmatprep.subr.bf16.mxu0 0
        %3424 = vmatpush1.bf16.msra.mxu0 0
        %3425 = vmatprep.subr.bf16.mxu0 0
        %3426 = vmatpush1.bf16.msra.mxu0 0
        %3427 = vmatprep.subr.bf16.mxu0 0
        %3428 = vmatpush1.bf16.msra.mxu0 0
        %3429 = vmatprep.subr.bf16.mxu0 0
        %3430 = vmatpush1.bf16.msra.mxu0 0
        %3431 = vmatprep.subr.bf16.mxu0 0
        %3432 = vmatpush1.bf16.msra.mxu0 0
        %3433 = vmatprep.subr.bf16.mxu0 0
        %3434 = vmatpush1.bf16.msra.mxu0 0
        %3435 = vmatprep.subr.bf16.mxu0 0
        %3436 = vmatpush1.bf16.msra.mxu0 0
        %3437 = vmatprep.subr.bf16.mxu0 0
        %3438 = vmatpush1.bf16.msra.mxu0 0
        %3439 = vmatprep.mubr.bf16.mxu0 0
        %3440 = vmatmul.mubr.bf16.gmra.mrb[0].mxu0 %v3402
        %v3441 = vpop.f32.mrb[0].mxu0
        %v3442 = vadd.f32 0.0, %v3441
        %v3443 = vpop.f32.mrb[0].mxu0
        %v3444 = vpop.f32.mrb[0].mxu0
        %v3445 = vpop.f32.mrb[0].mxu0
        %3446 = vdwg.mxu0
        %v3447 = vadd.f32 %v3325, %v3442
        %s3448 = scalar_lea.vmem %s6, 224
        %v3449 = vld [vmem:[%s3448] sm:$0xf]
        %v3450 = vld [vmem:[%s3448 + $0x4] sm:$0xf]
        %v3451 = vld [vmem:[%s3448 + $0x8] sm:$0xf]
        %v3452 = vld [vmem:[%s3448 + $0xc] sm:$0xf]
        %v3453 = vld [vmem:[%s3448 + $0x10] sm:$0xf]
        %v3454 = vld [vmem:[%s3448 + $0x14] sm:$0xf]
        %v3455 = vld [vmem:[%s3448 + $0x18] sm:$0x1]
        %v3463 = vunpack.c.l.b16 %v3449
        %v3464 = vunpack.c.l.b16 %v3450
        %v3465 = vunpack.c.l.b16 %v3451
        %v3466 = vunpack.c.l.b16 %v3452
        %v3467 = vunpack.c.l.b16 %v3453
        %v3468 = vunpack.c.l.b16 %v3454
        %v3469 = vunpack.c.l.b16 %v3455
        %v3470 = vpack.c.b16 %v3464, %v3463
        %v3471 = vpack.c.b16 %v3466, %v3465
        %v3472 = vpack.c.b16 %v3468, %v3467
        %v3473 = vpack.c.b16 %v3469, %v3469
        %v3478 = vand.u32 %v3473, %v2502
        %3480 = vmatprep.subr.bf16.mxu0 0
        %3481 = vmatpush1.bf16.msra.mxu0 %v3470
        %3482 = vmatprep.subr.bf16.mxu0 0
        %3483 = vmatpush1.bf16.msra.mxu0 %v3471
        %3484 = vmatprep.subr.bf16.mxu0 0
        %3485 = vmatpush1.bf16.msra.mxu0 %v3472
        %3486 = vmatprep.subr.bf16.mxu0 0
        %3487 = vmatpush1.bf16.msra.mxu0 %v3478
        %3488 = vmatprep.subr.bf16.mxu0 0
        %3489 = vmatpush1.bf16.msra.mxu0 0
        %3490 = vmatprep.subr.bf16.mxu0 0
        %3491 = vmatpush1.bf16.msra.mxu0 0
        %3492 = vmatprep.subr.bf16.mxu0 0
        %3493 = vmatpush1.bf16.msra.mxu0 0
        %3494 = vmatprep.subr.bf16.mxu0 0
        %3495 = vmatpush1.bf16.msra.mxu0 0
        %3496 = vmatprep.subr.bf16.mxu0 0
        %3497 = vmatpush1.bf16.msra.mxu0 0
        %3498 = vmatprep.subr.bf16.mxu0 0
        %3499 = vmatpush1.bf16.msra.mxu0 0
        %3500 = vmatprep.subr.bf16.mxu0 0
        %3501 = vmatpush1.bf16.msra.mxu0 0
        %3502 = vmatprep.subr.bf16.mxu0 0
        %3503 = vmatpush1.bf16.msra.mxu0 0
        %3504 = vmatprep.subr.bf16.mxu0 0
        %3505 = vmatpush1.bf16.msra.mxu0 0
        %3506 = vmatprep.subr.bf16.mxu0 0
        %3507 = vmatpush1.bf16.msra.mxu0 0
        %3508 = vmatprep.subr.bf16.mxu0 0
        %3509 = vmatpush1.bf16.msra.mxu0 0
        %3510 = vmatprep.subr.bf16.mxu0 0
        %3511 = vmatpush1.bf16.msra.mxu0 0
        %3512 = vmatprep.mubr.bf16.mxu0 0
        %3513 = vmatmul.mubr.bf16.gmra.mrb[0].mxu0 %v2499
        %v3514 = vpop.f32.mrb[0].mxu0
        %v3515 = vadd.f32 0.0, %v3514
        %v3516 = vpop.f32.mrb[0].mxu0
        %v3517 = vpop.f32.mrb[0].mxu0
        %v3518 = vpop.f32.mrb[0].mxu0
        %3519 = vdwg.mxu0
        %v3520 = vpack.c.bf16 %v3515, %v3515
        %s3521 = scalar_lea.vmem %s4, 32
        %v3522 = vld [vmem:[%s3521] sm:$0xf]
        %v3524 = vsel %vm2623, %v3522, 0
        %v3527 = vsel %vm835, %v3520, 0
        %3529 = vmatprep.subr.bf16.mxu0 0
        %3530 = vmatpush1.bf16.msra.mxu0 %v3527
        %3531 = vmatprep.subr.bf16.mxu0 0
        %3532 = vmatpush1.bf16.msra.mxu0 0
        %3533 = vmatprep.subr.bf16.mxu0 0
        %3534 = vmatpush1.bf16.msra.mxu0 0
        %3535 = vmatprep.subr.bf16.mxu0 0
        %3536 = vmatpush1.bf16.msra.mxu0 0
        %3537 = vmatprep.subr.bf16.mxu0 0
        %3538 = vmatpush1.bf16.msra.mxu0 0
        %3539 = vmatprep.subr.bf16.mxu0 0
        %3540 = vmatpush1.bf16.msra.mxu0 0
        %3541 = vmatprep.subr.bf16.mxu0 0
        %3542 = vmatpush1.bf16.msra.mxu0 0
        %3543 = vmatprep.subr.bf16.mxu0 0
        %3544 = vmatpush1.bf16.msra.mxu0 0
        %3545 = vmatprep.subr.bf16.mxu0 0
        %3546 = vmatpush1.bf16.msra.mxu0 0
        %3547 = vmatprep.subr.bf16.mxu0 0
        %3548 = vmatpush1.bf16.msra.mxu0 0
        %3549 = vmatprep.subr.bf16.mxu0 0
        %3550 = vmatpush1.bf16.msra.mxu0 0
        %3551 = vmatprep.subr.bf16.mxu0 0
        %3552 = vmatpush1.bf16.msra.mxu0 0
        %3553 = vmatprep.subr.bf16.mxu0 0
        %3554 = vmatpush1.bf16.msra.mxu0 0
        %3555 = vmatprep.subr.bf16.mxu0 0
        %3556 = vmatpush1.bf16.msra.mxu0 0
        %3557 = vmatprep.subr.bf16.mxu0 0
        %3558 = vmatpush1.bf16.msra.mxu0 0
        %3559 = vmatprep.subr.bf16.mxu0 0
        %3560 = vmatpush1.bf16.msra.mxu0 0
        %3561 = vmatprep.mubr.bf16.mxu0 0
        %3562 = vmatmul.mubr.bf16.gmra.mrb[0].mxu0 %v3524
        %v3563 = vpop.f32.mrb[0].mxu0
        %v3564 = vadd.f32 0.0, %v3563
        %v3565 = vpop.f32.mrb[0].mxu0
        %v3566 = vpop.f32.mrb[0].mxu0
        %v3567 = vpop.f32.mrb[0].mxu0
        %3568 = vdwg.mxu0
        %v3569 = vadd.f32 %v3447, %v3564
        %v3570 = vld [vmem:[%s5] sm:$0xff]
        %3572 = vset.pattern.permute.xlu0 0
        %3573 = vperm.xlu0 %3572, %v3570
        %v3574 = vpop.permute.xlu0 %3573
        %v3576 = vadd.f32 %v3569, %v3574
        %v3577 = vmax.f32 %v3576, 0.0
        %v3578 = vpack.c.bf16 %v3577, %v3577
        %v3579 = vld [vmem:[%s8] sm:$0x1]
        %v3580 = vld [vmem:[%s7] sm:$0xf]
        %v3581 = vld [vmem:[%s7 + $0x4] sm:$0x1]
        %v3584 = vunpack.c.l.b16 %v3580
        %v3585 = vunpack.c.l.b16 %v3581
        %v3586 = vpack.c.b16 %v3585, %v3584
        %vm3587 = vcmask 72704
        %v3589 = vsel %vm3587, %v3578, 0
        %vm3591 = vcmask 1043456
        %vm3592 = vcmask 1044480
        %v3593 = vsel %vm3591, 4294967295, 65535
        %v3594 = vsel %vm3592, %v3593, 0
        %v3596 = vand.u32 %v3586, %v3594
        %3598 = vmatprep.subr.bf16.mxu0 0
        %3599 = vmatpush1.bf16.msra.mxu0 %v3596
        %3600 = vmatprep.subr.bf16.mxu0 0
        %3601 = vmatpush1.bf16.msra.mxu0 0
        %3602 = vmatprep.subr.bf16.mxu0 0
        %3603 = vmatpush1.bf16.msra.mxu0 0
        %3604 = vmatprep.subr.bf16.mxu0 0
        %3605 = vmatpush1.bf16.msra.mxu0 0
        %3606 = vmatprep.subr.bf16.mxu0 0
        %3607 = vmatpush1.bf16.msra.mxu0 0
        %3608 = vmatprep.subr.bf16.mxu0 0
        %3609 = vmatpush1.bf16.msra.mxu0 0
        %3610 = vmatprep.subr.bf16.mxu0 0
        %3611 = vmatpush1.bf16.msra.mxu0 0
        %3612 = vmatprep.subr.bf16.mxu0 0
        %3613 = vmatpush1.bf16.msra.mxu0 0
        %3614 = vmatprep.subr.bf16.mxu0 0
        %3615 = vmatpush1.bf16.msra.mxu0 0
        %3616 = vmatprep.subr.bf16.mxu0 0
        %3617 = vmatpush1.bf16.msra.mxu0 0
        %3618 = vmatprep.subr.bf16.mxu0 0
        %3619 = vmatpush1.bf16.msra.mxu0 0
        %3620 = vmatprep.subr.bf16.mxu0 0
        %3621 = vmatpush1.bf16.msra.mxu0 0
        %3622 = vmatprep.subr.bf16.mxu0 0
        %3623 = vmatpush1.bf16.msra.mxu0 0
        %3624 = vmatprep.subr.bf16.mxu0 0
        %3625 = vmatpush1.bf16.msra.mxu0 0
        %3626 = vmatprep.subr.bf16.mxu0 0
        %3627 = vmatpush1.bf16.msra.mxu0 0
        %3628 = vmatprep.subr.bf16.mxu0 0
        %3629 = vmatpush1.bf16.msra.mxu0 0
        %3630 = vmatprep.mubr.bf16.mxu0 0
        %3631 = vmatmul.mubr.bf16.gmra.mrb[0].mxu0 %v3589
        %v3632 = vpop.f32.mrb[0].mxu0
        %v3633 = vadd.f32 0.0, %v3632
        %v3634 = vpop.f32.mrb[0].mxu0
        %v3635 = vpop.f32.mrb[0].mxu0
        %v3636 = vpop.f32.mrb[0].mxu0
        %3637 = vdwg.mxu0
        %v3638 = vadd.f32 %v3579, %v3633
        %s3639 = scalar_lea.vmem %s7, 8
        %v3640 = vld [vmem:[%s3639] sm:$0xf]
        %v3641 = vld [vmem:[%s3639 + $0x4] sm:$0x1]
        %v3642 = vshrl.u32 %v3578, 16
        %v3646 = vunpack.c.l.b16 %v3640
        %v3647 = vunpack.c.l.b16 %v3641
        %v3648 = vpack.c.b16 %v3647, %v3646
        %v3650 = vsel %vm3587, %v3642, 0
        %v3653 = vand.u32 %v3648, %v3594
        %3655 = vmatprep.subr.bf16.mxu0 0
        %3656 = vmatpush1.bf16.msra.mxu0 %v3653
        %3657 = vmatprep.subr.bf16.mxu0 0
        %3658 = vmatpush1.bf16.msra.mxu0 0
        %3659 = vmatprep.subr.bf16.mxu0 0
        %3660 = vmatpush1.bf16.msra.mxu0 0
        %3661 = vmatprep.subr.bf16.mxu0 0
        %3662 = vmatpush1.bf16.msra.mxu0 0
        %3663 = vmatprep.subr.bf16.mxu0 0
        %3664 = vmatpush1.bf16.msra.mxu0 0
        %3665 = vmatprep.subr.bf16.mxu0 0
        %3666 = vmatpush1.bf16.msra.mxu0 0
        %3667 = vmatprep.subr.bf16.mxu0 0
        %3668 = vmatpush1.bf16.msra.mxu0 0
        %3669 = vmatprep.subr.bf16.mxu0 0
        %3670 = vmatpush1.bf16.msra.mxu0 0
        %3671 = vmatprep.subr.bf16.mxu0 0
        %3672 = vmatpush1.bf16.msra.mxu0 0
        %3673 = vmatprep.subr.bf16.mxu0 0
        %3674 = vmatpush1.bf16.msra.mxu0 0
        %3675 = vmatprep.subr.bf16.mxu0 0
        %3676 = vmatpush1.bf16.msra.mxu0 0
        %3677 = vmatprep.subr.bf16.mxu0 0
        %3678 = vmatpush1.bf16.msra.mxu0 0
        %3679 = vmatprep.subr.bf16.mxu0 0
        %3680 = vmatpush1.bf16.msra.mxu0 0
        %3681 = vmatprep.subr.bf16.mxu0 0
        %3682 = vmatpush1.bf16.msra.mxu0 0
        %3683 = vmatprep.subr.bf16.mxu0 0
        %3684 = vmatpush1.bf16.msra.mxu0 0
        %3685 = vmatprep.subr.bf16.mxu0 0
        %3686 = vmatpush1.bf16.msra.mxu0 0
        %3687 = vmatprep.mubr.bf16.mxu0 0
        %3688 = vmatmul.mubr.bf16.gmra.mrb[0].mxu0 %v3650
        %v3689 = vpop.f32.mrb[0].mxu0
        %v3690 = vadd.f32 0.0, %v3689
        %v3691 = vpop.f32.mrb[0].mxu0
        %v3692 = vpop.f32.mrb[0].mxu0
        %v3693 = vpop.f32.mrb[0].mxu0
        %3694 = vdwg.mxu0
        %v3695 = vadd.f32 %v3638, %v3690
        %s3696 = scalar_lea.vmem %s7, 16
        %v3697 = vld [vmem:[%s3696] sm:$0xf]
        %v3698 = vld [vmem:[%s3696 + $0x4] sm:$0x1]
        %v3700 = vrot.slane %v3578, 1
        %v3703 = vunpack.c.l.b16 %v3697
        %v3704 = vunpack.c.l.b16 %v3698
        %v3705 = vpack.c.b16 %v3704, %v3703
        %v3707 = vsel %vm3587, %v3700, 0
        %v3710 = vand.u32 %v3705, %v3594
        %3712 = vmatprep.subr.bf16.mxu0 0
        %3713 = vmatpush1.bf16.msra.mxu0 %v3710
        %3714 = vmatprep.subr.bf16.mxu0 0
        %3715 = vmatpush1.bf16.msra.mxu0 0
        %3716 = vmatprep.subr.bf16.mxu0 0
        %3717 = vmatpush1.bf16.msra.mxu0 0
        %3718 = vmatprep.subr.bf16.mxu0 0
        %3719 = vmatpush1.bf16.msra.mxu0 0
        %3720 = vmatprep.subr.bf16.mxu0 0
        %3721 = vmatpush1.bf16.msra.mxu0 0
        %3722 = vmatprep.subr.bf16.mxu0 0
        %3723 = vmatpush1.bf16.msra.mxu0 0
        %3724 = vmatprep.subr.bf16.mxu0 0
        %3725 = vmatpush1.bf16.msra.mxu0 0
        %3726 = vmatprep.subr.bf16.mxu0 0
        %3727 = vmatpush1.bf16.msra.mxu0 0
        %3728 = vmatprep.subr.bf16.mxu0 0
        %3729 = vmatpush1.bf16.msra.mxu0 0
        %3730 = vmatprep.subr.bf16.mxu0 0
        %3731 = vmatpush1.bf16.msra.mxu0 0
        %3732 = vmatprep.subr.bf16.mxu0 0
        %3733 = vmatpush1.bf16.msra.mxu0 0
        %3734 = vmatprep.subr.bf16.mxu0 0
        %3735 = vmatpush1.bf16.msra.mxu0 0
        %3736 = vmatprep.subr.bf16.mxu0 0
        %3737 = vmatpush1.bf16.msra.mxu0 0
        %3738 = vmatprep.subr.bf16.mxu0 0
        %3739 = vmatpush1.bf16.msra.mxu0 0
        %3740 = vmatprep.subr.bf16.mxu0 0
        %3741 = vmatpush1.bf16.msra.mxu0 0
        %3742 = vmatprep.subr.bf16.mxu0 0
        %3743 = vmatpush1.bf16.msra.mxu0 0
        %3744 = vmatprep.mubr.bf16.mxu0 0
        %3745 = vmatmul.mubr.bf16.gmra.mrb[0].mxu0 %v3707
        %v3746 = vpop.f32.mrb[0].mxu0
        %v3747 = vadd.f32 0.0, %v3746
        %v3748 = vpop.f32.mrb[0].mxu0
        %v3749 = vpop.f32.mrb[0].mxu0
        %v3750 = vpop.f32.mrb[0].mxu0
        %3751 = vdwg.mxu0
        %v3752 = vadd.f32 %v3695, %v3747
        %s3753 = scalar_lea.vmem %s7, 24
        %v3754 = vld [vmem:[%s3753] sm:$0xf]
        %v3755 = vld [vmem:[%s3753 + $0x4] sm:$0x1]
        %v3756 = vrot.slane %v3642, 1
        %v3759 = vunpack.c.l.b16 %v3754
        %v3760 = vunpack.c.l.b16 %v3755
        %v3761 = vpack.c.b16 %v3760, %v3759
        %v3763 = vsel %vm3587, %v3756, 0
        %v3766 = vand.u32 %v3761, %v3594
        %3768 = vmatprep.subr.bf16.mxu0 0
        %3769 = vmatpush1.bf16.msra.mxu0 %v3766
        %3770 = vmatprep.subr.bf16.mxu0 0
        %3771 = vmatpush1.bf16.msra.mxu0 0
        %3772 = vmatprep.subr.bf16.mxu0 0
        %3773 = vmatpush1.bf16.msra.mxu0 0
        %3774 = vmatprep.subr.bf16.mxu0 0
        %3775 = vmatpush1.bf16.msra.mxu0 0
        %3776 = vmatprep.subr.bf16.mxu0 0
        %3777 = vmatpush1.bf16.msra.mxu0 0
        %3778 = vmatprep.subr.bf16.mxu0 0
        %3779 = vmatpush1.bf16.msra.mxu0 0
        %3780 = vmatprep.subr.bf16.mxu0 0
        %3781 = vmatpush1.bf16.msra.mxu0 0
        %3782 = vmatprep.subr.bf16.mxu0 0
        %3783 = vmatpush1.bf16.msra.mxu0 0
        %3784 = vmatprep.subr.bf16.mxu0 0
        %3785 = vmatpush1.bf16.msra.mxu0 0
        %3786 = vmatprep.subr.bf16.mxu0 0
        %3787 = vmatpush1.bf16.msra.mxu0 0
        %3788 = vmatprep.subr.bf16.mxu0 0
        %3789 = vmatpush1.bf16.msra.mxu0 0
        %3790 = vmatprep.subr.bf16.mxu0 0
        %3791 = vmatpush1.bf16.msra.mxu0 0
        %3792 = vmatprep.subr.bf16.mxu0 0
        %3793 = vmatpush1.bf16.msra.mxu0 0
        %3794 = vmatprep.subr.bf16.mxu0 0
        %3795 = vmatpush1.bf16.msra.mxu0 0
        %3796 = vmatprep.subr.bf16.mxu0 0
        %3797 = vmatpush1.bf16.msra.mxu0 0
        %3798 = vmatprep.subr.bf16.mxu0 0
        %3799 = vmatpush1.bf16.msra.mxu0 0
        %3800 = vmatprep.mubr.bf16.mxu0 0
        %3801 = vmatmul.mubr.bf16.gmra.mrb[0].mxu0 %v3763
        %v3802 = vpop.f32.mrb[0].mxu0
        %v3803 = vadd.f32 0.0, %v3802
        %v3804 = vpop.f32.mrb[0].mxu0
        %v3805 = vpop.f32.mrb[0].mxu0
        %v3806 = vpop.f32.mrb[0].mxu0
        %3807 = vdwg.mxu0
        %v3808 = vadd.f32 %v3752, %v3803
        %s3809 = scalar_lea.vmem %s7, 32
        %v3810 = vld [vmem:[%s3809] sm:$0xf]
        %v3811 = vld [vmem:[%s3809 + $0x4] sm:$0x1]
        %v3812 = vrot.slane %v3578, 2
        %v3815 = vunpack.c.l.b16 %v3810
        %v3816 = vunpack.c.l.b16 %v3811
        %v3817 = vpack.c.b16 %v3816, %v3815
        %v3819 = vsel %vm3587, %v3812, 0
        %v3822 = vand.u32 %v3817, %v3594
        %3824 = vmatprep.subr.bf16.mxu0 0
        %3825 = vmatpush1.bf16.msra.mxu0 %v3822
        %3826 = vmatprep.subr.bf16.mxu0 0
        %3827 = vmatpush1.bf16.msra.mxu0 0
        %3828 = vmatprep.subr.bf16.mxu0 0
        %3829 = vmatpush1.bf16.msra.mxu0 0
        %3830 = vmatprep.subr.bf16.mxu0 0
        %3831 = vmatpush1.bf16.msra.mxu0 0
        %3832 = vmatprep.subr.bf16.mxu0 0
        %3833 = vmatpush1.bf16.msra.mxu0 0
        %3834 = vmatprep.subr.bf16.mxu0 0
        %3835 = vmatpush1.bf16.msra.mxu0 0
        %3836 = vmatprep.subr.bf16.mxu0 0
        %3837 = vmatpush1.bf16.msra.mxu0 0
        %3838 = vmatprep.subr.bf16.mxu0 0
        %3839 = vmatpush1.bf16.msra.mxu0 0
        %3840 = vmatprep.subr.bf16.mxu0 0
        %3841 = vmatpush1.bf16.msra.mxu0 0
        %3842 = vmatprep.subr.bf16.mxu0 0
        %3843 = vmatpush1.bf16.msra.mxu0 0
        %3844 = vmatprep.subr.bf16.mxu0 0
        %3845 = vmatpush1.bf16.msra.mxu0 0
        %3846 = vmatprep.subr.bf16.mxu0 0
        %3847 = vmatpush1.bf16.msra.mxu0 0
        %3848 = vmatprep.subr.bf16.mxu0 0
        %3849 = vmatpush1.bf16.msra.mxu0 0
        %3850 = vmatprep.subr.bf16.mxu0 0
        %3851 = vmatpush1.bf16.msra.mxu0 0
        %3852 = vmatprep.subr.bf16.mxu0 0
        %3853 = vmatpush1.bf16.msra.mxu0 0
        %3854 = vmatprep.subr.bf16.mxu0 0
        %3855 = vmatpush1.bf16.msra.mxu0 0
        %3856 = vmatprep.mubr.bf16.mxu0 0
        %3857 = vmatmul.mubr.bf16.gmra.mrb[0].mxu0 %v3819
        %v3858 = vpop.f32.mrb[0].mxu0
        %v3859 = vadd.f32 0.0, %v3858
        %v3860 = vpop.f32.mrb[0].mxu0
        %v3861 = vpop.f32.mrb[0].mxu0
        %v3862 = vpop.f32.mrb[0].mxu0
        %3863 = vdwg.mxu0
        %v3864 = vadd.f32 %v3808, %v3859
        %s3865 = scalar_lea.vmem %s7, 40
        %v3866 = vld [vmem:[%s3865] sm:$0xf]
        %v3867 = vld [vmem:[%s3865 + $0x4] sm:$0x1]
        %v3868 = vrot.slane %v3642, 2
        %v3871 = vunpack.c.l.b16 %v3866
        %v3872 = vunpack.c.l.b16 %v3867
        %v3873 = vpack.c.b16 %v3872, %v3871
        %v3875 = vsel %vm3587, %v3868, 0
        %v3878 = vand.u32 %v3873, %v3594
        %3880 = vmatprep.subr.bf16.mxu0 0
        %3881 = vmatpush1.bf16.msra.mxu0 %v3878
        %3882 = vmatprep.subr.bf16.mxu0 0
        %3883 = vmatpush1.bf16.msra.mxu0 0
        %3884 = vmatprep.subr.bf16.mxu0 0
        %3885 = vmatpush1.bf16.msra.mxu0 0
        %3886 = vmatprep.subr.bf16.mxu0 0
        %3887 = vmatpush1.bf16.msra.mxu0 0
        %3888 = vmatprep.subr.bf16.mxu0 0
        %3889 = vmatpush1.bf16.msra.mxu0 0
        %3890 = vmatprep.subr.bf16.mxu0 0
        %3891 = vmatpush1.bf16.msra.mxu0 0
        %3892 = vmatprep.subr.bf16.mxu0 0
        %3893 = vmatpush1.bf16.msra.mxu0 0
        %3894 = vmatprep.subr.bf16.mxu0 0
        %3895 = vmatpush1.bf16.msra.mxu0 0
        %3896 = vmatprep.subr.bf16.mxu0 0
        %3897 = vmatpush1.bf16.msra.mxu0 0
        %3898 = vmatprep.subr.bf16.mxu0 0
        %3899 = vmatpush1.bf16.msra.mxu0 0
        %3900 = vmatprep.subr.bf16.mxu0 0
        %3901 = vmatpush1.bf16.msra.mxu0 0
        %3902 = vmatprep.subr.bf16.mxu0 0
        %3903 = vmatpush1.bf16.msra.mxu0 0
        %3904 = vmatprep.subr.bf16.mxu0 0
        %3905 = vmatpush1.bf16.msra.mxu0 0
        %3906 = vmatprep.subr.bf16.mxu0 0
        %3907 = vmatpush1.bf16.msra.mxu0 0
        %3908 = vmatprep.subr.bf16.mxu0 0
        %3909 = vmatpush1.bf16.msra.mxu0 0
        %3910 = vmatprep.subr.bf16.mxu0 0
        %3911 = vmatpush1.bf16.msra.mxu0 0
        %3912 = vmatprep.mubr.bf16.mxu0 0
        %3913 = vmatmul.mubr.bf16.gmra.mrb[0].mxu0 %v3875
        %v3914 = vpop.f32.mrb[0].mxu0
        %v3915 = vadd.f32 0.0, %v3914
        %v3916 = vpop.f32.mrb[0].mxu0
        %v3917 = vpop.f32.mrb[0].mxu0
        %v3918 = vpop.f32.mrb[0].mxu0
        %3919 = vdwg.mxu0
        %v3920 = vadd.f32 %v3864, %v3915
        %s3921 = scalar_lea.vmem %s7, 48
        %v3922 = vld [vmem:[%s3921] sm:$0xf]
        %v3923 = vld [vmem:[%s3921 + $0x4] sm:$0x1]
        %v3924 = vrot.slane %v3578, 3
        %v3927 = vunpack.c.l.b16 %v3922
        %v3928 = vunpack.c.l.b16 %v3923
        %v3929 = vpack.c.b16 %v3928, %v3927
        %v3931 = vsel %vm3587, %v3924, 0
        %v3934 = vand.u32 %v3929, %v3594
        %3936 = vmatprep.subr.bf16.mxu0 0
        %3937 = vmatpush1.bf16.msra.mxu0 %v3934
        %3938 = vmatprep.subr.bf16.mxu0 0
        %3939 = vmatpush1.bf16.msra.mxu0 0
        %3940 = vmatprep.subr.bf16.mxu0 0
        %3941 = vmatpush1.bf16.msra.mxu0 0
        %3942 = vmatprep.subr.bf16.mxu0 0
        %3943 = vmatpush1.bf16.msra.mxu0 0
        %3944 = vmatprep.subr.bf16.mxu0 0
        %3945 = vmatpush1.bf16.msra.mxu0 0
        %3946 = vmatprep.subr.bf16.mxu0 0
        %3947 = vmatpush1.bf16.msra.mxu0 0
        %3948 = vmatprep.subr.bf16.mxu0 0
        %3949 = vmatpush1.bf16.msra.mxu0 0
        %3950 = vmatprep.subr.bf16.mxu0 0
        %3951 = vmatpush1.bf16.msra.mxu0 0
        %3952 = vmatprep.subr.bf16.mxu0 0
        %3953 = vmatpush1.bf16.msra.mxu0 0
        %3954 = vmatprep.subr.bf16.mxu0 0
        %3955 = vmatpush1.bf16.msra.mxu0 0
        %3956 = vmatprep.subr.bf16.mxu0 0
        %3957 = vmatpush1.bf16.msra.mxu0 0
        %3958 = vmatprep.subr.bf16.mxu0 0
        %3959 = vmatpush1.bf16.msra.mxu0 0
        %3960 = vmatprep.subr.bf16.mxu0 0
        %3961 = vmatpush1.bf16.msra.mxu0 0
        %3962 = vmatprep.subr.bf16.mxu0 0
        %3963 = vmatpush1.bf16.msra.mxu0 0
        %3964 = vmatprep.subr.bf16.mxu0 0
        %3965 = vmatpush1.bf16.msra.mxu0 0
        %3966 = vmatprep.subr.bf16.mxu0 0
        %3967 = vmatpush1.bf16.msra.mxu0 0
        %3968 = vmatprep.mubr.bf16.mxu0 0
        %3969 = vmatmul.mubr.bf16.gmra.mrb[0].mxu0 %v3931
        %v3970 = vpop.f32.mrb[0].mxu0
        %v3971 = vadd.f32 0.0, %v3970
        %v3972 = vpop.f32.mrb[0].mxu0
        %v3973 = vpop.f32.mrb[0].mxu0
        %v3974 = vpop.f32.mrb[0].mxu0
        %3975 = vdwg.mxu0
        %v3976 = vadd.f32 %v3920, %v3971
        %s3977 = scalar_lea.vmem %s7, 56
        %v3978 = vld [vmem:[%s3977] sm:$0xf]
        %v3979 = vld [vmem:[%s3977 + $0x4] sm:$0x1]
        %v3980 = vrot.slane %v3642, 3
        %v3983 = vunpack.c.l.b16 %v3978
        %v3984 = vunpack.c.l.b16 %v3979
        %v3985 = vpack.c.b16 %v3984, %v3983
        %v3987 = vsel %vm3587, %v3980, 0
        %v3990 = vand.u32 %v3985, %v3594
        %3992 = vmatprep.subr.bf16.mxu0 0
        %3993 = vmatpush1.bf16.msra.mxu0 %v3990
        %3994 = vmatprep.subr.bf16.mxu0 0
        %3995 = vmatpush1.bf16.msra.mxu0 0
        %3996 = vmatprep.subr.bf16.mxu0 0
        %3997 = vmatpush1.bf16.msra.mxu0 0
        %3998 = vmatprep.subr.bf16.mxu0 0
        %3999 = vmatpush1.bf16.msra.mxu0 0
        %4000 = vmatprep.subr.bf16.mxu0 0
        %4001 = vmatpush1.bf16.msra.mxu0 0
        %4002 = vmatprep.subr.bf16.mxu0 0
        %4003 = vmatpush1.bf16.msra.mxu0 0
        %4004 = vmatprep.subr.bf16.mxu0 0
        %4005 = vmatpush1.bf16.msra.mxu0 0
        %4006 = vmatprep.subr.bf16.mxu0 0
        %4007 = vmatpush1.bf16.msra.mxu0 0
        %4008 = vmatprep.subr.bf16.mxu0 0
        %4009 = vmatpush1.bf16.msra.mxu0 0
        %4010 = vmatprep.subr.bf16.mxu0 0
        %4011 = vmatpush1.bf16.msra.mxu0 0
        %4012 = vmatprep.subr.bf16.mxu0 0
        %4013 = vmatpush1.bf16.msra.mxu0 0
        %4014 = vmatprep.subr.bf16.mxu0 0
        %4015 = vmatpush1.bf16.msra.mxu0 0
        %4016 = vmatprep.subr.bf16.mxu0 0
        %4017 = vmatpush1.bf16.msra.mxu0 0
        %4018 = vmatprep.subr.bf16.mxu0 0
        %4019 = vmatpush1.bf16.msra.mxu0 0
        %4020 = vmatprep.subr.bf16.mxu0 0
        %4021 = vmatpush1.bf16.msra.mxu0 0
        %4022 = vmatprep.subr.bf16.mxu0 0
        %4023 = vmatpush1.bf16.msra.mxu0 0
        %4024 = vmatprep.mubr.bf16.mxu0 0
        %4025 = vmatmul.mubr.bf16.gmra.mrb[0].mxu0 %v3987
        %v4026 = vpop.f32.mrb[0].mxu0
        %v4027 = vadd.f32 0.0, %v4026
        %v4028 = vpop.f32.mrb[0].mxu0
        %v4029 = vpop.f32.mrb[0].mxu0
        %v4030 = vpop.f32.mrb[0].mxu0
        %4031 = vdwg.mxu0
        %v4032 = vadd.f32 %v3976, %v4027
        %v4033 = vpack.c.bf16 %v4032, %v4032
        %v4034 = vld [vmem:[%s9] sm:$0xf]
        %v4035 = vld [vmem:[%s9 + $0x4] sm:$0xf]
        %v4036 = vld [vmem:[%s9 + $0x8] sm:$0xf]
        %v4037 = vld [vmem:[%s9 + $0xc] sm:$0xf]
        %v4038 = vld [vmem:[%s10] sm:$0x1]
        %v4043 = vunpack.c.l.b16 %v4034
        %v4044 = vunpack.c.l.b16 %v4035
        %v4045 = vunpack.c.l.b16 %v4036
        %v4046 = vunpack.c.l.b16 %v4037
        %v4047 = vpack.c.b16 %v4044, %v4043
        %v4048 = vpack.c.b16 %v4046, %v4045
        %vm4051 = vcmask 261120
        %v4053 = vsel %vm4051, %v4033, 0
        %4055 = vmatprep.subr.bf16.mxu0 0
        %4056 = vmatpush1.bf16.msra.mxu0 %v4047
        %4057 = vmatprep.subr.bf16.mxu0 0
        %4058 = vmatpush1.bf16.msra.mxu0 %v4048
        %4059 = vmatprep.subr.bf16.mxu0 0
        %4060 = vmatpush1.bf16.msra.mxu0 0
        %4061 = vmatprep.subr.bf16.mxu0 0
        %4062 = vmatpush1.bf16.msra.mxu0 0
        %4063 = vmatprep.subr.bf16.mxu0 0
        %4064 = vmatpush1.bf16.msra.mxu0 0
        %4065 = vmatprep.subr.bf16.mxu0 0
        %4066 = vmatpush1.bf16.msra.mxu0 0
        %4067 = vmatprep.subr.bf16.mxu0 0
        %4068 = vmatpush1.bf16.msra.mxu0 0
        %4069 = vmatprep.subr.bf16.mxu0 0
        %4070 = vmatpush1.bf16.msra.mxu0 0
        %4071 = vmatprep.subr.bf16.mxu0 0
        %4072 = vmatpush1.bf16.msra.mxu0 0
        %4073 = vmatprep.subr.bf16.mxu0 0
        %4074 = vmatpush1.bf16.msra.mxu0 0
        %4075 = vmatprep.subr.bf16.mxu0 0
        %4076 = vmatpush1.bf16.msra.mxu0 0
        %4077 = vmatprep.subr.bf16.mxu0 0
        %4078 = vmatpush1.bf16.msra.mxu0 0
        %4079 = vmatprep.subr.bf16.mxu0 0
        %4080 = vmatpush1.bf16.msra.mxu0 0
        %4081 = vmatprep.subr.bf16.mxu0 0
        %4082 = vmatpush1.bf16.msra.mxu0 0
        %4083 = vmatprep.subr.bf16.mxu0 0
        %4084 = vmatpush1.bf16.msra.mxu0 0
        %4085 = vmatprep.subr.bf16.mxu0 0
        %4086 = vmatpush1.bf16.msra.mxu0 0
        %4087 = vmatprep.mubr.bf16.mxu0 0
        %4088 = vmatmul.mubr.bf16.gmra.mrb[0].mxu0 %v4053
        %v4089 = vpop.f32.mrb[0].mxu0
        %v4090 = vadd.f32 %v4038, %v4089
        %v4091 = vpop.f32.mrb[0].mxu0
        %v4092 = vpop.f32.mrb[0].mxu0
        %v4093 = vpop.f32.mrb[0].mxu0
        %4094 = vdwg.mxu0
        %v4095 = vld [vmem:[%s11] sm:$0xf]
        %v4096 = vld [vmem:[%s11 + $0x4] sm:$0xf]
        %v4097 = vld [vmem:[%s11 + $0x8] sm:$0xf]
        %v4098 = vld [vmem:[%s11 + $0xc] sm:$0xf]
        %v4099 = vld [vmem:[%s12] sm:$0x1]
        %v4104 = vunpack.c.l.b16 %v4095
        %v4105 = vunpack.c.l.b16 %v4096
        %v4106 = vunpack.c.l.b16 %v4097
        %v4107 = vunpack.c.l.b16 %v4098
        %v4108 = vpack.c.b16 %v4105, %v4104
        %v4109 = vpack.c.b16 %v4107, %v4106
        %4112 = vmatprep.subr.bf16.mxu0 0
        %4113 = vmatpush1.bf16.msra.mxu0 %v4108
        %4114 = vmatprep.subr.bf16.mxu0 0
        %4115 = vmatpush1.bf16.msra.mxu0 %v4109
        %4116 = vmatprep.subr.bf16.mxu0 0
        %4117 = vmatpush1.bf16.msra.mxu0 0
        %4118 = vmatprep.subr.bf16.mxu0 0
        %4119 = vmatpush1.bf16.msra.mxu0 0
        %4120 = vmatprep.subr.bf16.mxu0 0
        %4121 = vmatpush1.bf16.msra.mxu0 0
        %4122 = vmatprep.subr.bf16.mxu0 0
        %4123 = vmatpush1.bf16.msra.mxu0 0
        %4124 = vmatprep.subr.bf16.mxu0 0
        %4125 = vmatpush1.bf16.msra.mxu0 0
        %4126 = vmatprep.subr.bf16.mxu0 0
        %4127 = vmatpush1.bf16.msra.mxu0 0
        %4128 = vmatprep.subr.bf16.mxu0 0
        %4129 = vmatpush1.bf16.msra.mxu0 0
        %4130 = vmatprep.subr.bf16.mxu0 0
        %4131 = vmatpush1.bf16.msra.mxu0 0
        %4132 = vmatprep.subr.bf16.mxu0 0
        %4133 = vmatpush1.bf16.msra.mxu0 0
        %4134 = vmatprep.subr.bf16.mxu0 0
        %4135 = vmatpush1.bf16.msra.mxu0 0
        %4136 = vmatprep.subr.bf16.mxu0 0
        %4137 = vmatpush1.bf16.msra.mxu0 0
        %4138 = vmatprep.subr.bf16.mxu0 0
        %4139 = vmatpush1.bf16.msra.mxu0 0
        %4140 = vmatprep.subr.bf16.mxu0 0
        %4141 = vmatpush1.bf16.msra.mxu0 0
        %4142 = vmatprep.subr.bf16.mxu0 0
        %4143 = vmatpush1.bf16.msra.mxu0 0
        %4144 = vmatprep.mubr.bf16.mxu0 0
        %4145 = vmatmul.mubr.bf16.gmra.mrb[0].mxu0 %v4053
        %v4146 = vpop.f32.mrb[0].mxu0
        %v4147 = vadd.f32 %v4099, %v4146
        %v4148 = vpop.f32.mrb[0].mxu0
        %v4149 = vpop.f32.mrb[0].mxu0
        %v4150 = vpop.f32.mrb[0].mxu0
        %4151 = vdwg.mxu0
        %v4152 = vmax.f32 %v4147, 0.0
        %v4153 = vand.u32 2147483647, %v4147
        %v4154 = vsub.f32 0.0, %v4153
        %v4155 = vmul.f32 %v4154, 1.442695
        %v4156 = vpow.pop %v4155
        %v4157 = vadd.f32 %v4156, 1.0
        %v4158 = vlog2.pop %v4157
        %v4159 = vmul.f32 %v4158, 0.6931472
        %v4160 = vmul.f32 -0.5, %v4156
        %v4161 = vadd.f32 %v4160, 1.0
        %v4162 = vmul.f32 %v4161, %v4156
        %v4163 = vand.u32 2147483647, %v4156
        %vm4164 = vcmp.lt.f32.partialorder %v4163, 0.0004427343
        %v4165 = vsel %vm4164, %v4162, %v4159
        %v4166 = vadd.f32 %v4152, %v4165
        %vm4167 = vcmask 57344
        %4168 = vst.msk [vmem:[%s463] sm:$0x1] %vm4167, %v4090
        %4169 = vst.msk [vmem:[%s469] sm:$0x1] %vm4167, %v4166
        %s4170 = sand.u32 %s318, 1
        %s4171 = scalar_lea.sflag [#allocation3], %s4170
        %s4172 = sand.u32 %s318, 1
        %s4173 = scalar_lea.vmem [#allocation2], %s4172
        %s4174 = sand.u32 %s344, 1
        %s4175 = scalar_lea.sflag [#allocation5], %s4174
        %s4176 = sand.u32 %s344, 1
        %s4177 = scalar_lea.vmem [#allocation4], %s4176
        // Predicated region
        $region73: #{ffg_conv_block_forward.1} parent=71 // pred_check
          %p4178 = pneg %p328
        $region74: #{ffg_conv_block_forward.1} parent=71 // pred_check_branch
          %4180 = sbr.rel (%p4178) target = $region76
        $region75: #{ffg_conv_block_forward.1} parent=71 // pred_region
          %s4182 = ssub.s32 16, 16
          %4183 = vsyncadd %s4171, %s4182
          %s4184 = smul.addr %s32, 16
          %s4185 = scalar_lea.hbm %s13, %s4184
          %s4187 = sshll.u32 %s4173, 4
          %s4188 = int_to_ptr.vmem [resolvable:$true] %s4187
          %4190 = dma.vmem_to_hbm [thread:$0]  %s4188, 16, %s4185, %s4171
        $region76: #{ffg_conv_block_forward.1} parent=71 // pred_fallthru
          _
        // Predicated region
        $region77: #{ffg_conv_block_forward.1} parent=71 // pred_check
          %p4191 = pneg %p354
        $region78: #{ffg_conv_block_forward.1} parent=71 // pred_check_branch
          %4193 = sbr.rel (%p4191) target = $region80
        $region79: #{ffg_conv_block_forward.1} parent=71 // pred_region
          %s4195 = ssub.s32 16, 16
          %4196 = vsyncadd %s4175, %s4195
          %s4197 = smul.addr %s32, 16
          %s4198 = scalar_lea.hbm %s14, %s4197
          %s4200 = sshll.u32 %s4177, 4
          %s4201 = int_to_ptr.vmem [resolvable:$true] %s4200
          %4203 = dma.vmem_to_hbm [thread:$0]  %s4201, 16, %s4198, %s4175
        $region80: #{ffg_conv_block_forward.1} parent=71 // pred_fallthru
          _
      $region72: #{ffg_conv_block_forward.1} parent=5 // pred_fallthru
        _
      %p4204 = scmp.le.s32.totalorder 2, %s27
      // Predicated region
      $region81: #{ffg_conv_block_forward.1} parent=5 // pred_check
        %p4205 = pneg %p4204
      $region82: #{ffg_conv_block_forward.1} parent=5 // pred_check_branch
        %4207 = sbr.rel (%p4205) target = $region84
      $region83: #{ffg_conv_block_forward.1} parent=5 // pred_region
        %s4208 = ssub.s32 %s27, 2
        // Predicated region
        $region85: #{ffg_conv_block_forward.1} parent=83 // pred_check
          %p4209 = pneg %p334
        $region86: #{ffg_conv_block_forward.1} parent=83 // pred_check_branch
          %4211 = sbr.rel (%p4209) target = $region88
        $region87: #{ffg_conv_block_forward.1} parent=83 // pred_region
          %s4212 = sand.u32 %s319, 1
          %s4213 = scalar_lea.sflag [#allocation3], %s4212
          %s4214 = sand.u32 %s319, 1
          %s4215 = scalar_lea.vmem [#allocation2], %s4214
          %4216 = dma.done %s4213, 16
        $region88: #{ffg_conv_block_forward.1} parent=83 // pred_fallthru
          _
        // Predicated region
        $region89: #{ffg_conv_block_forward.1} parent=83 // pred_check
          %p4217 = pneg %p360
        $region90: #{ffg_conv_block_forward.1} parent=83 // pred_check_branch
          %4219 = sbr.rel (%p4217) target = $region92
        $region91: #{ffg_conv_block_forward.1} parent=83 // pred_region
          %s4220 = sand.u32 %s345, 1
          %s4221 = scalar_lea.sflag [#allocation5], %s4220
          %s4222 = sand.u32 %s345, 1
          %s4223 = scalar_lea.vmem [#allocation4], %s4222
          %4224 = dma.done %s4221, 16
        $region92: #{ffg_conv_block_forward.1} parent=83 // pred_fallthru
          _
      $region84: #{ffg_conv_block_forward.1} parent=5 // pred_fallthru
        _
    $region6: #{ffg_conv_block_forward.1} parent=1 // loop_footer
      %s31 = sadd.s32 1, %s27
    $region7: #{ffg_conv_block_forward.1} parent=1 // loop_footer_branch
      %26 = sbr.rel target = $region3
    $region8: #{ffg_conv_block_forward.1} parent=1 // loop_exit
      _
    %4225 = vsyncpa [#allocation3], 1
    %s4226 = scalar_lea.sflag [#allocation3], 1
    %4227 = vsyncpa %s4226, 1
    %4228 = vsyncpa [#allocation5], 1
    %s4229 = scalar_lea.sflag [#allocation5], 1
    %4230 = vsyncpa %s4229, 1

</llo_original>
